<compile_context>
chip_gen: v7x
topology: tpu7x:2x2x1
jax: 0.10.0
libtpu: 0.0.40
codegen_flags: <defaults>
</compile_context>

<pallas_src>
import jax
import jax.numpy as jnp
import numpy as np
from jax.experimental import pallas as pl
from jax.experimental.pallas import tpu as pltpu


# ----------------------------------------------------------------------------
# Fused forward kernel (runs once, no grid; everything resident in VMEM).
# ----------------------------------------------------------------------------
def _qconvnet_kernel(p_ref, w1_ref, b1_ref, w2_ref, b2_ref, w3_ref, b3_ref,
                     wf1_ref, bf1_ref, wf2_ref, bf2_ref, wo_ref, bo_ref,
                     o_ref, c2_ref):
    """Fused QConvNet forward.

    p_ref : (K2, G, F1)  conv1 input patches; K2 = conv2 kernel offsets (kh2*kw2),
                         G = OH2*OW2*N conv2 output positions (rows ordered
                         (oy2, ox2, n)), F1 = kh1*kw1*Cin.
    w1_ref: (F1, 32)     conv1 weights, rows ordered (a, b, c).
    w2_ref: (K2, 32, 64) conv2 weights per kernel offset.
    w3_ref: (K3, 64, 64) conv3 weights per kernel offset (K3 = kh3*kw3).
    c2_ref: (G, 64)      VMEM scratch holding the conv2 ReLU activations.
    o_ref : (N, 128)     lane-padded final linear-layer output.
    """
    n = o_ref.shape[0]
    n_k2 = p_ref.shape[0]
    n_k3 = w3_ref.shape[0]

    w1 = w1_ref[...]                                  # (F1, 32)
    b1 = b1_ref[...]                                  # (1, 32)

    # conv1 + conv2 fused: decompose conv2 over its kernel offsets.  For every
    # offset k we compute the conv1 ReLU activations at exactly the conv1
    # positions that offset touches (rows = conv2 output positions) and
    # accumulate their contribution through the conv2 weights for offset k.
    acc2 = jnp.zeros(c2_ref.shape, jnp.float32)       # (G, 64)
    for k in range(n_k2):
        c1 = jnp.dot(p_ref[k], w1, preferred_element_type=jnp.float32) + b1
        c1 = jnp.maximum(c1, 0.0)                     # conv1 ReLU
        acc2 = acc2 + jnp.dot(c1, w2_ref[k], preferred_element_type=jnp.float32)
    c2_ref[...] = jnp.maximum(acc2 + b2_ref[...], 0.0)  # conv2 ReLU

    # conv3: its 3x3 window covers the whole 3x3 conv2 output, so it is a sum
    # over kernel offsets p of (N, 64) x (64, 64) GEMMs on contiguous row
    # groups of the conv2 activations.
    acc3 = jnp.zeros((n, w3_ref.shape[2]), jnp.float32)
    for p in range(n_k3):
        acc3 = acc3 + jnp.dot(c2_ref[p * n:(p + 1) * n, :], w3_ref[p],
                              preferred_element_type=jnp.float32)
    c3 = jnp.maximum(acc3 + b3_ref[...], 0.0)         # == torch conv3.flatten(1)

    # Fully connected head.
    h1 = jnp.maximum(
        jnp.dot(c3, wf1_ref[...], preferred_element_type=jnp.float32) + bf1_ref[...],
        0.0)
    h2 = jnp.maximum(
        jnp.dot(h1, wf2_ref[...], preferred_element_type=jnp.float32) + bf2_ref[...],
        0.0)
    o_ref[...] = (
        jnp.dot(h2, wo_ref[...], preferred_element_type=jnp.float32) + bo_ref[...])


# ----------------------------------------------------------------------------
# Host-side glue: one-time patch extraction for the network input.
# ----------------------------------------------------------------------------
def build_conv1_patches(x, k1=8, s1=4, k2=4, s2=2):
    """x: (N, C, H, W) NCHW.

    Returns patches (k2*k2, OH2*OW2*N, k1*k1*C) with
      patches[i2*k2 + j2, (oy2*OW2 + ox2)*N + n, (a*k1 + b)*C + c]
        = x[n, c, s1*(s2*oy2 + i2) + a, s1*(s2*ox2 + j2) + b]
    i.e. for every conv2 kernel offset, the conv1 input patch of the conv1
    output position that offset reads, for every conv2 output position.
    """
    n, c, h, w = x.shape
    oh1, ow1 = (h - k1) // s1 + 1, (w - k1) // s1 + 1
    oh2, ow2 = (oh1 - k2) // s2 + 1, (ow1 - k2) // s2 + 1
    x_nhwc = jnp.transpose(x, (0, 2, 3, 1))                    # (N, H, W, C)
    # conv1 im2col at every conv1 output position, feature order (a, b, c)
    cols = [x_nhwc[:, a:a + s1 * (oh1 - 1) + 1:s1,
                      b:b + s1 * (ow1 - 1) + 1:s1, :]
            for a in range(k1) for b in range(k1)]
    p1 = jnp.concatenate(cols, axis=-1)                        # (N, OH1, OW1, k1*k1*C)
    groups = []
    for i2 in range(k2):
        for j2 in range(k2):
            g = p1[:, i2:i2 + s2 * (oh2 - 1) + 1:s2,
                      j2:j2 + s2 * (ow2 - 1) + 1:s2, :]        # (N, OH2, OW2, F1)
            g = jnp.transpose(g, (1, 2, 0, 3)).reshape(oh2 * ow2 * n, k1 * k1 * c)
            groups.append(g)
    return jnp.stack(groups, axis=0)


# ----------------------------------------------------------------------------
# Parameters: PyTorch-layout init + one-time conversion to kernel layouts.
# ----------------------------------------------------------------------------
def init_params(key, in_channels, n_actions, fc1_dims, fc2_dims, fc_input_dims):
    def uniform(key, shape, fan_in):
        bound = 1.0 / jnp.sqrt(jnp.float32(fan_in))
        return jax.random.uniform(key, shape, jnp.float32, -bound, bound)

    ks = jax.random.split(key, 12)
    p = {}
    p["conv1_w"] = uniform(ks[0], (32, in_channels, 8, 8), in_channels * 8 * 8)
    p["conv1_b"] = uniform(ks[1], (32,), in_channels * 8 * 8)
    p["conv2_w"] = uniform(ks[2], (64, 32, 4, 4), 32 * 4 * 4)
    p["conv2_b"] = uniform(ks[3], (64,), 32 * 4 * 4)
    p["conv3_w"] = uniform(ks[4], (64, 64, 3, 3), 64 * 3 * 3)
    p["conv3_b"] = uniform(ks[5], (64,), 64 * 3 * 3)
    p["fc1_w"] = uniform(ks[6], (fc1_dims, fc_input_dims), fc_input_dims)
    p["fc1_b"] = uniform(ks[7], (fc1_dims,), fc_input_dims)
    p["fc2_w"] = uniform(ks[8], (fc2_dims, fc1_dims), fc1_dims)
    p["fc2_b"] = uniform(ks[9], (fc2_dims,), fc1_dims)
    p["out_w"] = uniform(ks[10], (n_actions, fc2_dims), fc2_dims)
    p["out_b"] = uniform(ks[11], (n_actions,), fc2_dims)
    return p


def prepare_params(p, n_actions, lane_pad=128):
    """One-time conversion of PyTorch-layout params into kernel-ready layouts
    (hoisted out of the per-step hot path)."""
    o1, c_in, k1, _ = p["conv1_w"].shape
    o2, _, k2, _ = p["conv2_w"].shape
    o3, _, k3, _ = p["conv3_w"].shape
    q = {}
    # conv weights -> feature order (kh, kw, Cin) matching the patch layout.
    q["w1"] = jnp.transpose(p["conv1_w"], (2, 3, 1, 0)).reshape(k1 * k1 * c_in, o1)
    q["b1"] = p["conv1_b"].reshape(1, o1)
    q["w2"] = jnp.transpose(p["conv2_w"], (2, 3, 1, 0)).reshape(k2 * k2, o1, o2)
    q["b2"] = p["conv2_b"].reshape(1, o2)
    q["w3"] = jnp.transpose(p["conv3_w"], (2, 3, 1, 0)).reshape(k3 * k3, o2, o3)
    q["b3"] = p["conv3_b"].reshape(1, o3)
    # fc weights pre-transposed to (K, N).
    q["wf1"] = p["fc1_w"].T
    q["bf1"] = p["fc1_b"].reshape(1, -1)
    q["wf2"] = p["fc2_w"].T
    q["bf2"] = p["fc2_b"].reshape(1, -1)
    # output head padded to a lane-dense 128-wide GEMM; padding sliced off later.
    n_pad = max(lane_pad, n_actions)
    q["wo"] = jnp.pad(p["out_w"].T, ((0, 0), (0, n_pad - n_actions)))
    q["bo"] = jnp.pad(p["out_b"], (0, n_pad - n_actions)).reshape(1, n_pad)
    return q


# ----------------------------------------------------------------------------
# Forward pass: one pallas_call for the whole network.
# ----------------------------------------------------------------------------
def qconvnet_forward(prep, x, n_actions):
    """x: (N, C, H, W) float32 NCHW (as handed to the PyTorch forward).
    Returns (N, n_actions) float32."""
    n = x.shape[0]
    patches = build_conv1_patches(x)                 # (16, 9*N, 256) for 36x36x4
    n_k3 = prep["w3"].shape[0]
    n_rows = patches.shape[1]
    # Fused conv3 formulation assumes conv3 reduces the conv2 output to 1x1,
    # which holds for input_dims = (36, 36, 4) (the module's configuration).
    assert n_rows == n_k3 * n, "conv3 window must cover the whole conv2 output"

    out_pad = pl.pallas_call(
        _qconvnet_kernel,
        out_shape=jax.ShapeDtypeStruct((n, prep["wo"].shape[1]), jnp.float32),
        scratch_shapes=[pltpu.VMEM((n_rows, prep["w2"].shape[2]), jnp.float32)],
    )(patches, prep["w1"], prep["b1"], prep["w2"], prep["b2"],
      prep["w3"], prep["b3"], prep["wf1"], prep["bf1"],
      prep["wf2"], prep["bf2"], prep["wo"], prep["bo"])
    return out_pad[:, :n_actions]


# ----------------------------------------------------------------------------
# Pure-JAX reference (torch-layout params) for a numerical sanity check.
# ----------------------------------------------------------------------------
def reference_forward(p, x):
    dn = ("NCHW", "OIHW", "NCHW")
    y = jax.lax.conv_general_dilated(x, p["conv1_w"], (4, 4), "VALID",
                                     dimension_numbers=dn)
    y = jnp.maximum(y + p["conv1_b"][None, :, None, None], 0.0)
    y = jax.lax.conv_general_dilated(y, p["conv2_w"], (2, 2), "VALID",
                                     dimension_numbers=dn)
    y = jnp.maximum(y + p["conv2_b"][None, :, None, None], 0.0)
    y = jax.lax.conv_general_dilated(y, p["conv3_w"], (1, 1), "VALID",
                                     dimension_numbers=dn)
    y = jnp.maximum(y + p["conv3_b"][None, :, None, None], 0.0)
    y = y.reshape(y.shape[0], -1)
    y = jnp.maximum(y @ p["fc1_w"].T + p["fc1_b"], 0.0)
    y = jnp.maximum(y @ p["fc2_w"].T + p["fc2_b"], 0.0)
    return y @ p["out_w"].T + p["out_b"]


if __name__ == "__main__":
    # input_dims = (H, W, C) = (36, 36, 4): the smallest spatial size that is
    # consistent with the module's conv stack (36 -> 8 -> 3 -> 1).
    batch, H, W, C = 2, 36, 36, 4
    n_actions, fc1_dims, fc2_dims = 6, 512, 256
    fc_input_dims = 64 * 1 * 1

    key = jax.random.PRNGKey(0)
    pkey, xkey = jax.random.split(key)
    params = init_params(pkey, C, n_actions, fc1_dims, fc2_dims, fc_input_dims)
    prep = prepare_params(params, n_actions)          # one-time weight re-layout

    # forward() receives NCHW (already permuted, as in the PyTorch training loop)
    x = jax.random.normal(xkey, (batch, C, H, W), dtype=jnp.float32)

    fwd = jax.jit(qconvnet_forward, static_argnames=("n_actions",))
    actions = fwd(prep, x, n_actions=n_actions)
    jax.block_until_ready(actions)
    assert actions.shape == (batch, n_actions)
    assert actions.dtype == jnp.float32

    # Sanity check against a pure-JAX reference of the PyTorch forward.
    ref = reference_forward(params, x)
    np.testing.assert_allclose(np.asarray(actions), np.asarray(ref),
                               rtol=5e-2, atol=5e-2)

    print("KERNEL_OK")
</pallas_src>

<mosaic_0001>
module attributes {stable_mosaic.version = 11 : i64} {
  func.func @_qconvnet_kernel(%arg0: memref<16x18x256xf32, #tpu.memory_space<vmem>>, %arg1: memref<256x32xf32, #tpu.memory_space<vmem>>, %arg2: memref<1x32xf32, #tpu.memory_space<vmem>>, %arg3: memref<16x32x64xf32, #tpu.memory_space<vmem>>, %arg4: memref<1x64xf32, #tpu.memory_space<vmem>>, %arg5: memref<9x64x64xf32, #tpu.memory_space<vmem>>, %arg6: memref<1x64xf32, #tpu.memory_space<vmem>>, %arg7: memref<64x512xf32, #tpu.memory_space<vmem>>, %arg8: memref<1x512xf32, #tpu.memory_space<vmem>>, %arg9: memref<512x256xf32, #tpu.memory_space<vmem>>, %arg10: memref<1x256xf32, #tpu.memory_space<vmem>>, %arg11: memref<256x128xf32, #tpu.memory_space<vmem>>, %arg12: memref<1x128xf32, #tpu.memory_space<vmem>>, %arg13: memref<2x128xf32, #tpu.memory_space<vmem>>, %arg14: memref<18x64xf32, #tpu.memory_space<vmem>>) attributes {dimension_semantics = [], scalar_prefetch = 0 : i64, scratch_operands = 1 : i64, tpu.core_type = #tpu.core_type<tc>} {
    %c0 = arith.constant 0 : index
    %c0_0 = arith.constant 0 : index
    %0 = vector.load %arg1[%c0, %c0_0] : memref<256x32xf32, #tpu.memory_space<vmem>>, vector<256x32xf32>
    %c0_1 = arith.constant 0 : index
    %c0_2 = arith.constant 0 : index
    %1 = vector.load %arg2[%c0_1, %c0_2] : memref<1x32xf32, #tpu.memory_space<vmem>>, vector<1x32xf32>
    %cst = arith.constant 0.000000e+00 : f32
    %2 = vector.broadcast %cst : f32 to vector<18x64xf32>
    %c0_3 = arith.constant 0 : index
    %c0_4 = arith.constant 0 : index
    %c0_5 = arith.constant 0 : index
    %3 = vector.load %arg0[%c0_3, %c0_4, %c0_5] : memref<16x18x256xf32, #tpu.memory_space<vmem>>, vector<1x18x256xf32>
    %4 = vector.shape_cast %3 : vector<1x18x256xf32> to vector<18x256xf32>
    %cst_6 = arith.constant dense<0.000000e+00> : vector<18x32xf32>
    %5 = tpu.matmul %4, %0, %cst_6 {dimension_numbers = #tpu.dot_dimension_numbers<[1], [0], [0], [1], [0, 0, 1, 1], [], []>} : vector<18x256xf32>, vector<256x32xf32>, vector<18x32xf32> -> vector<18x32xf32>
    %6 = vector.broadcast %1 : vector<1x32xf32> to vector<18x32xf32>
    %7 = arith.addf %5, %6 : vector<18x32xf32>
    %cst_7 = arith.constant 0.000000e+00 : f32
    %8 = vector.broadcast %cst_7 : f32 to vector<18x32xf32>
    %9 = arith.maximumf %7, %8 : vector<18x32xf32>
    %c0_8 = arith.constant 0 : index
    %c0_9 = arith.constant 0 : index
    %c0_10 = arith.constant 0 : index
    %10 = vector.load %arg3[%c0_8, %c0_9, %c0_10] : memref<16x32x64xf32, #tpu.memory_space<vmem>>, vector<1x32x64xf32>
    %11 = vector.shape_cast %10 : vector<1x32x64xf32> to vector<32x64xf32>
    %cst_11 = arith.constant dense<0.000000e+00> : vector<18x64xf32>
    %12 = tpu.matmul %9, %11, %cst_11 {dimension_numbers = #tpu.dot_dimension_numbers<[1], [0], [0], [1], [0, 0, 1, 1], [], []>} : vector<18x32xf32>, vector<32x64xf32>, vector<18x64xf32> -> vector<18x64xf32>
    %13 = arith.addf %2, %12 : vector<18x64xf32>
    %c1 = arith.constant 1 : index
    %c0_12 = arith.constant 0 : index
    %c0_13 = arith.constant 0 : index
    %14 = vector.load %arg0[%c1, %c0_12, %c0_13] : memref<16x18x256xf32, #tpu.memory_space<vmem>>, vector<1x18x256xf32>
    %15 = vector.shape_cast %14 : vector<1x18x256xf32> to vector<18x256xf32>
    %cst_14 = arith.constant dense<0.000000e+00> : vector<18x32xf32>
    %16 = tpu.matmul %15, %0, %cst_14 {dimension_numbers = #tpu.dot_dimension_numbers<[1], [0], [0], [1], [0, 0, 1, 1], [], []>} : vector<18x256xf32>, vector<256x32xf32>, vector<18x32xf32> -> vector<18x32xf32>
    %17 = vector.broadcast %1 : vector<1x32xf32> to vector<18x32xf32>
    %18 = arith.addf %16, %17 : vector<18x32xf32>
    %cst_15 = arith.constant 0.000000e+00 : f32
    %19 = vector.broadcast %cst_15 : f32 to vector<18x32xf32>
    %20 = arith.maximumf %18, %19 : vector<18x32xf32>
    %c1_16 = arith.constant 1 : index
    %c0_17 = arith.constant 0 : index
    %c0_18 = arith.constant 0 : index
    %21 = vector.load %arg3[%c1_16, %c0_17, %c0_18] : memref<16x32x64xf32, #tpu.memory_space<vmem>>, vector<1x32x64xf32>
    %22 = vector.shape_cast %21 : vector<1x32x64xf32> to vector<32x64xf32>
    %cst_19 = arith.constant dense<0.000000e+00> : vector<18x64xf32>
    %23 = tpu.matmul %20, %22, %cst_19 {dimension_numbers = #tpu.dot_dimension_numbers<[1], [0], [0], [1], [0, 0, 1, 1], [], []>} : vector<18x32xf32>, vector<32x64xf32>, vector<18x64xf32> -> vector<18x64xf32>
    %24 = arith.addf %13, %23 : vector<18x64xf32>
    %c2 = arith.constant 2 : index
    %c0_20 = arith.constant 0 : index
    %c0_21 = arith.constant 0 : index
    %25 = vector.load %arg0[%c2, %c0_20, %c0_21] : memref<16x18x256xf32, #tpu.memory_space<vmem>>, vector<1x18x256xf32>
    %26 = vector.shape_cast %25 : vector<1x18x256xf32> to vector<18x256xf32>
    %cst_22 = arith.constant dense<0.000000e+00> : vector<18x32xf32>
    %27 = tpu.matmul %26, %0, %cst_22 {dimension_numbers = #tpu.dot_dimension_numbers<[1], [0], [0], [1], [0, 0, 1, 1], [], []>} : vector<18x256xf32>, vector<256x32xf32>, vector<18x32xf32> -> vector<18x32xf32>
    %28 = vector.broadcast %1 : vector<1x32xf32> to vector<18x32xf32>
    %29 = arith.addf %27, %28 : vector<18x32xf32>
    %cst_23 = arith.constant 0.000000e+00 : f32
    %30 = vector.broadcast %cst_23 : f32 to vector<18x32xf32>
    %31 = arith.maximumf %29, %30 : vector<18x32xf32>
    %c2_24 = arith.constant 2 : index
    %c0_25 = arith.constant 0 : index
    %c0_26 = arith.constant 0 : index
    %32 = vector.load %arg3[%c2_24, %c0_25, %c0_26] : memref<16x32x64xf32, #tpu.memory_space<vmem>>, vector<1x32x64xf32>
    %33 = vector.shape_cast %32 : vector<1x32x64xf32> to vector<32x64xf32>
    %cst_27 = arith.constant dense<0.000000e+00> : vector<18x64xf32>
    %34 = tpu.matmul %31, %33, %cst_27 {dimension_numbers = #tpu.dot_dimension_numbers<[1], [0], [0], [1], [0, 0, 1, 1], [], []>} : vector<18x32xf32>, vector<32x64xf32>, vector<18x64xf32> -> vector<18x64xf32>
    %35 = arith.addf %24, %34 : vector<18x64xf32>
    %c3 = arith.constant 3 : index
    %c0_28 = arith.constant 0 : index
    %c0_29 = arith.constant 0 : index
    %36 = vector.load %arg0[%c3, %c0_28, %c0_29] : memref<16x18x256xf32, #tpu.memory_space<vmem>>, vector<1x18x256xf32>
    %37 = vector.shape_cast %36 : vector<1x18x256xf32> to vector<18x256xf32>
    %cst_30 = arith.constant dense<0.000000e+00> : vector<18x32xf32>
    %38 = tpu.matmul %37, %0, %cst_30 {dimension_numbers = #tpu.dot_dimension_numbers<[1], [0], [0], [1], [0, 0, 1, 1], [], []>} : vector<18x256xf32>, vector<256x32xf32>, vector<18x32xf32> -> vector<18x32xf32>
    %39 = vector.broadcast %1 : vector<1x32xf32> to vector<18x32xf32>
    %40 = arith.addf %38, %39 : vector<18x32xf32>
    %cst_31 = arith.constant 0.000000e+00 : f32
    %41 = vector.broadcast %cst_31 : f32 to vector<18x32xf32>
    %42 = arith.maximumf %40, %41 : vector<18x32xf32>
    %c3_32 = arith.constant 3 : index
    %c0_33 = arith.constant 0 : index
    %c0_34 = arith.constant 0 : index
    %43 = vector.load %arg3[%c3_32, %c0_33, %c0_34] : memref<16x32x64xf32, #tpu.memory_space<vmem>>, vector<1x32x64xf32>
    %44 = vector.shape_cast %43 : vector<1x32x64xf32> to vector<32x64xf32>
    %cst_35 = arith.constant dense<0.000000e+00> : vector<18x64xf32>
    %45 = tpu.matmul %42, %44, %cst_35 {dimension_numbers = #tpu.dot_dimension_numbers<[1], [0], [0], [1], [0, 0, 1, 1], [], []>} : vector<18x32xf32>, vector<32x64xf32>, vector<18x64xf32> -> vector<18x64xf32>
    %46 = arith.addf %35, %45 : vector<18x64xf32>
    %c4 = arith.constant 4 : index
    %c0_36 = arith.constant 0 : index
    %c0_37 = arith.constant 0 : index
    %47 = vector.load %arg0[%c4, %c0_36, %c0_37] : memref<16x18x256xf32, #tpu.memory_space<vmem>>, vector<1x18x256xf32>
    %48 = vector.shape_cast %47 : vector<1x18x256xf32> to vector<18x256xf32>
    %cst_38 = arith.constant dense<0.000000e+00> : vector<18x32xf32>
    %49 = tpu.matmul %48, %0, %cst_38 {dimension_numbers = #tpu.dot_dimension_numbers<[1], [0], [0], [1], [0, 0, 1, 1], [], []>} : vector<18x256xf32>, vector<256x32xf32>, vector<18x32xf32> -> vector<18x32xf32>
    %50 = vector.broadcast %1 : vector<1x32xf32> to vector<18x32xf32>
    %51 = arith.addf %49, %50 : vector<18x32xf32>
    %cst_39 = arith.constant 0.000000e+00 : f32
    %52 = vector.broadcast %cst_39 : f32 to vector<18x32xf32>
    %53 = arith.maximumf %51, %52 : vector<18x32xf32>
    %c4_40 = arith.constant 4 : index
    %c0_41 = arith.constant 0 : index
    %c0_42 = arith.constant 0 : index
    %54 = vector.load %arg3[%c4_40, %c0_41, %c0_42] : memref<16x32x64xf32, #tpu.memory_space<vmem>>, vector<1x32x64xf32>
    %55 = vector.shape_cast %54 : vector<1x32x64xf32> to vector<32x64xf32>
    %cst_43 = arith.constant dense<0.000000e+00> : vector<18x64xf32>
    %56 = tpu.matmul %53, %55, %cst_43 {dimension_numbers = #tpu.dot_dimension_numbers<[1], [0], [0], [1], [0, 0, 1, 1], [], []>} : vector<18x32xf32>, vector<32x64xf32>, vector<18x64xf32> -> vector<18x64xf32>
    %57 = arith.addf %46, %56 : vector<18x64xf32>
    %c5 = arith.constant 5 : index
    %c0_44 = arith.constant 0 : index
    %c0_45 = arith.constant 0 : index
    %58 = vector.load %arg0[%c5, %c0_44, %c0_45] : memref<16x18x256xf32, #tpu.memory_space<vmem>>, vector<1x18x256xf32>
    %59 = vector.shape_cast %58 : vector<1x18x256xf32> to vector<18x256xf32>
    %cst_46 = arith.constant dense<0.000000e+00> : vector<18x32xf32>
    %60 = tpu.matmul %59, %0, %cst_46 {dimension_numbers = #tpu.dot_dimension_numbers<[1], [0], [0], [1], [0, 0, 1, 1], [], []>} : vector<18x256xf32>, vector<256x32xf32>, vector<18x32xf32> -> vector<18x32xf32>
    %61 = vector.broadcast %1 : vector<1x32xf32> to vector<18x32xf32>
    %62 = arith.addf %60, %61 : vector<18x32xf32>
    %cst_47 = arith.constant 0.000000e+00 : f32
    %63 = vector.broadcast %cst_47 : f32 to vector<18x32xf32>
    %64 = arith.maximumf %62, %63 : vector<18x32xf32>
    %c5_48 = arith.constant 5 : index
    %c0_49 = arith.constant 0 : index
    %c0_50 = arith.constant 0 : index
    %65 = vector.load %arg3[%c5_48, %c0_49, %c0_50] : memref<16x32x64xf32, #tpu.memory_space<vmem>>, vector<1x32x64xf32>
    %66 = vector.shape_cast %65 : vector<1x32x64xf32> to vector<32x64xf32>
    %cst_51 = arith.constant dense<0.000000e+00> : vector<18x64xf32>
    %67 = tpu.matmul %64, %66, %cst_51 {dimension_numbers = #tpu.dot_dimension_numbers<[1], [0], [0], [1], [0, 0, 1, 1], [], []>} : vector<18x32xf32>, vector<32x64xf32>, vector<18x64xf32> -> vector<18x64xf32>
    %68 = arith.addf %57, %67 : vector<18x64xf32>
    %c6 = arith.constant 6 : index
    %c0_52 = arith.constant 0 : index
    %c0_53 = arith.constant 0 : index
    %69 = vector.load %arg0[%c6, %c0_52, %c0_53] : memref<16x18x256xf32, #tpu.memory_space<vmem>>, vector<1x18x256xf32>
    %70 = vector.shape_cast %69 : vector<1x18x256xf32> to vector<18x256xf32>
    %cst_54 = arith.constant dense<0.000000e+00> : vector<18x32xf32>
    %71 = tpu.matmul %70, %0, %cst_54 {dimension_numbers = #tpu.dot_dimension_numbers<[1], [0], [0], [1], [0, 0, 1, 1], [], []>} : vector<18x256xf32>, vector<256x32xf32>, vector<18x32xf32> -> vector<18x32xf32>
    %72 = vector.broadcast %1 : vector<1x32xf32> to vector<18x32xf32>
    %73 = arith.addf %71, %72 : vector<18x32xf32>
    %cst_55 = arith.constant 0.000000e+00 : f32
    %74 = vector.broadcast %cst_55 : f32 to vector<18x32xf32>
    %75 = arith.maximumf %73, %74 : vector<18x32xf32>
    %c6_56 = arith.constant 6 : index
    %c0_57 = arith.constant 0 : index
    %c0_58 = arith.constant 0 : index
    %76 = vector.load %arg3[%c6_56, %c0_57, %c0_58] : memref<16x32x64xf32, #tpu.memory_space<vmem>>, vector<1x32x64xf32>
    %77 = vector.shape_cast %76 : vector<1x32x64xf32> to vector<32x64xf32>
    %cst_59 = arith.constant dense<0.000000e+00> : vector<18x64xf32>
    %78 = tpu.matmul %75, %77, %cst_59 {dimension_numbers = #tpu.dot_dimension_numbers<[1], [0], [0], [1], [0, 0, 1, 1], [], []>} : vector<18x32xf32>, vector<32x64xf32>, vector<18x64xf32> -> vector<18x64xf32>
    %79 = arith.addf %68, %78 : vector<18x64xf32>
    %c7 = arith.constant 7 : index
    %c0_60 = arith.constant 0 : index
    %c0_61 = arith.constant 0 : index
    %80 = vector.load %arg0[%c7, %c0_60, %c0_61] : memref<16x18x256xf32, #tpu.memory_space<vmem>>, vector<1x18x256xf32>
    %81 = vector.shape_cast %80 : vector<1x18x256xf32> to vector<18x256xf32>
    %cst_62 = arith.constant dense<0.000000e+00> : vector<18x32xf32>
    %82 = tpu.matmul %81, %0, %cst_62 {dimension_numbers = #tpu.dot_dimension_numbers<[1], [0], [0], [1], [0, 0, 1, 1], [], []>} : vector<18x256xf32>, vector<256x32xf32>, vector<18x32xf32> -> vector<18x32xf32>
    %83 = vector.broadcast %1 : vector<1x32xf32> to vector<18x32xf32>
    %84 = arith.addf %82, %83 : vector<18x32xf32>
    %cst_63 = arith.constant 0.000000e+00 : f32
    %85 = vector.broadcast %cst_63 : f32 to vector<18x32xf32>
    %86 = arith.maximumf %84, %85 : vector<18x32xf32>
    %c7_64 = arith.constant 7 : index
    %c0_65 = arith.constant 0 : index
    %c0_66 = arith.constant 0 : index
    %87 = vector.load %arg3[%c7_64, %c0_65, %c0_66] : memref<16x32x64xf32, #tpu.memory_space<vmem>>, vector<1x32x64xf32>
    %88 = vector.shape_cast %87 : vector<1x32x64xf32> to vector<32x64xf32>
    %cst_67 = arith.constant dense<0.000000e+00> : vector<18x64xf32>
    %89 = tpu.matmul %86, %88, %cst_67 {dimension_numbers = #tpu.dot_dimension_numbers<[1], [0], [0], [1], [0, 0, 1, 1], [], []>} : vector<18x32xf32>, vector<32x64xf32>, vector<18x64xf32> -> vector<18x64xf32>
    %90 = arith.addf %79, %89 : vector<18x64xf32>
    %c8 = arith.constant 8 : index
    %c0_68 = arith.constant 0 : index
    %c0_69 = arith.constant 0 : index
    %91 = vector.load %arg0[%c8, %c0_68, %c0_69] : memref<16x18x256xf32, #tpu.memory_space<vmem>>, vector<1x18x256xf32>
    %92 = vector.shape_cast %91 : vector<1x18x256xf32> to vector<18x256xf32>
    %cst_70 = arith.constant dense<0.000000e+00> : vector<18x32xf32>
    %93 = tpu.matmul %92, %0, %cst_70 {dimension_numbers = #tpu.dot_dimension_numbers<[1], [0], [0], [1], [0, 0, 1, 1], [], []>} : vector<18x256xf32>, vector<256x32xf32>, vector<18x32xf32> -> vector<18x32xf32>
    %94 = vector.broadcast %1 : vector<1x32xf32> to vector<18x32xf32>
    %95 = arith.addf %93, %94 : vector<18x32xf32>
    %cst_71 = arith.constant 0.000000e+00 : f32
    %96 = vector.broadcast %cst_71 : f32 to vector<18x32xf32>
    %97 = arith.maximumf %95, %96 : vector<18x32xf32>
    %c8_72 = arith.constant 8 : index
    %c0_73 = arith.constant 0 : index
    %c0_74 = arith.constant 0 : index
    %98 = vector.load %arg3[%c8_72, %c0_73, %c0_74] : memref<16x32x64xf32, #tpu.memory_space<vmem>>, vector<1x32x64xf32>
    %99 = vector.shape_cast %98 : vector<1x32x64xf32> to vector<32x64xf32>
    %cst_75 = arith.constant dense<0.000000e+00> : vector<18x64xf32>
    %100 = tpu.matmul %97, %99, %cst_75 {dimension_numbers = #tpu.dot_dimension_numbers<[1], [0], [0], [1], [0, 0, 1, 1], [], []>} : vector<18x32xf32>, vector<32x64xf32>, vector<18x64xf32> -> vector<18x64xf32>
    %101 = arith.addf %90, %100 : vector<18x64xf32>
    %c9 = arith.constant 9 : index
    %c0_76 = arith.constant 0 : index
    %c0_77 = arith.constant 0 : index
    %102 = vector.load %arg0[%c9, %c0_76, %c0_77] : memref<16x18x256xf32, #tpu.memory_space<vmem>>, vector<1x18x256xf32>
    %103 = vector.shape_cast %102 : vector<1x18x256xf32> to vector<18x256xf32>
    %cst_78 = arith.constant dense<0.000000e+00> : vector<18x32xf32>
    %104 = tpu.matmul %103, %0, %cst_78 {dimension_numbers = #tpu.dot_dimension_numbers<[1], [0], [0], [1], [0, 0, 1, 1], [], []>} : vector<18x256xf32>, vector<256x32xf32>, vector<18x32xf32> -> vector<18x32xf32>
    %105 = vector.broadcast %1 : vector<1x32xf32> to vector<18x32xf32>
    %106 = arith.addf %104, %105 : vector<18x32xf32>
    %cst_79 = arith.constant 0.000000e+00 : f32
    %107 = vector.broadcast %cst_79 : f32 to vector<18x32xf32>
    %108 = arith.maximumf %106, %107 : vector<18x32xf32>
    %c9_80 = arith.constant 9 : index
    %c0_81 = arith.constant 0 : index
    %c0_82 = arith.constant 0 : index
    %109 = vector.load %arg3[%c9_80, %c0_81, %c0_82] : memref<16x32x64xf32, #tpu.memory_space<vmem>>, vector<1x32x64xf32>
    %110 = vector.shape_cast %109 : vector<1x32x64xf32> to vector<32x64xf32>
    %cst_83 = arith.constant dense<0.000000e+00> : vector<18x64xf32>
    %111 = tpu.matmul %108, %110, %cst_83 {dimension_numbers = #tpu.dot_dimension_numbers<[1], [0], [0], [1], [0, 0, 1, 1], [], []>} : vector<18x32xf32>, vector<32x64xf32>, vector<18x64xf32> -> vector<18x64xf32>
    %112 = arith.addf %101, %111 : vector<18x64xf32>
    %c10 = arith.constant 10 : index
    %c0_84 = arith.constant 0 : index
    %c0_85 = arith.constant 0 : index
    %113 = vector.load %arg0[%c10, %c0_84, %c0_85] : memref<16x18x256xf32, #tpu.memory_space<vmem>>, vector<1x18x256xf32>
    %114 = vector.shape_cast %113 : vector<1x18x256xf32> to vector<18x256xf32>
    %cst_86 = arith.constant dense<0.000000e+00> : vector<18x32xf32>
    %115 = tpu.matmul %114, %0, %cst_86 {dimension_numbers = #tpu.dot_dimension_numbers<[1], [0], [0], [1], [0, 0, 1, 1], [], []>} : vector<18x256xf32>, vector<256x32xf32>, vector<18x32xf32> -> vector<18x32xf32>
    %116 = vector.broadcast %1 : vector<1x32xf32> to vector<18x32xf32>
    %117 = arith.addf %115, %116 : vector<18x32xf32>
    %cst_87 = arith.constant 0.000000e+00 : f32
    %118 = vector.broadcast %cst_87 : f32 to vector<18x32xf32>
    %119 = arith.maximumf %117, %118 : vector<18x32xf32>
    %c10_88 = arith.constant 10 : index
    %c0_89 = arith.constant 0 : index
    %c0_90 = arith.constant 0 : index
    %120 = vector.load %arg3[%c10_88, %c0_89, %c0_90] : memref<16x32x64xf32, #tpu.memory_space<vmem>>, vector<1x32x64xf32>
    %121 = vector.shape_cast %120 : vector<1x32x64xf32> to vector<32x64xf32>
    %cst_91 = arith.constant dense<0.000000e+00> : vector<18x64xf32>
    %122 = tpu.matmul %119, %121, %cst_91 {dimension_numbers = #tpu.dot_dimension_numbers<[1], [0], [0], [1], [0, 0, 1, 1], [], []>} : vector<18x32xf32>, vector<32x64xf32>, vector<18x64xf32> -> vector<18x64xf32>
    %123 = arith.addf %112, %122 : vector<18x64xf32>
    %c11 = arith.constant 11 : index
    %c0_92 = arith.constant 0 : index
    %c0_93 = arith.constant 0 : index
    %124 = vector.load %arg0[%c11, %c0_92, %c0_93] : memref<16x18x256xf32, #tpu.memory_space<vmem>>, vector<1x18x256xf32>
    %125 = vector.shape_cast %124 : vector<1x18x256xf32> to vector<18x256xf32>
    %cst_94 = arith.constant dense<0.000000e+00> : vector<18x32xf32>
    %126 = tpu.matmul %125, %0, %cst_94 {dimension_numbers = #tpu.dot_dimension_numbers<[1], [0], [0], [1], [0, 0, 1, 1], [], []>} : vector<18x256xf32>, vector<256x32xf32>, vector<18x32xf32> -> vector<18x32xf32>
    %127 = vector.broadcast %1 : vector<1x32xf32> to vector<18x32xf32>
    %128 = arith.addf %126, %127 : vector<18x32xf32>
    %cst_95 = arith.constant 0.000000e+00 : f32
    %129 = vector.broadcast %cst_95 : f32 to vector<18x32xf32>
    %130 = arith.maximumf %128, %129 : vector<18x32xf32>
    %c11_96 = arith.constant 11 : index
    %c0_97 = arith.constant 0 : index
    %c0_98 = arith.constant 0 : index
    %131 = vector.load %arg3[%c11_96, %c0_97, %c0_98] : memref<16x32x64xf32, #tpu.memory_space<vmem>>, vector<1x32x64xf32>
    %132 = vector.shape_cast %131 : vector<1x32x64xf32> to vector<32x64xf32>
    %cst_99 = arith.constant dense<0.000000e+00> : vector<18x64xf32>
    %133 = tpu.matmul %130, %132, %cst_99 {dimension_numbers = #tpu.dot_dimension_numbers<[1], [0], [0], [1], [0, 0, 1, 1], [], []>} : vector<18x32xf32>, vector<32x64xf32>, vector<18x64xf32> -> vector<18x64xf32>
    %134 = arith.addf %123, %133 : vector<18x64xf32>
    %c12 = arith.constant 12 : index
    %c0_100 = arith.constant 0 : index
    %c0_101 = arith.constant 0 : index
    %135 = vector.load %arg0[%c12, %c0_100, %c0_101] : memref<16x18x256xf32, #tpu.memory_space<vmem>>, vector<1x18x256xf32>
    %136 = vector.shape_cast %135 : vector<1x18x256xf32> to vector<18x256xf32>
    %cst_102 = arith.constant dense<0.000000e+00> : vector<18x32xf32>
    %137 = tpu.matmul %136, %0, %cst_102 {dimension_numbers = #tpu.dot_dimension_numbers<[1], [0], [0], [1], [0, 0, 1, 1], [], []>} : vector<18x256xf32>, vector<256x32xf32>, vector<18x32xf32> -> vector<18x32xf32>
    %138 = vector.broadcast %1 : vector<1x32xf32> to vector<18x32xf32>
    %139 = arith.addf %137, %138 : vector<18x32xf32>
    %cst_103 = arith.constant 0.000000e+00 : f32
    %140 = vector.broadcast %cst_103 : f32 to vector<18x32xf32>
    %141 = arith.maximumf %139, %140 : vector<18x32xf32>
    %c12_104 = arith.constant 12 : index
    %c0_105 = arith.constant 0 : index
    %c0_106 = arith.constant 0 : index
    %142 = vector.load %arg3[%c12_104, %c0_105, %c0_106] : memref<16x32x64xf32, #tpu.memory_space<vmem>>, vector<1x32x64xf32>
    %143 = vector.shape_cast %142 : vector<1x32x64xf32> to vector<32x64xf32>
    %cst_107 = arith.constant dense<0.000000e+00> : vector<18x64xf32>
    %144 = tpu.matmul %141, %143, %cst_107 {dimension_numbers = #tpu.dot_dimension_numbers<[1], [0], [0], [1], [0, 0, 1, 1], [], []>} : vector<18x32xf32>, vector<32x64xf32>, vector<18x64xf32> -> vector<18x64xf32>
    %145 = arith.addf %134, %144 : vector<18x64xf32>
    %c13 = arith.constant 13 : index
    %c0_108 = arith.constant 0 : index
    %c0_109 = arith.constant 0 : index
    %146 = vector.load %arg0[%c13, %c0_108, %c0_109] : memref<16x18x256xf32, #tpu.memory_space<vmem>>, vector<1x18x256xf32>
    %147 = vector.shape_cast %146 : vector<1x18x256xf32> to vector<18x256xf32>
    %cst_110 = arith.constant dense<0.000000e+00> : vector<18x32xf32>
    %148 = tpu.matmul %147, %0, %cst_110 {dimension_numbers = #tpu.dot_dimension_numbers<[1], [0], [0], [1], [0, 0, 1, 1], [], []>} : vector<18x256xf32>, vector<256x32xf32>, vector<18x32xf32> -> vector<18x32xf32>
    %149 = vector.broadcast %1 : vector<1x32xf32> to vector<18x32xf32>
    %150 = arith.addf %148, %149 : vector<18x32xf32>
    %cst_111 = arith.constant 0.000000e+00 : f32
    %151 = vector.broadcast %cst_111 : f32 to vector<18x32xf32>
    %152 = arith.maximumf %150, %151 : vector<18x32xf32>
    %c13_112 = arith.constant 13 : index
    %c0_113 = arith.constant 0 : index
    %c0_114 = arith.constant 0 : index
    %153 = vector.load %arg3[%c13_112, %c0_113, %c0_114] : memref<16x32x64xf32, #tpu.memory_space<vmem>>, vector<1x32x64xf32>
    %154 = vector.shape_cast %153 : vector<1x32x64xf32> to vector<32x64xf32>
    %cst_115 = arith.constant dense<0.000000e+00> : vector<18x64xf32>
    %155 = tpu.matmul %152, %154, %cst_115 {dimension_numbers = #tpu.dot_dimension_numbers<[1], [0], [0], [1], [0, 0, 1, 1], [], []>} : vector<18x32xf32>, vector<32x64xf32>, vector<18x64xf32> -> vector<18x64xf32>
    %156 = arith.addf %145, %155 : vector<18x64xf32>
    %c14 = arith.constant 14 : index
    %c0_116 = arith.constant 0 : index
    %c0_117 = arith.constant 0 : index
    %157 = vector.load %arg0[%c14, %c0_116, %c0_117] : memref<16x18x256xf32, #tpu.memory_space<vmem>>, vector<1x18x256xf32>
    %158 = vector.shape_cast %157 : vector<1x18x256xf32> to vector<18x256xf32>
    %cst_118 = arith.constant dense<0.000000e+00> : vector<18x32xf32>
    %159 = tpu.matmul %158, %0, %cst_118 {dimension_numbers = #tpu.dot_dimension_numbers<[1], [0], [0], [1], [0, 0, 1, 1], [], []>} : vector<18x256xf32>, vector<256x32xf32>, vector<18x32xf32> -> vector<18x32xf32>
    %160 = vector.broadcast %1 : vector<1x32xf32> to vector<18x32xf32>
    %161 = arith.addf %159, %160 : vector<18x32xf32>
    %cst_119 = arith.constant 0.000000e+00 : f32
    %162 = vector.broadcast %cst_119 : f32 to vector<18x32xf32>
    %163 = arith.maximumf %161, %162 : vector<18x32xf32>
    %c14_120 = arith.constant 14 : index
    %c0_121 = arith.constant 0 : index
    %c0_122 = arith.constant 0 : index
    %164 = vector.load %arg3[%c14_120, %c0_121, %c0_122] : memref<16x32x64xf32, #tpu.memory_space<vmem>>, vector<1x32x64xf32>
    %165 = vector.shape_cast %164 : vector<1x32x64xf32> to vector<32x64xf32>
    %cst_123 = arith.constant dense<0.000000e+00> : vector<18x64xf32>
    %166 = tpu.matmul %163, %165, %cst_123 {dimension_numbers = #tpu.dot_dimension_numbers<[1], [0], [0], [1], [0, 0, 1, 1], [], []>} : vector<18x32xf32>, vector<32x64xf32>, vector<18x64xf32> -> vector<18x64xf32>
    %167 = arith.addf %156, %166 : vector<18x64xf32>
    %c15 = arith.constant 15 : index
    %c0_124 = arith.constant 0 : index
    %c0_125 = arith.constant 0 : index
    %168 = vector.load %arg0[%c15, %c0_124, %c0_125] : memref<16x18x256xf32, #tpu.memory_space<vmem>>, vector<1x18x256xf32>
    %169 = vector.shape_cast %168 : vector<1x18x256xf32> to vector<18x256xf32>
    %cst_126 = arith.constant dense<0.000000e+00> : vector<18x32xf32>
    %170 = tpu.matmul %169, %0, %cst_126 {dimension_numbers = #tpu.dot_dimension_numbers<[1], [0], [0], [1], [0, 0, 1, 1], [], []>} : vector<18x256xf32>, vector<256x32xf32>, vector<18x32xf32> -> vector<18x32xf32>
    %171 = vector.broadcast %1 : vector<1x32xf32> to vector<18x32xf32>
    %172 = arith.addf %170, %171 : vector<18x32xf32>
    %cst_127 = arith.constant 0.000000e+00 : f32
    %173 = vector.broadcast %cst_127 : f32 to vector<18x32xf32>
    %174 = arith.maximumf %172, %173 : vector<18x32xf32>
    %c15_128 = arith.constant 15 : index
    %c0_129 = arith.constant 0 : index
    %c0_130 = arith.constant 0 : index
    %175 = vector.load %arg3[%c15_128, %c0_129, %c0_130] : memref<16x32x64xf32, #tpu.memory_space<vmem>>, vector<1x32x64xf32>
    %176 = vector.shape_cast %175 : vector<1x32x64xf32> to vector<32x64xf32>
    %cst_131 = arith.constant dense<0.000000e+00> : vector<18x64xf32>
    %177 = tpu.matmul %174, %176, %cst_131 {dimension_numbers = #tpu.dot_dimension_numbers<[1], [0], [0], [1], [0, 0, 1, 1], [], []>} : vector<18x32xf32>, vector<32x64xf32>, vector<18x64xf32> -> vector<18x64xf32>
    %178 = arith.addf %167, %177 : vector<18x64xf32>
    %c0_132 = arith.constant 0 : index
    %c0_133 = arith.constant 0 : index
    %179 = vector.load %arg4[%c0_132, %c0_133] : memref<1x64xf32, #tpu.memory_space<vmem>>, vector<1x64xf32>
    %180 = vector.broadcast %179 : vector<1x64xf32> to vector<18x64xf32>
    %181 = arith.addf %178, %180 : vector<18x64xf32>
    %cst_134 = arith.constant 0.000000e+00 : f32
    %182 = vector.broadcast %cst_134 : f32 to vector<18x64xf32>
    %183 = arith.maximumf %181, %182 : vector<18x64xf32>
    %c0_135 = arith.constant 0 : index
    %c0_136 = arith.constant 0 : index
    %184 = vector.load %arg14[%c0_135, %c0_136] : memref<18x64xf32, #tpu.memory_space<vmem>>, vector<18x64xf32>
    tpu.vector_store %arg14[%c0_135, %c0_136], %183 {strides = array<i32>} : memref<18x64xf32, #tpu.memory_space<vmem>>, vector<18x64xf32>,
    %cst_137 = arith.constant 0.000000e+00 : f32
    %185 = vector.broadcast %cst_137 : f32 to vector<2x64xf32>
    %c0_138 = arith.constant 0 : index
    %c0_139 = arith.constant 0 : index
    %186 = vector.load %arg14[%c0_138, %c0_139] : memref<18x64xf32, #tpu.memory_space<vmem>>, vector<2x64xf32>
    %c0_140 = arith.constant 0 : index
    %c0_141 = arith.constant 0 : index
    %c0_142 = arith.constant 0 : index
    %187 = vector.load %arg5[%c0_140, %c0_141, %c0_142] : memref<9x64x64xf32, #tpu.memory_space<vmem>>, vector<1x64x64xf32>
    %188 = vector.shape_cast %187 : vector<1x64x64xf32> to vector<64x64xf32>
    %cst_143 = arith.constant dense<0.000000e+00> : vector<2x64xf32>
    %189 = tpu.matmul %186, %188, %cst_143 {dimension_numbers = #tpu.dot_dimension_numbers<[1], [0], [0], [1], [0, 0, 1, 1], [], []>} : vector<2x64xf32>, vector<64x64xf32>, vector<2x64xf32> -> vector<2x64xf32>
    %190 = arith.addf %185, %189 : vector<2x64xf32>
    %c2_144 = arith.constant 2 : index
    %c0_145 = arith.constant 0 : index
    %191 = vector.load %arg14[%c2_144, %c0_145] : memref<18x64xf32, #tpu.memory_space<vmem>>, vector<2x64xf32>
    %c1_146 = arith.constant 1 : index
    %c0_147 = arith.constant 0 : index
    %c0_148 = arith.constant 0 : index
    %192 = vector.load %arg5[%c1_146, %c0_147, %c0_148] : memref<9x64x64xf32, #tpu.memory_space<vmem>>, vector<1x64x64xf32>
    %193 = vector.shape_cast %192 : vector<1x64x64xf32> to vector<64x64xf32>
    %cst_149 = arith.constant dense<0.000000e+00> : vector<2x64xf32>
    %194 = tpu.matmul %191, %193, %cst_149 {dimension_numbers = #tpu.dot_dimension_numbers<[1], [0], [0], [1], [0, 0, 1, 1], [], []>} : vector<2x64xf32>, vector<64x64xf32>, vector<2x64xf32> -> vector<2x64xf32>
    %195 = arith.addf %190, %194 : vector<2x64xf32>
    %c4_150 = arith.constant 4 : index
    %c0_151 = arith.constant 0 : index
    %196 = vector.load %arg14[%c4_150, %c0_151] : memref<18x64xf32, #tpu.memory_space<vmem>>, vector<2x64xf32>
    %c2_152 = arith.constant 2 : index
    %c0_153 = arith.constant 0 : index
    %c0_154 = arith.constant 0 : index
    %197 = vector.load %arg5[%c2_152, %c0_153, %c0_154] : memref<9x64x64xf32, #tpu.memory_space<vmem>>, vector<1x64x64xf32>
    %198 = vector.shape_cast %197 : vector<1x64x64xf32> to vector<64x64xf32>
    %cst_155 = arith.constant dense<0.000000e+00> : vector<2x64xf32>
    %199 = tpu.matmul %196, %198, %cst_155 {dimension_numbers = #tpu.dot_dimension_numbers<[1], [0], [0], [1], [0, 0, 1, 1], [], []>} : vector<2x64xf32>, vector<64x64xf32>, vector<2x64xf32> -> vector<2x64xf32>
    %200 = arith.addf %195, %199 : vector<2x64xf32>
    %c6_156 = arith.constant 6 : index
    %c0_157 = arith.constant 0 : index
    %201 = vector.load %arg14[%c6_156, %c0_157] : memref<18x64xf32, #tpu.memory_space<vmem>>, vector<2x64xf32>
    %c3_158 = arith.constant 3 : index
    %c0_159 = arith.constant 0 : index
    %c0_160 = arith.constant 0 : index
    %202 = vector.load %arg5[%c3_158, %c0_159, %c0_160] : memref<9x64x64xf32, #tpu.memory_space<vmem>>, vector<1x64x64xf32>
    %203 = vector.shape_cast %202 : vector<1x64x64xf32> to vector<64x64xf32>
    %cst_161 = arith.constant dense<0.000000e+00> : vector<2x64xf32>
    %204 = tpu.matmul %201, %203, %cst_161 {dimension_numbers = #tpu.dot_dimension_numbers<[1], [0], [0], [1], [0, 0, 1, 1], [], []>} : vector<2x64xf32>, vector<64x64xf32>, vector<2x64xf32> -> vector<2x64xf32>
    %205 = arith.addf %200, %204 : vector<2x64xf32>
    %c8_162 = arith.constant 8 : index
    %c0_163 = arith.constant 0 : index
    %206 = vector.load %arg14[%c8_162, %c0_163] : memref<18x64xf32, #tpu.memory_space<vmem>>, vector<2x64xf32>
    %c4_164 = arith.constant 4 : index
    %c0_165 = arith.constant 0 : index
    %c0_166 = arith.constant 0 : index
    %207 = vector.load %arg5[%c4_164, %c0_165, %c0_166] : memref<9x64x64xf32, #tpu.memory_space<vmem>>, vector<1x64x64xf32>
    %208 = vector.shape_cast %207 : vector<1x64x64xf32> to vector<64x64xf32>
    %cst_167 = arith.constant dense<0.000000e+00> : vector<2x64xf32>
    %209 = tpu.matmul %206, %208, %cst_167 {dimension_numbers = #tpu.dot_dimension_numbers<[1], [0], [0], [1], [0, 0, 1, 1], [], []>} : vector<2x64xf32>, vector<64x64xf32>, vector<2x64xf32> -> vector<2x64xf32>
    %210 = arith.addf %205, %209 : vector<2x64xf32>
    %c10_168 = arith.constant 10 : index
    %c0_169 = arith.constant 0 : index
    %211 = vector.load %arg14[%c10_168, %c0_169] : memref<18x64xf32, #tpu.memory_space<vmem>>, vector<2x64xf32>
    %c5_170 = arith.constant 5 : index
    %c0_171 = arith.constant 0 : index
    %c0_172 = arith.constant 0 : index
    %212 = vector.load %arg5[%c5_170, %c0_171, %c0_172] : memref<9x64x64xf32, #tpu.memory_space<vmem>>, vector<1x64x64xf32>
    %213 = vector.shape_cast %212 : vector<1x64x64xf32> to vector<64x64xf32>
    %cst_173 = arith.constant dense<0.000000e+00> : vector<2x64xf32>
    %214 = tpu.matmul %211, %213, %cst_173 {dimension_numbers = #tpu.dot_dimension_numbers<[1], [0], [0], [1], [0, 0, 1, 1], [], []>} : vector<2x64xf32>, vector<64x64xf32>, vector<2x64xf32> -> vector<2x64xf32>
    %215 = arith.addf %210, %214 : vector<2x64xf32>
    %c12_174 = arith.constant 12 : index
    %c0_175 = arith.constant 0 : index
    %216 = vector.load %arg14[%c12_174, %c0_175] : memref<18x64xf32, #tpu.memory_space<vmem>>, vector<2x64xf32>
    %c6_176 = arith.constant 6 : index
    %c0_177 = arith.constant 0 : index
    %c0_178 = arith.constant 0 : index
    %217 = vector.load %arg5[%c6_176, %c0_177, %c0_178] : memref<9x64x64xf32, #tpu.memory_space<vmem>>, vector<1x64x64xf32>
    %218 = vector.shape_cast %217 : vector<1x64x64xf32> to vector<64x64xf32>
    %cst_179 = arith.constant dense<0.000000e+00> : vector<2x64xf32>
    %219 = tpu.matmul %216, %218, %cst_179 {dimension_numbers = #tpu.dot_dimension_numbers<[1], [0], [0], [1], [0, 0, 1, 1], [], []>} : vector<2x64xf32>, vector<64x64xf32>, vector<2x64xf32> -> vector<2x64xf32>
    %220 = arith.addf %215, %219 : vector<2x64xf32>
    %c14_180 = arith.constant 14 : index
    %c0_181 = arith.constant 0 : index
    %221 = vector.load %arg14[%c14_180, %c0_181] : memref<18x64xf32, #tpu.memory_space<vmem>>, vector<2x64xf32>
    %c7_182 = arith.constant 7 : index
    %c0_183 = arith.constant 0 : index
    %c0_184 = arith.constant 0 : index
    %222 = vector.load %arg5[%c7_182, %c0_183, %c0_184] : memref<9x64x64xf32, #tpu.memory_space<vmem>>, vector<1x64x64xf32>
    %223 = vector.shape_cast %222 : vector<1x64x64xf32> to vector<64x64xf32>
    %cst_185 = arith.constant dense<0.000000e+00> : vector<2x64xf32>
    %224 = tpu.matmul %221, %223, %cst_185 {dimension_numbers = #tpu.dot_dimension_numbers<[1], [0], [0], [1], [0, 0, 1, 1], [], []>} : vector<2x64xf32>, vector<64x64xf32>, vector<2x64xf32> -> vector<2x64xf32>
    %225 = arith.addf %220, %224 : vector<2x64xf32>
    %c16 = arith.constant 16 : index
    %c0_186 = arith.constant 0 : index
    %226 = vector.load %arg14[%c16, %c0_186] : memref<18x64xf32, #tpu.memory_space<vmem>>, vector<2x64xf32>
    %c8_187 = arith.constant 8 : index
    %c0_188 = arith.constant 0 : index
    %c0_189 = arith.constant 0 : index
    %227 = vector.load %arg5[%c8_187, %c0_188, %c0_189] : memref<9x64x64xf32, #tpu.memory_space<vmem>>, vector<1x64x64xf32>
    %228 = vector.shape_cast %227 : vector<1x64x64xf32> to vector<64x64xf32>
    %cst_190 = arith.constant dense<0.000000e+00> : vector<2x64xf32>
    %229 = tpu.matmul %226, %228, %cst_190 {dimension_numbers = #tpu.dot_dimension_numbers<[1], [0], [0], [1], [0, 0, 1, 1], [], []>} : vector<2x64xf32>, vector<64x64xf32>, vector<2x64xf32> -> vector<2x64xf32>
    %230 = arith.addf %225, %229 : vector<2x64xf32>
    %c0_191 = arith.constant 0 : index
    %c0_192 = arith.constant 0 : index
    %231 = vector.load %arg6[%c0_191, %c0_192] : memref<1x64xf32, #tpu.memory_space<vmem>>, vector<1x64xf32>
    %232 = vector.broadcast %231 : vector<1x64xf32> to vector<2x64xf32>
    %233 = arith.addf %230, %232 : vector<2x64xf32>
    %cst_193 = arith.constant 0.000000e+00 : f32
    %234 = vector.broadcast %cst_193 : f32 to vector<2x64xf32>
    %235 = arith.maximumf %233, %234 : vector<2x64xf32>
    %c0_194 = arith.constant 0 : index
    %c0_195 = arith.constant 0 : index
    %236 = vector.load %arg7[%c0_194, %c0_195] : memref<64x512xf32, #tpu.memory_space<vmem>>, vector<64x512xf32>
    %cst_196 = arith.constant dense<0.000000e+00> : vector<2x512xf32>
    %237 = tpu.matmul %235, %236, %cst_196 {dimension_numbers = #tpu.dot_dimension_numbers<[1], [0], [0], [1], [0, 0, 1, 1], [], []>} : vector<2x64xf32>, vector<64x512xf32>, vector<2x512xf32> -> vector<2x512xf32>
    %c0_197 = arith.constant 0 : index
    %c0_198 = arith.constant 0 : index
    %238 = vector.load %arg8[%c0_197, %c0_198] : memref<1x512xf32, #tpu.memory_space<vmem>>, vector<1x512xf32>
    %239 = vector.broadcast %238 : vector<1x512xf32> to vector<2x512xf32>
    %240 = arith.addf %237, %239 : vector<2x512xf32>
    %cst_199 = arith.constant 0.000000e+00 : f32
    %241 = vector.broadcast %cst_199 : f32 to vector<2x512xf32>
    %242 = arith.maximumf %240, %241 : vector<2x512xf32>
    %c0_200 = arith.constant 0 : index
    %c0_201 = arith.constant 0 : index
    %243 = vector.load %arg9[%c0_200, %c0_201] : memref<512x256xf32, #tpu.memory_space<vmem>>, vector<512x256xf32>
    %cst_202 = arith.constant dense<0.000000e+00> : vector<2x256xf32>
    %244 = tpu.matmul %242, %243, %cst_202 {dimension_numbers = #tpu.dot_dimension_numbers<[1], [0], [0], [1], [0, 0, 1, 1], [], []>} : vector<2x512xf32>, vector<512x256xf32>, vector<2x256xf32> -> vector<2x256xf32>
    %c0_203 = arith.constant 0 : index
    %c0_204 = arith.constant 0 : index
    %245 = vector.load %arg10[%c0_203, %c0_204] : memref<1x256xf32, #tpu.memory_space<vmem>>, vector<1x256xf32>
    %246 = vector.broadcast %245 : vector<1x256xf32> to vector<2x256xf32>
    %247 = arith.addf %244, %246 : vector<2x256xf32>
    %cst_205 = arith.constant 0.000000e+00 : f32
    %248 = vector.broadcast %cst_205 : f32 to vector<2x256xf32>
    %249 = arith.maximumf %247, %248 : vector<2x256xf32>
    %c0_206 = arith.constant 0 : index
    %c0_207 = arith.constant 0 : index
    %250 = vector.load %arg11[%c0_206, %c0_207] : memref<256x128xf32, #tpu.memory_space<vmem>>, vector<256x128xf32>
    %cst_208 = arith.constant dense<0.000000e+00> : vector<2x128xf32>
    %251 = tpu.matmul %249, %250, %cst_208 {dimension_numbers = #tpu.dot_dimension_numbers<[1], [0], [0], [1], [0, 0, 1, 1], [], []>} : vector<2x256xf32>, vector<256x128xf32>, vector<2x128xf32> -> vector<2x128xf32>
    %c0_209 = arith.constant 0 : index
    %c0_210 = arith.constant 0 : index
    %252 = vector.load %arg12[%c0_209, %c0_210] : memref<1x128xf32, #tpu.memory_space<vmem>>, vector<1x128xf32>
    %253 = vector.broadcast %252 : vector<1x128xf32> to vector<2x128xf32>
    %254 = arith.addf %251, %253 : vector<2x128xf32>
    %c0_211 = arith.constant 0 : index
    %c0_212 = arith.constant 0 : index
    %255 = vector.load %arg13[%c0_211, %c0_212] : memref<2x128xf32, #tpu.memory_space<vmem>>, vector<2x128xf32>
    tpu.vector_store %arg13[%c0_211, %c0_212], %254 {strides = array<i32>} : memref<2x128xf32, #tpu.memory_space<vmem>>, vector<2x128xf32>,
    return
  }
}

</mosaic_0001>

<llo_original>
// kernel: qconvnet_forward.1
$region0: #{qconvnet_forward.1}
  #allocation0 [shape = 'u32[]', space=smem, size = 0x4, offset = 0x4, fixed_abs, tag = 'smem constant byte address 0x4 - core index']
  #allocation1 [shape = 'u32[144,128]{1,0:T(1,128)}', space=vmem, size = 0x12000, scoped, tag = 'internal scratch']
  #allocation2 [shape = 'f32[18,64]{1,0:T(8,128)}', space=vmem, size = 0x3000, scoped, tag = 'scratch operand']
  %s0 = inlined_call_operand.vmem [shape: f32[16,18,256], index: 0, kind: input, shape index: {}]
  %s1 = inlined_call_operand.vmem [shape: f32[256,32], index: 1, kind: input, shape index: {}]
  %s2 = inlined_call_operand.vmem [shape: f32[1,32], index: 2, kind: input, shape index: {}]
  %s3 = inlined_call_operand.vmem [shape: f32[16,32,64], index: 3, kind: input, shape index: {}]
  %s4 = inlined_call_operand.vmem [shape: f32[1,64], index: 4, kind: input, shape index: {}]
  %s5 = inlined_call_operand.vmem [shape: f32[9,64,64], index: 5, kind: input, shape index: {}]
  %s6 = inlined_call_operand.vmem [shape: f32[1,64], index: 6, kind: input, shape index: {}]
  %s7 = inlined_call_operand.vmem [shape: f32[64,512], index: 7, kind: input, shape index: {}]
  %s8 = inlined_call_operand.vmem [shape: f32[1,512], index: 8, kind: input, shape index: {}]
  %s9 = inlined_call_operand.vmem [shape: f32[512,256], index: 9, kind: input, shape index: {}]
  %s10 = inlined_call_operand.vmem [shape: f32[1,256], index: 10, kind: input, shape index: {}]
  %s11 = inlined_call_operand.vmem [shape: f32[256,128], index: 11, kind: input, shape index: {}]
  %s12 = inlined_call_operand.vmem [shape: f32[1,128], index: 12, kind: input, shape index: {}]
  %s13 = inlined_call_operand.hbm [shape: f32[2,128], index: 13, kind: output, shape index: {}]
  %s14 = sld [smem:[#allocation0]]
  $region62: #{qconvnet_forward.1} parent=0
    _
  %s16 = ssub.s32 1, %s14
  %s17 = scalar_select 0, %s16, %s14
  $region1: #{qconvnet_forward.1} parent=0
    #allocation3 [shape = 'u8[1024]{0}', space=vmem, size = 0x400, scoped, tag = 'output window, operand 0, single buffered']
    #allocation4 [shape = 's32[1]{0}', space=sflag, size = 0x4, scoped, tag = 'scoped memory for qconvnet_forward.1']
    %18 = vsyncpa [#allocation4], 0
    // Predicated region
    $region2: #{qconvnet_forward.1} parent=1 // pred_check
      _
    $region3: #{qconvnet_forward.1} parent=1 // pred_check_branch
      %20 = sbr.rel (0) target = $region5
    $region4: #{qconvnet_forward.1} parent=1 // pred_region
      _
    $region5: #{qconvnet_forward.1} parent=1 // pred_fallthru
      _
    // Predicated region
    $region6: #{qconvnet_forward.1} parent=1 // pred_check
      _
    $region7: #{qconvnet_forward.1} parent=1 // pred_check_branch
      %22 = sbr.rel (0) target = $region9
    $region8: #{qconvnet_forward.1} parent=1 // pred_region
      _
    $region9: #{qconvnet_forward.1} parent=1 // pred_fallthru
      _
    // Predicated region
    $region10: #{qconvnet_forward.1} parent=1 // pred_check
      _
    $region11: #{qconvnet_forward.1} parent=1 // pred_check_branch
      %24 = sbr.rel (0) target = $region13
    $region12: #{qconvnet_forward.1} parent=1 // pred_region
      _
    $region13: #{qconvnet_forward.1} parent=1 // pred_fallthru
      _
    // Predicated region
    $region14: #{qconvnet_forward.1} parent=1 // pred_check
      _
    $region15: #{qconvnet_forward.1} parent=1 // pred_check_branch
      %26 = sbr.rel (0) target = $region17
    $region16: #{qconvnet_forward.1} parent=1 // pred_region
      _
    $region17: #{qconvnet_forward.1} parent=1 // pred_fallthru
      _
    // Predicated region
    $region18: #{qconvnet_forward.1} parent=1 // pred_check
      _
    $region19: #{qconvnet_forward.1} parent=1 // pred_check_branch
      %28 = sbr.rel (0) target = $region21
    $region20: #{qconvnet_forward.1} parent=1 // pred_region
      _
    $region21: #{qconvnet_forward.1} parent=1 // pred_fallthru
      _
    // Predicated region
    $region22: #{qconvnet_forward.1} parent=1 // pred_check
      _
    $region23: #{qconvnet_forward.1} parent=1 // pred_check_branch
      %30 = sbr.rel (0) target = $region25
    $region24: #{qconvnet_forward.1} parent=1 // pred_region
      _
    $region25: #{qconvnet_forward.1} parent=1 // pred_fallthru
      _
    // Predicated region
    $region26: #{qconvnet_forward.1} parent=1 // pred_check
      _
    $region27: #{qconvnet_forward.1} parent=1 // pred_check_branch
      %32 = sbr.rel (0) target = $region29
    $region28: #{qconvnet_forward.1} parent=1 // pred_region
      _
    $region29: #{qconvnet_forward.1} parent=1 // pred_fallthru
      _
    // Predicated region
    $region30: #{qconvnet_forward.1} parent=1 // pred_check
      _
    $region31: #{qconvnet_forward.1} parent=1 // pred_check_branch
      %34 = sbr.rel (0) target = $region33
    $region32: #{qconvnet_forward.1} parent=1 // pred_region
      _
    $region33: #{qconvnet_forward.1} parent=1 // pred_fallthru
      _
    // Predicated region
    $region34: #{qconvnet_forward.1} parent=1 // pred_check
      _
    $region35: #{qconvnet_forward.1} parent=1 // pred_check_branch
      %36 = sbr.rel (0) target = $region37
    $region36: #{qconvnet_forward.1} parent=1 // pred_region
      _
    $region37: #{qconvnet_forward.1} parent=1 // pred_fallthru
      _
    // Predicated region
    $region38: #{qconvnet_forward.1} parent=1 // pred_check
      _
    $region39: #{qconvnet_forward.1} parent=1 // pred_check_branch
      %38 = sbr.rel (0) target = $region41
    $region40: #{qconvnet_forward.1} parent=1 // pred_region
      _
    $region41: #{qconvnet_forward.1} parent=1 // pred_fallthru
      _
    // Predicated region
    $region42: #{qconvnet_forward.1} parent=1 // pred_check
      _
    $region43: #{qconvnet_forward.1} parent=1 // pred_check_branch
      %40 = sbr.rel (0) target = $region45
    $region44: #{qconvnet_forward.1} parent=1 // pred_region
      _
    $region45: #{qconvnet_forward.1} parent=1 // pred_fallthru
      _
    // Predicated region
    $region46: #{qconvnet_forward.1} parent=1 // pred_check
      _
    $region47: #{qconvnet_forward.1} parent=1 // pred_check_branch
      %42 = sbr.rel (0) target = $region49
    $region48: #{qconvnet_forward.1} parent=1 // pred_region
      _
    $region49: #{qconvnet_forward.1} parent=1 // pred_fallthru
      _
    // Predicated region
    $region50: #{qconvnet_forward.1} parent=1 // pred_check
      _
    $region51: #{qconvnet_forward.1} parent=1 // pred_check_branch
      %44 = sbr.rel (0) target = $region53
    $region52: #{qconvnet_forward.1} parent=1 // pred_region
      _
    $region53: #{qconvnet_forward.1} parent=1 // pred_fallthru
      _
    %v45 = vld [vmem:[%s1] sm:$0xff]
    %v46 = vld [vmem:[%s1 + $0x8] sm:$0xff]
    %v47 = vld [vmem:[%s1 + $0x10] sm:$0xff]
    %v48 = vld [vmem:[%s1 + $0x18] sm:$0xff]
    %v49 = vld [vmem:[%s1 + $0x20] sm:$0xff]
    %v50 = vld [vmem:[%s1 + $0x28] sm:$0xff]
    %v51 = vld [vmem:[%s1 + $0x30] sm:$0xff]
    %v52 = vld [vmem:[%s1 + $0x38] sm:$0xff]
    %v53 = vld [vmem:[%s1 + $0x40] sm:$0xff]
    %v54 = vld [vmem:[%s1 + $0x48] sm:$0xff]
    %v55 = vld [vmem:[%s1 + $0x50] sm:$0xff]
    %v56 = vld [vmem:[%s1 + $0x58] sm:$0xff]
    %v57 = vld [vmem:[%s1 + $0x60] sm:$0xff]
    %v58 = vld [vmem:[%s1 + $0x68] sm:$0xff]
    %v59 = vld [vmem:[%s1 + $0x70] sm:$0xff]
    %v60 = vld [vmem:[%s1 + $0x78] sm:$0xff]
    %v61 = vld [vmem:[%s1 + $0x80] sm:$0xff]
    %v62 = vld [vmem:[%s1 + $0x88] sm:$0xff]
    %v63 = vld [vmem:[%s1 + $0x90] sm:$0xff]
    %v64 = vld [vmem:[%s1 + $0x98] sm:$0xff]
    %v65 = vld [vmem:[%s1 + $0xa0] sm:$0xff]
    %v66 = vld [vmem:[%s1 + $0xa8] sm:$0xff]
    %v67 = vld [vmem:[%s1 + $0xb0] sm:$0xff]
    %v68 = vld [vmem:[%s1 + $0xb8] sm:$0xff]
    %v69 = vld [vmem:[%s1 + $0xc0] sm:$0xff]
    %v70 = vld [vmem:[%s1 + $0xc8] sm:$0xff]
    %v71 = vld [vmem:[%s1 + $0xd0] sm:$0xff]
    %v72 = vld [vmem:[%s1 + $0xd8] sm:$0xff]
    %v73 = vld [vmem:[%s1 + $0xe0] sm:$0xff]
    %v74 = vld [vmem:[%s1 + $0xe8] sm:$0xff]
    %v75 = vld [vmem:[%s1 + $0xf0] sm:$0xff]
    %v76 = vld [vmem:[%s1 + $0xf8] sm:$0xff]
    %v77 = vld [vmem:[%s2] sm:$0x1]
    %v78 = vld [vmem:[%s0] sm:$0xff]
    %v79 = vld [vmem:[%s0 + $0x8] sm:$0xff]
    %v80 = vld [vmem:[%s0 + $0x10] sm:$0xff]
    %v81 = vld [vmem:[%s0 + $0x18] sm:$0xff]
    %v82 = vld [vmem:[%s0 + $0x20] sm:$0x3]
    %v83 = vld [vmem:[%s0 + $0x28] sm:$0x3]
    %v85 = vlaneseq
    %v86 = vshrl.u32 %v85, 7
    %v87 = vsub.s32 0, %v86
    %v88 = vrot.slane %v77, %v87
    %90 = vmatprep.subr.mxu0 0.0
    %91 = vmatpush1.msra.mxu0 %v45
    %92 = vmatprep.subr.mxu0 0.0
    %93 = vmatpush1.msra.mxu0 %v46
    %94 = vmatprep.subr.mxu0 0.0
    %95 = vmatpush1.msra.mxu0 %v47
    %96 = vmatprep.subr.mxu0 0.0
    %97 = vmatpush1.msra.mxu0 %v48
    %98 = vmatprep.subr.mxu0 0.0
    %99 = vmatpush1.msra.mxu0 %v49
    %100 = vmatprep.subr.mxu0 0.0
    %101 = vmatpush1.msra.mxu0 %v50
    %102 = vmatprep.subr.mxu0 0.0
    %103 = vmatpush1.msra.mxu0 %v51
    %104 = vmatprep.subr.mxu0 0.0
    %105 = vmatpush1.msra.mxu0 %v52
    %106 = vmatprep.subr.mxu0 0.0
    %107 = vmatpush1.msra.mxu0 %v53
    %108 = vmatprep.subr.mxu0 0.0
    %109 = vmatpush1.msra.mxu0 %v54
    %110 = vmatprep.subr.mxu0 0.0
    %111 = vmatpush1.msra.mxu0 %v55
    %112 = vmatprep.subr.mxu0 0.0
    %113 = vmatpush1.msra.mxu0 %v56
    %114 = vmatprep.subr.mxu0 0.0
    %115 = vmatpush1.msra.mxu0 %v57
    %116 = vmatprep.subr.mxu0 0.0
    %117 = vmatpush1.msra.mxu0 %v58
    %118 = vmatprep.subr.mxu0 0.0
    %119 = vmatpush1.msra.mxu0 %v59
    %120 = vmatprep.subr.mxu0 0.0
    %121 = vmatpush1.msra.mxu0 %v60
    %122 = vmatprep.subr.mxu0 0.0
    %123 = vmatpush1.msra.mxu0 %v61
    %124 = vmatprep.subr.mxu0 0.0
    %125 = vmatpush1.msra.mxu0 %v62
    %126 = vmatprep.subr.mxu0 0.0
    %127 = vmatpush1.msra.mxu0 %v63
    %128 = vmatprep.subr.mxu0 0.0
    %129 = vmatpush1.msra.mxu0 %v64
    %130 = vmatprep.subr.mxu0 0.0
    %131 = vmatpush1.msra.mxu0 %v65
    %132 = vmatprep.subr.mxu0 0.0
    %133 = vmatpush1.msra.mxu0 %v66
    %134 = vmatprep.subr.mxu0 0.0
    %135 = vmatpush1.msra.mxu0 %v67
    %136 = vmatprep.subr.mxu0 0.0
    %137 = vmatpush1.msra.mxu0 %v68
    %138 = vmatprep.subr.mxu0 0.0
    %139 = vmatpush1.msra.mxu0 %v69
    %140 = vmatprep.subr.mxu0 0.0
    %141 = vmatpush1.msra.mxu0 %v70
    %142 = vmatprep.subr.mxu0 0.0
    %143 = vmatpush1.msra.mxu0 %v71
    %144 = vmatprep.subr.mxu0 0.0
    %145 = vmatpush1.msra.mxu0 %v72
    %146 = vmatprep.subr.mxu0 0.0
    %147 = vmatpush1.msra.mxu0 %v73
    %148 = vmatprep.subr.mxu0 0.0
    %149 = vmatpush1.msra.mxu0 %v74
    %150 = vmatprep.subr.mxu0 0.0
    %151 = vmatpush1.msra.mxu0 %v75
    %152 = vmatprep.subr.mxu0 0.0
    %153 = vmatpush1.msra.mxu0 %v76
    %154 = vmatprep.mubr.f32.mxu0 %v79
    %155 = vmatmul.mubr.f32.gmra.mrb[0].mxu0 %v78
    %v156 = vpop.f32.mrb[0].mxu0
    %v157 = vadd.f32 %v88, %v156
    %v158 = vpop.f32.mrb[0].mxu0
    %159 = vmatprep.mubr.f32.mxu0 %v81
    %160 = vmatmul.mubr.f32.gmra.mrb[0].mxu0 %v80
    %v161 = vpop.f32.mrb[0].mxu0
    %v162 = vadd.f32 %v88, %v161
    %v163 = vpop.f32.mrb[0].mxu0
    %164 = vmatprep.mubr.f32.mxu0 %v83
    %165 = vmatmul.mubr.f32.gmra.mrb[0].mxu0 %v82
    %v166 = vpop.f32.mrb[0].mxu0
    %v167 = vadd.f32 %v88, %v166
    %v168 = vpop.f32.mrb[0].mxu0
    %169 = vdwg.mxu0
    %v170 = vmax.f32 %v157, 0.0
    %v171 = vmax.f32 %v162, 0.0
    %v172 = vmax.f32 %v167, 0.0
    %v173 = vld [vmem:[%s3] sm:$0xff]
    %v174 = vld [vmem:[%s3 + $0x8] sm:$0xff]
    %v175 = vld [vmem:[%s3 + $0x10] sm:$0xff]
    %v176 = vld [vmem:[%s3 + $0x18] sm:$0xff]
    %s177 = scalar_lea.vmem %s0, 48
    %v178 = vld [vmem:[%s177] sm:$0xff]
    %v179 = vld [vmem:[%s177 + $0x8] sm:$0xff]
    %v180 = vld [vmem:[%s177 + $0x10] sm:$0xff]
    %v181 = vld [vmem:[%s177 + $0x18] sm:$0xff]
    %v182 = vld [vmem:[%s177 + $0x20] sm:$0x3]
    %v183 = vld [vmem:[%s177 + $0x28] sm:$0x3]
    %184 = vmatprep.subr.mxu0 0.0
    %185 = vmatpush1.msra.mxu0 %v45
    %186 = vmatprep.subr.mxu0 0.0
    %187 = vmatpush1.msra.mxu0 %v46
    %188 = vmatprep.subr.mxu0 0.0
    %189 = vmatpush1.msra.mxu0 %v47
    %190 = vmatprep.subr.mxu0 0.0
    %191 = vmatpush1.msra.mxu0 %v48
    %192 = vmatprep.subr.mxu0 0.0
    %193 = vmatpush1.msra.mxu0 %v49
    %194 = vmatprep.subr.mxu0 0.0
    %195 = vmatpush1.msra.mxu0 %v50
    %196 = vmatprep.subr.mxu0 0.0
    %197 = vmatpush1.msra.mxu0 %v51
    %198 = vmatprep.subr.mxu0 0.0
    %199 = vmatpush1.msra.mxu0 %v52
    %200 = vmatprep.subr.mxu0 0.0
    %201 = vmatpush1.msra.mxu0 %v53
    %202 = vmatprep.subr.mxu0 0.0
    %203 = vmatpush1.msra.mxu0 %v54
    %204 = vmatprep.subr.mxu0 0.0
    %205 = vmatpush1.msra.mxu0 %v55
    %206 = vmatprep.subr.mxu0 0.0
    %207 = vmatpush1.msra.mxu0 %v56
    %208 = vmatprep.subr.mxu0 0.0
    %209 = vmatpush1.msra.mxu0 %v57
    %210 = vmatprep.subr.mxu0 0.0
    %211 = vmatpush1.msra.mxu0 %v58
    %212 = vmatprep.subr.mxu0 0.0
    %213 = vmatpush1.msra.mxu0 %v59
    %214 = vmatprep.subr.mxu0 0.0
    %215 = vmatpush1.msra.mxu0 %v60
    %216 = vmatprep.subr.mxu0 0.0
    %217 = vmatpush1.msra.mxu0 %v61
    %218 = vmatprep.subr.mxu0 0.0
    %219 = vmatpush1.msra.mxu0 %v62
    %220 = vmatprep.subr.mxu0 0.0
    %221 = vmatpush1.msra.mxu0 %v63
    %222 = vmatprep.subr.mxu0 0.0
    %223 = vmatpush1.msra.mxu0 %v64
    %224 = vmatprep.subr.mxu0 0.0
    %225 = vmatpush1.msra.mxu0 %v65
    %226 = vmatprep.subr.mxu0 0.0
    %227 = vmatpush1.msra.mxu0 %v66
    %228 = vmatprep.subr.mxu0 0.0
    %229 = vmatpush1.msra.mxu0 %v67
    %230 = vmatprep.subr.mxu0 0.0
    %231 = vmatpush1.msra.mxu0 %v68
    %232 = vmatprep.subr.mxu0 0.0
    %233 = vmatpush1.msra.mxu0 %v69
    %234 = vmatprep.subr.mxu0 0.0
    %235 = vmatpush1.msra.mxu0 %v70
    %236 = vmatprep.subr.mxu0 0.0
    %237 = vmatpush1.msra.mxu0 %v71
    %238 = vmatprep.subr.mxu0 0.0
    %239 = vmatpush1.msra.mxu0 %v72
    %240 = vmatprep.subr.mxu0 0.0
    %241 = vmatpush1.msra.mxu0 %v73
    %242 = vmatprep.subr.mxu0 0.0
    %243 = vmatpush1.msra.mxu0 %v74
    %244 = vmatprep.subr.mxu0 0.0
    %245 = vmatpush1.msra.mxu0 %v75
    %246 = vmatprep.subr.mxu0 0.0
    %247 = vmatpush1.msra.mxu0 %v76
    %248 = vmatprep.mubr.f32.mxu0 %v179
    %249 = vmatmul.mubr.f32.gmra.mrb[0].mxu0 %v178
    %v250 = vpop.f32.mrb[0].mxu0
    %v251 = vadd.f32 %v88, %v250
    %v252 = vpop.f32.mrb[0].mxu0
    %253 = vmatprep.mubr.f32.mxu0 %v181
    %254 = vmatmul.mubr.f32.gmra.mrb[0].mxu0 %v180
    %v255 = vpop.f32.mrb[0].mxu0
    %v256 = vadd.f32 %v88, %v255
    %v257 = vpop.f32.mrb[0].mxu0
    %258 = vmatprep.mubr.f32.mxu0 %v183
    %259 = vmatmul.mubr.f32.gmra.mrb[0].mxu0 %v182
    %v260 = vpop.f32.mrb[0].mxu0
    %v261 = vadd.f32 %v88, %v260
    %v262 = vpop.f32.mrb[0].mxu0
    %263 = vdwg.mxu0
    %v264 = vmax.f32 %v251, 0.0
    %v265 = vmax.f32 %v256, 0.0
    %v266 = vmax.f32 %v261, 0.0
    %s267 = scalar_lea.vmem %s3, 32
    %v268 = vld [vmem:[%s267] sm:$0xff]
    %v269 = vld [vmem:[%s267 + $0x8] sm:$0xff]
    %v270 = vld [vmem:[%s267 + $0x10] sm:$0xff]
    %v271 = vld [vmem:[%s267 + $0x18] sm:$0xff]
    %vm272 = vcmask 261120
    %v274 = vsel %vm272, %v264, 0
    %v277 = vsel %vm272, %v265, 0
    %v280 = vsel %vm272, %v266, 0
    %282 = vmatprep.subr.mxu0 0.0
    %283 = vmatpush1.msra.mxu0 %v268
    %284 = vmatprep.subr.mxu0 0.0
    %285 = vmatpush1.msra.mxu0 %v269
    %286 = vmatprep.subr.mxu0 0.0
    %287 = vmatpush1.msra.mxu0 %v270
    %288 = vmatprep.subr.mxu0 0.0
    %289 = vmatpush1.msra.mxu0 %v271
    %290 = vmatprep.subr.mxu0 0.0
    %291 = vmatpush1.msra.mxu0 0.0
    %292 = vmatprep.subr.mxu0 0.0
    %293 = vmatpush1.msra.mxu0 0.0
    %294 = vmatprep.subr.mxu0 0.0
    %295 = vmatpush1.msra.mxu0 0.0
    %296 = vmatprep.subr.mxu0 0.0
    %297 = vmatpush1.msra.mxu0 0.0
    %298 = vmatprep.subr.mxu0 0.0
    %299 = vmatpush1.msra.mxu0 0.0
    %300 = vmatprep.subr.mxu0 0.0
    %301 = vmatpush1.msra.mxu0 0.0
    %302 = vmatprep.subr.mxu0 0.0
    %303 = vmatpush1.msra.mxu0 0.0
    %304 = vmatprep.subr.mxu0 0.0
    %305 = vmatpush1.msra.mxu0 0.0
    %306 = vmatprep.subr.mxu0 0.0
    %307 = vmatpush1.msra.mxu0 0.0
    %308 = vmatprep.subr.mxu0 0.0
    %309 = vmatpush1.msra.mxu0 0.0
    %310 = vmatprep.subr.mxu0 0.0
    %311 = vmatpush1.msra.mxu0 0.0
    %312 = vmatprep.subr.mxu0 0.0
    %313 = vmatpush1.msra.mxu0 0.0
    %314 = vmatprep.subr.mxu0 0.0
    %315 = vmatpush1.msra.mxu0 0.0
    %316 = vmatprep.subr.mxu0 0.0
    %317 = vmatpush1.msra.mxu0 0.0
    %318 = vmatprep.subr.mxu0 0.0
    %319 = vmatpush1.msra.mxu0 0.0
    %320 = vmatprep.subr.mxu0 0.0
    %321 = vmatpush1.msra.mxu0 0.0
    %322 = vmatprep.subr.mxu0 0.0
    %323 = vmatpush1.msra.mxu0 0.0
    %324 = vmatprep.subr.mxu0 0.0
    %325 = vmatpush1.msra.mxu0 0.0
    %326 = vmatprep.subr.mxu0 0.0
    %327 = vmatpush1.msra.mxu0 0.0
    %328 = vmatprep.subr.mxu0 0.0
    %329 = vmatpush1.msra.mxu0 0.0
    %330 = vmatprep.subr.mxu0 0.0
    %331 = vmatpush1.msra.mxu0 0.0
    %332 = vmatprep.subr.mxu0 0.0
    %333 = vmatpush1.msra.mxu0 0.0
    %334 = vmatprep.subr.mxu0 0.0
    %335 = vmatpush1.msra.mxu0 0.0
    %336 = vmatprep.subr.mxu0 0.0
    %337 = vmatpush1.msra.mxu0 0.0
    %338 = vmatprep.subr.mxu0 0.0
    %339 = vmatpush1.msra.mxu0 0.0
    %340 = vmatprep.subr.mxu0 0.0
    %341 = vmatpush1.msra.mxu0 0.0
    %342 = vmatprep.subr.mxu0 0.0
    %343 = vmatpush1.msra.mxu0 0.0
    %344 = vmatprep.subr.mxu0 0.0
    %345 = vmatpush1.msra.mxu0 0.0
    %346 = vmatprep.mubr.f32.mxu0 0.0
    %347 = vmatmul.mubr.f32.gmra.mrb[0].mxu0 %v274
    %v348 = vpop.f32.mrb[0].mxu0
    %v349 = vadd.f32 0.0, %v348
    %v350 = vpop.f32.mrb[0].mxu0
    %351 = vmatprep.mubr.f32.mxu0 0.0
    %352 = vmatmul.mubr.f32.gmra.mrb[0].mxu0 %v277
    %v353 = vpop.f32.mrb[0].mxu0
    %v354 = vadd.f32 0.0, %v353
    %v355 = vpop.f32.mrb[0].mxu0
    %356 = vmatprep.mubr.f32.mxu0 0.0
    %357 = vmatmul.mubr.f32.gmra.mrb[0].mxu0 %v280
    %v358 = vpop.f32.mrb[0].mxu0
    %v359 = vadd.f32 0.0, %v358
    %v360 = vpop.f32.mrb[0].mxu0
    %361 = vdwg.mxu0
    %v363 = vsel %vm272, %v170, 0
    %v366 = vsel %vm272, %v171, 0
    %v369 = vsel %vm272, %v172, 0
    %371 = vmatprep.subr.mxu0 0.0
    %372 = vmatpush1.msra.mxu0 %v173
    %373 = vmatprep.subr.mxu0 0.0
    %374 = vmatpush1.msra.mxu0 %v174
    %375 = vmatprep.subr.mxu0 0.0
    %376 = vmatpush1.msra.mxu0 %v175
    %377 = vmatprep.subr.mxu0 0.0
    %378 = vmatpush1.msra.mxu0 %v176
    %379 = vmatprep.subr.mxu0 0.0
    %380 = vmatpush1.msra.mxu0 0.0
    %381 = vmatprep.subr.mxu0 0.0
    %382 = vmatpush1.msra.mxu0 0.0
    %383 = vmatprep.subr.mxu0 0.0
    %384 = vmatpush1.msra.mxu0 0.0
    %385 = vmatprep.subr.mxu0 0.0
    %386 = vmatpush1.msra.mxu0 0.0
    %387 = vmatprep.subr.mxu0 0.0
    %388 = vmatpush1.msra.mxu0 0.0
    %389 = vmatprep.subr.mxu0 0.0
    %390 = vmatpush1.msra.mxu0 0.0
    %391 = vmatprep.subr.mxu0 0.0
    %392 = vmatpush1.msra.mxu0 0.0
    %393 = vmatprep.subr.mxu0 0.0
    %394 = vmatpush1.msra.mxu0 0.0
    %395 = vmatprep.subr.mxu0 0.0
    %396 = vmatpush1.msra.mxu0 0.0
    %397 = vmatprep.subr.mxu0 0.0
    %398 = vmatpush1.msra.mxu0 0.0
    %399 = vmatprep.subr.mxu0 0.0
    %400 = vmatpush1.msra.mxu0 0.0
    %401 = vmatprep.subr.mxu0 0.0
    %402 = vmatpush1.msra.mxu0 0.0
    %403 = vmatprep.subr.mxu0 0.0
    %404 = vmatpush1.msra.mxu0 0.0
    %405 = vmatprep.subr.mxu0 0.0
    %406 = vmatpush1.msra.mxu0 0.0
    %407 = vmatprep.subr.mxu0 0.0
    %408 = vmatpush1.msra.mxu0 0.0
    %409 = vmatprep.subr.mxu0 0.0
    %410 = vmatpush1.msra.mxu0 0.0
    %411 = vmatprep.subr.mxu0 0.0
    %412 = vmatpush1.msra.mxu0 0.0
    %413 = vmatprep.subr.mxu0 0.0
    %414 = vmatpush1.msra.mxu0 0.0
    %415 = vmatprep.subr.mxu0 0.0
    %416 = vmatpush1.msra.mxu0 0.0
    %417 = vmatprep.subr.mxu0 0.0
    %418 = vmatpush1.msra.mxu0 0.0
    %419 = vmatprep.subr.mxu0 0.0
    %420 = vmatpush1.msra.mxu0 0.0
    %421 = vmatprep.subr.mxu0 0.0
    %422 = vmatpush1.msra.mxu0 0.0
    %423 = vmatprep.subr.mxu0 0.0
    %424 = vmatpush1.msra.mxu0 0.0
    %425 = vmatprep.subr.mxu0 0.0
    %426 = vmatpush1.msra.mxu0 0.0
    %427 = vmatprep.subr.mxu0 0.0
    %428 = vmatpush1.msra.mxu0 0.0
    %429 = vmatprep.subr.mxu0 0.0
    %430 = vmatpush1.msra.mxu0 0.0
    %431 = vmatprep.subr.mxu0 0.0
    %432 = vmatpush1.msra.mxu0 0.0
    %433 = vmatprep.subr.mxu0 0.0
    %434 = vmatpush1.msra.mxu0 0.0
    %435 = vmatprep.mubr.f32.mxu0 0.0
    %436 = vmatmul.mubr.f32.gmra.mrb[0].mxu0 %v363
    %v437 = vpop.f32.mrb[0].mxu0
    %v438 = vadd.f32 %v349, %v437
    %v439 = vpop.f32.mrb[0].mxu0
    %440 = vmatprep.mubr.f32.mxu0 0.0
    %441 = vmatmul.mubr.f32.gmra.mrb[0].mxu0 %v366
    %v442 = vpop.f32.mrb[0].mxu0
    %v443 = vadd.f32 %v354, %v442
    %v444 = vpop.f32.mrb[0].mxu0
    %445 = vmatprep.mubr.f32.mxu0 0.0
    %446 = vmatmul.mubr.f32.gmra.mrb[0].mxu0 %v369
    %v447 = vpop.f32.mrb[0].mxu0
    %v448 = vadd.f32 %v359, %v447
    %v449 = vpop.f32.mrb[0].mxu0
    %450 = vdwg.mxu0
    %s451 = scalar_lea.vmem %s0, 96
    %v452 = vld [vmem:[%s451] sm:$0xff]
    %v453 = vld [vmem:[%s451 + $0x8] sm:$0xff]
    %v454 = vld [vmem:[%s451 + $0x10] sm:$0xff]
    %v455 = vld [vmem:[%s451 + $0x18] sm:$0xff]
    %v456 = vld [vmem:[%s451 + $0x20] sm:$0x3]
    %v457 = vld [vmem:[%s451 + $0x28] sm:$0x3]
    %458 = vmatprep.subr.mxu0 0.0
    %459 = vmatpush1.msra.mxu0 %v45
    %460 = vmatprep.subr.mxu0 0.0
    %461 = vmatpush1.msra.mxu0 %v46
    %462 = vmatprep.subr.mxu0 0.0
    %463 = vmatpush1.msra.mxu0 %v47
    %464 = vmatprep.subr.mxu0 0.0
    %465 = vmatpush1.msra.mxu0 %v48
    %466 = vmatprep.subr.mxu0 0.0
    %467 = vmatpush1.msra.mxu0 %v49
    %468 = vmatprep.subr.mxu0 0.0
    %469 = vmatpush1.msra.mxu0 %v50
    %470 = vmatprep.subr.mxu0 0.0
    %471 = vmatpush1.msra.mxu0 %v51
    %472 = vmatprep.subr.mxu0 0.0
    %473 = vmatpush1.msra.mxu0 %v52
    %474 = vmatprep.subr.mxu0 0.0
    %475 = vmatpush1.msra.mxu0 %v53
    %476 = vmatprep.subr.mxu0 0.0
    %477 = vmatpush1.msra.mxu0 %v54
    %478 = vmatprep.subr.mxu0 0.0
    %479 = vmatpush1.msra.mxu0 %v55
    %480 = vmatprep.subr.mxu0 0.0
    %481 = vmatpush1.msra.mxu0 %v56
    %482 = vmatprep.subr.mxu0 0.0
    %483 = vmatpush1.msra.mxu0 %v57
    %484 = vmatprep.subr.mxu0 0.0
    %485 = vmatpush1.msra.mxu0 %v58
    %486 = vmatprep.subr.mxu0 0.0
    %487 = vmatpush1.msra.mxu0 %v59
    %488 = vmatprep.subr.mxu0 0.0
    %489 = vmatpush1.msra.mxu0 %v60
    %490 = vmatprep.subr.mxu0 0.0
    %491 = vmatpush1.msra.mxu0 %v61
    %492 = vmatprep.subr.mxu0 0.0
    %493 = vmatpush1.msra.mxu0 %v62
    %494 = vmatprep.subr.mxu0 0.0
    %495 = vmatpush1.msra.mxu0 %v63
    %496 = vmatprep.subr.mxu0 0.0
    %497 = vmatpush1.msra.mxu0 %v64
    %498 = vmatprep.subr.mxu0 0.0
    %499 = vmatpush1.msra.mxu0 %v65
    %500 = vmatprep.subr.mxu0 0.0
    %501 = vmatpush1.msra.mxu0 %v66
    %502 = vmatprep.subr.mxu0 0.0
    %503 = vmatpush1.msra.mxu0 %v67
    %504 = vmatprep.subr.mxu0 0.0
    %505 = vmatpush1.msra.mxu0 %v68
    %506 = vmatprep.subr.mxu0 0.0
    %507 = vmatpush1.msra.mxu0 %v69
    %508 = vmatprep.subr.mxu0 0.0
    %509 = vmatpush1.msra.mxu0 %v70
    %510 = vmatprep.subr.mxu0 0.0
    %511 = vmatpush1.msra.mxu0 %v71
    %512 = vmatprep.subr.mxu0 0.0
    %513 = vmatpush1.msra.mxu0 %v72
    %514 = vmatprep.subr.mxu0 0.0
    %515 = vmatpush1.msra.mxu0 %v73
    %516 = vmatprep.subr.mxu0 0.0
    %517 = vmatpush1.msra.mxu0 %v74
    %518 = vmatprep.subr.mxu0 0.0
    %519 = vmatpush1.msra.mxu0 %v75
    %520 = vmatprep.subr.mxu0 0.0
    %521 = vmatpush1.msra.mxu0 %v76
    %522 = vmatprep.mubr.f32.mxu0 %v453
    %523 = vmatmul.mubr.f32.gmra.mrb[0].mxu0 %v452
    %v524 = vpop.f32.mrb[0].mxu0
    %v525 = vadd.f32 %v88, %v524
    %v526 = vpop.f32.mrb[0].mxu0
    %527 = vmatprep.mubr.f32.mxu0 %v455
    %528 = vmatmul.mubr.f32.gmra.mrb[0].mxu0 %v454
    %v529 = vpop.f32.mrb[0].mxu0
    %v530 = vadd.f32 %v88, %v529
    %v531 = vpop.f32.mrb[0].mxu0
    %532 = vmatprep.mubr.f32.mxu0 %v457
    %533 = vmatmul.mubr.f32.gmra.mrb[0].mxu0 %v456
    %v534 = vpop.f32.mrb[0].mxu0
    %v535 = vadd.f32 %v88, %v534
    %v536 = vpop.f32.mrb[0].mxu0
    %537 = vdwg.mxu0
    %v538 = vmax.f32 %v525, 0.0
    %v539 = vmax.f32 %v530, 0.0
    %v540 = vmax.f32 %v535, 0.0
    %s541 = scalar_lea.vmem %s3, 64
    %v542 = vld [vmem:[%s541] sm:$0xff]
    %v543 = vld [vmem:[%s541 + $0x8] sm:$0xff]
    %v544 = vld [vmem:[%s541 + $0x10] sm:$0xff]
    %v545 = vld [vmem:[%s541 + $0x18] sm:$0xff]
    %v547 = vsel %vm272, %v538, 0
    %v550 = vsel %vm272, %v539, 0
    %v553 = vsel %vm272, %v540, 0
    %555 = vmatprep.subr.mxu0 0.0
    %556 = vmatpush1.msra.mxu0 %v542
    %557 = vmatprep.subr.mxu0 0.0
    %558 = vmatpush1.msra.mxu0 %v543
    %559 = vmatprep.subr.mxu0 0.0
    %560 = vmatpush1.msra.mxu0 %v544
    %561 = vmatprep.subr.mxu0 0.0
    %562 = vmatpush1.msra.mxu0 %v545
    %563 = vmatprep.subr.mxu0 0.0
    %564 = vmatpush1.msra.mxu0 0.0
    %565 = vmatprep.subr.mxu0 0.0
    %566 = vmatpush1.msra.mxu0 0.0
    %567 = vmatprep.subr.mxu0 0.0
    %568 = vmatpush1.msra.mxu0 0.0
    %569 = vmatprep.subr.mxu0 0.0
    %570 = vmatpush1.msra.mxu0 0.0
    %571 = vmatprep.subr.mxu0 0.0
    %572 = vmatpush1.msra.mxu0 0.0
    %573 = vmatprep.subr.mxu0 0.0
    %574 = vmatpush1.msra.mxu0 0.0
    %575 = vmatprep.subr.mxu0 0.0
    %576 = vmatpush1.msra.mxu0 0.0
    %577 = vmatprep.subr.mxu0 0.0
    %578 = vmatpush1.msra.mxu0 0.0
    %579 = vmatprep.subr.mxu0 0.0
    %580 = vmatpush1.msra.mxu0 0.0
    %581 = vmatprep.subr.mxu0 0.0
    %582 = vmatpush1.msra.mxu0 0.0
    %583 = vmatprep.subr.mxu0 0.0
    %584 = vmatpush1.msra.mxu0 0.0
    %585 = vmatprep.subr.mxu0 0.0
    %586 = vmatpush1.msra.mxu0 0.0
    %587 = vmatprep.subr.mxu0 0.0
    %588 = vmatpush1.msra.mxu0 0.0
    %589 = vmatprep.subr.mxu0 0.0
    %590 = vmatpush1.msra.mxu0 0.0
    %591 = vmatprep.subr.mxu0 0.0
    %592 = vmatpush1.msra.mxu0 0.0
    %593 = vmatprep.subr.mxu0 0.0
    %594 = vmatpush1.msra.mxu0 0.0
    %595 = vmatprep.subr.mxu0 0.0
    %596 = vmatpush1.msra.mxu0 0.0
    %597 = vmatprep.subr.mxu0 0.0
    %598 = vmatpush1.msra.mxu0 0.0
    %599 = vmatprep.subr.mxu0 0.0
    %600 = vmatpush1.msra.mxu0 0.0
    %601 = vmatprep.subr.mxu0 0.0
    %602 = vmatpush1.msra.mxu0 0.0
    %603 = vmatprep.subr.mxu0 0.0
    %604 = vmatpush1.msra.mxu0 0.0
    %605 = vmatprep.subr.mxu0 0.0
    %606 = vmatpush1.msra.mxu0 0.0
    %607 = vmatprep.subr.mxu0 0.0
    %608 = vmatpush1.msra.mxu0 0.0
    %609 = vmatprep.subr.mxu0 0.0
    %610 = vmatpush1.msra.mxu0 0.0
    %611 = vmatprep.subr.mxu0 0.0
    %612 = vmatpush1.msra.mxu0 0.0
    %613 = vmatprep.subr.mxu0 0.0
    %614 = vmatpush1.msra.mxu0 0.0
    %615 = vmatprep.subr.mxu0 0.0
    %616 = vmatpush1.msra.mxu0 0.0
    %617 = vmatprep.subr.mxu0 0.0
    %618 = vmatpush1.msra.mxu0 0.0
    %619 = vmatprep.mubr.f32.mxu0 0.0
    %620 = vmatmul.mubr.f32.gmra.mrb[0].mxu0 %v547
    %v621 = vpop.f32.mrb[0].mxu0
    %v622 = vadd.f32 0.0, %v621
    %v623 = vpop.f32.mrb[0].mxu0
    %624 = vmatprep.mubr.f32.mxu0 0.0
    %625 = vmatmul.mubr.f32.gmra.mrb[0].mxu0 %v550
    %v626 = vpop.f32.mrb[0].mxu0
    %v627 = vadd.f32 0.0, %v626
    %v628 = vpop.f32.mrb[0].mxu0
    %629 = vmatprep.mubr.f32.mxu0 0.0
    %630 = vmatmul.mubr.f32.gmra.mrb[0].mxu0 %v553
    %v631 = vpop.f32.mrb[0].mxu0
    %v632 = vadd.f32 0.0, %v631
    %v633 = vpop.f32.mrb[0].mxu0
    %634 = vdwg.mxu0
    %v635 = vadd.f32 %v438, %v622
    %v636 = vadd.f32 %v443, %v627
    %v637 = vadd.f32 %v448, %v632
    %s638 = scalar_lea.vmem %s0, 144
    %v639 = vld [vmem:[%s638] sm:$0xff]
    %v640 = vld [vmem:[%s638 + $0x8] sm:$0xff]
    %v641 = vld [vmem:[%s638 + $0x10] sm:$0xff]
    %v642 = vld [vmem:[%s638 + $0x18] sm:$0xff]
    %v643 = vld [vmem:[%s638 + $0x20] sm:$0x3]
    %v644 = vld [vmem:[%s638 + $0x28] sm:$0x3]
    %645 = vmatprep.subr.mxu0 0.0
    %646 = vmatpush1.msra.mxu0 %v45
    %647 = vmatprep.subr.mxu0 0.0
    %648 = vmatpush1.msra.mxu0 %v46
    %649 = vmatprep.subr.mxu0 0.0
    %650 = vmatpush1.msra.mxu0 %v47
    %651 = vmatprep.subr.mxu0 0.0
    %652 = vmatpush1.msra.mxu0 %v48
    %653 = vmatprep.subr.mxu0 0.0
    %654 = vmatpush1.msra.mxu0 %v49
    %655 = vmatprep.subr.mxu0 0.0
    %656 = vmatpush1.msra.mxu0 %v50
    %657 = vmatprep.subr.mxu0 0.0
    %658 = vmatpush1.msra.mxu0 %v51
    %659 = vmatprep.subr.mxu0 0.0
    %660 = vmatpush1.msra.mxu0 %v52
    %661 = vmatprep.subr.mxu0 0.0
    %662 = vmatpush1.msra.mxu0 %v53
    %663 = vmatprep.subr.mxu0 0.0
    %664 = vmatpush1.msra.mxu0 %v54
    %665 = vmatprep.subr.mxu0 0.0
    %666 = vmatpush1.msra.mxu0 %v55
    %667 = vmatprep.subr.mxu0 0.0
    %668 = vmatpush1.msra.mxu0 %v56
    %669 = vmatprep.subr.mxu0 0.0
    %670 = vmatpush1.msra.mxu0 %v57
    %671 = vmatprep.subr.mxu0 0.0
    %672 = vmatpush1.msra.mxu0 %v58
    %673 = vmatprep.subr.mxu0 0.0
    %674 = vmatpush1.msra.mxu0 %v59
    %675 = vmatprep.subr.mxu0 0.0
    %676 = vmatpush1.msra.mxu0 %v60
    %677 = vmatprep.subr.mxu0 0.0
    %678 = vmatpush1.msra.mxu0 %v61
    %679 = vmatprep.subr.mxu0 0.0
    %680 = vmatpush1.msra.mxu0 %v62
    %681 = vmatprep.subr.mxu0 0.0
    %682 = vmatpush1.msra.mxu0 %v63
    %683 = vmatprep.subr.mxu0 0.0
    %684 = vmatpush1.msra.mxu0 %v64
    %685 = vmatprep.subr.mxu0 0.0
    %686 = vmatpush1.msra.mxu0 %v65
    %687 = vmatprep.subr.mxu0 0.0
    %688 = vmatpush1.msra.mxu0 %v66
    %689 = vmatprep.subr.mxu0 0.0
    %690 = vmatpush1.msra.mxu0 %v67
    %691 = vmatprep.subr.mxu0 0.0
    %692 = vmatpush1.msra.mxu0 %v68
    %693 = vmatprep.subr.mxu0 0.0
    %694 = vmatpush1.msra.mxu0 %v69
    %695 = vmatprep.subr.mxu0 0.0
    %696 = vmatpush1.msra.mxu0 %v70
    %697 = vmatprep.subr.mxu0 0.0
    %698 = vmatpush1.msra.mxu0 %v71
    %699 = vmatprep.subr.mxu0 0.0
    %700 = vmatpush1.msra.mxu0 %v72
    %701 = vmatprep.subr.mxu0 0.0
    %702 = vmatpush1.msra.mxu0 %v73
    %703 = vmatprep.subr.mxu0 0.0
    %704 = vmatpush1.msra.mxu0 %v74
    %705 = vmatprep.subr.mxu0 0.0
    %706 = vmatpush1.msra.mxu0 %v75
    %707 = vmatprep.subr.mxu0 0.0
    %708 = vmatpush1.msra.mxu0 %v76
    %709 = vmatprep.mubr.f32.mxu0 %v640
    %710 = vmatmul.mubr.f32.gmra.mrb[0].mxu0 %v639
    %v711 = vpop.f32.mrb[0].mxu0
    %v712 = vadd.f32 %v88, %v711
    %v713 = vpop.f32.mrb[0].mxu0
    %714 = vmatprep.mubr.f32.mxu0 %v642
    %715 = vmatmul.mubr.f32.gmra.mrb[0].mxu0 %v641
    %v716 = vpop.f32.mrb[0].mxu0
    %v717 = vadd.f32 %v88, %v716
    %v718 = vpop.f32.mrb[0].mxu0
    %719 = vmatprep.mubr.f32.mxu0 %v644
    %720 = vmatmul.mubr.f32.gmra.mrb[0].mxu0 %v643
    %v721 = vpop.f32.mrb[0].mxu0
    %v722 = vadd.f32 %v88, %v721
    %v723 = vpop.f32.mrb[0].mxu0
    %724 = vdwg.mxu0
    %v725 = vmax.f32 %v712, 0.0
    %v726 = vmax.f32 %v717, 0.0
    %v727 = vmax.f32 %v722, 0.0
    %s728 = scalar_lea.vmem %s3, 96
    %v729 = vld [vmem:[%s728] sm:$0xff]
    %v730 = vld [vmem:[%s728 + $0x8] sm:$0xff]
    %v731 = vld [vmem:[%s728 + $0x10] sm:$0xff]
    %v732 = vld [vmem:[%s728 + $0x18] sm:$0xff]
    %v734 = vsel %vm272, %v725, 0
    %v737 = vsel %vm272, %v726, 0
    %v740 = vsel %vm272, %v727, 0
    %742 = vmatprep.subr.mxu0 0.0
    %743 = vmatpush1.msra.mxu0 %v729
    %744 = vmatprep.subr.mxu0 0.0
    %745 = vmatpush1.msra.mxu0 %v730
    %746 = vmatprep.subr.mxu0 0.0
    %747 = vmatpush1.msra.mxu0 %v731
    %748 = vmatprep.subr.mxu0 0.0
    %749 = vmatpush1.msra.mxu0 %v732
    %750 = vmatprep.subr.mxu0 0.0
    %751 = vmatpush1.msra.mxu0 0.0
    %752 = vmatprep.subr.mxu0 0.0
    %753 = vmatpush1.msra.mxu0 0.0
    %754 = vmatprep.subr.mxu0 0.0
    %755 = vmatpush1.msra.mxu0 0.0
    %756 = vmatprep.subr.mxu0 0.0
    %757 = vmatpush1.msra.mxu0 0.0
    %758 = vmatprep.subr.mxu0 0.0
    %759 = vmatpush1.msra.mxu0 0.0
    %760 = vmatprep.subr.mxu0 0.0
    %761 = vmatpush1.msra.mxu0 0.0
    %762 = vmatprep.subr.mxu0 0.0
    %763 = vmatpush1.msra.mxu0 0.0
    %764 = vmatprep.subr.mxu0 0.0
    %765 = vmatpush1.msra.mxu0 0.0
    %766 = vmatprep.subr.mxu0 0.0
    %767 = vmatpush1.msra.mxu0 0.0
    %768 = vmatprep.subr.mxu0 0.0
    %769 = vmatpush1.msra.mxu0 0.0
    %770 = vmatprep.subr.mxu0 0.0
    %771 = vmatpush1.msra.mxu0 0.0
    %772 = vmatprep.subr.mxu0 0.0
    %773 = vmatpush1.msra.mxu0 0.0
    %774 = vmatprep.subr.mxu0 0.0
    %775 = vmatpush1.msra.mxu0 0.0
    %776 = vmatprep.subr.mxu0 0.0
    %777 = vmatpush1.msra.mxu0 0.0
    %778 = vmatprep.subr.mxu0 0.0
    %779 = vmatpush1.msra.mxu0 0.0
    %780 = vmatprep.subr.mxu0 0.0
    %781 = vmatpush1.msra.mxu0 0.0
    %782 = vmatprep.subr.mxu0 0.0
    %783 = vmatpush1.msra.mxu0 0.0
    %784 = vmatprep.subr.mxu0 0.0
    %785 = vmatpush1.msra.mxu0 0.0
    %786 = vmatprep.subr.mxu0 0.0
    %787 = vmatpush1.msra.mxu0 0.0
    %788 = vmatprep.subr.mxu0 0.0
    %789 = vmatpush1.msra.mxu0 0.0
    %790 = vmatprep.subr.mxu0 0.0
    %791 = vmatpush1.msra.mxu0 0.0
    %792 = vmatprep.subr.mxu0 0.0
    %793 = vmatpush1.msra.mxu0 0.0
    %794 = vmatprep.subr.mxu0 0.0
    %795 = vmatpush1.msra.mxu0 0.0
    %796 = vmatprep.subr.mxu0 0.0
    %797 = vmatpush1.msra.mxu0 0.0
    %798 = vmatprep.subr.mxu0 0.0
    %799 = vmatpush1.msra.mxu0 0.0
    %800 = vmatprep.subr.mxu0 0.0
    %801 = vmatpush1.msra.mxu0 0.0
    %802 = vmatprep.subr.mxu0 0.0
    %803 = vmatpush1.msra.mxu0 0.0
    %804 = vmatprep.subr.mxu0 0.0
    %805 = vmatpush1.msra.mxu0 0.0
    %806 = vmatprep.mubr.f32.mxu0 0.0
    %807 = vmatmul.mubr.f32.gmra.mrb[0].mxu0 %v734
    %v808 = vpop.f32.mrb[0].mxu0
    %v809 = vadd.f32 0.0, %v808
    %v810 = vpop.f32.mrb[0].mxu0
    %811 = vmatprep.mubr.f32.mxu0 0.0
    %812 = vmatmul.mubr.f32.gmra.mrb[0].mxu0 %v737
    %v813 = vpop.f32.mrb[0].mxu0
    %v814 = vadd.f32 0.0, %v813
    %v815 = vpop.f32.mrb[0].mxu0
    %816 = vmatprep.mubr.f32.mxu0 0.0
    %817 = vmatmul.mubr.f32.gmra.mrb[0].mxu0 %v740
    %v818 = vpop.f32.mrb[0].mxu0
    %v819 = vadd.f32 0.0, %v818
    %v820 = vpop.f32.mrb[0].mxu0
    %821 = vdwg.mxu0
    %v822 = vadd.f32 %v635, %v809
    %v823 = vadd.f32 %v636, %v814
    %v824 = vadd.f32 %v637, %v819
    %s825 = scalar_lea.vmem %s0, 192
    %v826 = vld [vmem:[%s825] sm:$0xff]
    %v827 = vld [vmem:[%s825 + $0x8] sm:$0xff]
    %v828 = vld [vmem:[%s825 + $0x10] sm:$0xff]
    %v829 = vld [vmem:[%s825 + $0x18] sm:$0xff]
    %v830 = vld [vmem:[%s825 + $0x20] sm:$0x3]
    %v831 = vld [vmem:[%s825 + $0x28] sm:$0x3]
    %832 = vmatprep.subr.mxu0 0.0
    %833 = vmatpush1.msra.mxu0 %v45
    %834 = vmatprep.subr.mxu0 0.0
    %835 = vmatpush1.msra.mxu0 %v46
    %836 = vmatprep.subr.mxu0 0.0
    %837 = vmatpush1.msra.mxu0 %v47
    %838 = vmatprep.subr.mxu0 0.0
    %839 = vmatpush1.msra.mxu0 %v48
    %840 = vmatprep.subr.mxu0 0.0
    %841 = vmatpush1.msra.mxu0 %v49
    %842 = vmatprep.subr.mxu0 0.0
    %843 = vmatpush1.msra.mxu0 %v50
    %844 = vmatprep.subr.mxu0 0.0
    %845 = vmatpush1.msra.mxu0 %v51
    %846 = vmatprep.subr.mxu0 0.0
    %847 = vmatpush1.msra.mxu0 %v52
    %848 = vmatprep.subr.mxu0 0.0
    %849 = vmatpush1.msra.mxu0 %v53
    %850 = vmatprep.subr.mxu0 0.0
    %851 = vmatpush1.msra.mxu0 %v54
    %852 = vmatprep.subr.mxu0 0.0
    %853 = vmatpush1.msra.mxu0 %v55
    %854 = vmatprep.subr.mxu0 0.0
    %855 = vmatpush1.msra.mxu0 %v56
    %856 = vmatprep.subr.mxu0 0.0
    %857 = vmatpush1.msra.mxu0 %v57
    %858 = vmatprep.subr.mxu0 0.0
    %859 = vmatpush1.msra.mxu0 %v58
    %860 = vmatprep.subr.mxu0 0.0
    %861 = vmatpush1.msra.mxu0 %v59
    %862 = vmatprep.subr.mxu0 0.0
    %863 = vmatpush1.msra.mxu0 %v60
    %864 = vmatprep.subr.mxu0 0.0
    %865 = vmatpush1.msra.mxu0 %v61
    %866 = vmatprep.subr.mxu0 0.0
    %867 = vmatpush1.msra.mxu0 %v62
    %868 = vmatprep.subr.mxu0 0.0
    %869 = vmatpush1.msra.mxu0 %v63
    %870 = vmatprep.subr.mxu0 0.0
    %871 = vmatpush1.msra.mxu0 %v64
    %872 = vmatprep.subr.mxu0 0.0
    %873 = vmatpush1.msra.mxu0 %v65
    %874 = vmatprep.subr.mxu0 0.0
    %875 = vmatpush1.msra.mxu0 %v66
    %876 = vmatprep.subr.mxu0 0.0
    %877 = vmatpush1.msra.mxu0 %v67
    %878 = vmatprep.subr.mxu0 0.0
    %879 = vmatpush1.msra.mxu0 %v68
    %880 = vmatprep.subr.mxu0 0.0
    %881 = vmatpush1.msra.mxu0 %v69
    %882 = vmatprep.subr.mxu0 0.0
    %883 = vmatpush1.msra.mxu0 %v70
    %884 = vmatprep.subr.mxu0 0.0
    %885 = vmatpush1.msra.mxu0 %v71
    %886 = vmatprep.subr.mxu0 0.0
    %887 = vmatpush1.msra.mxu0 %v72
    %888 = vmatprep.subr.mxu0 0.0
    %889 = vmatpush1.msra.mxu0 %v73
    %890 = vmatprep.subr.mxu0 0.0
    %891 = vmatpush1.msra.mxu0 %v74
    %892 = vmatprep.subr.mxu0 0.0
    %893 = vmatpush1.msra.mxu0 %v75
    %894 = vmatprep.subr.mxu0 0.0
    %895 = vmatpush1.msra.mxu0 %v76
    %896 = vmatprep.mubr.f32.mxu0 %v827
    %897 = vmatmul.mubr.f32.gmra.mrb[0].mxu0 %v826
    %v898 = vpop.f32.mrb[0].mxu0
    %v899 = vadd.f32 %v88, %v898
    %v900 = vpop.f32.mrb[0].mxu0
    %901 = vmatprep.mubr.f32.mxu0 %v829
    %902 = vmatmul.mubr.f32.gmra.mrb[0].mxu0 %v828
    %v903 = vpop.f32.mrb[0].mxu0
    %v904 = vadd.f32 %v88, %v903
    %v905 = vpop.f32.mrb[0].mxu0
    %906 = vmatprep.mubr.f32.mxu0 %v831
    %907 = vmatmul.mubr.f32.gmra.mrb[0].mxu0 %v830
    %v908 = vpop.f32.mrb[0].mxu0
    %v909 = vadd.f32 %v88, %v908
    %v910 = vpop.f32.mrb[0].mxu0
    %911 = vdwg.mxu0
    %v912 = vmax.f32 %v899, 0.0
    %v913 = vmax.f32 %v904, 0.0
    %v914 = vmax.f32 %v909, 0.0
    %s915 = scalar_lea.vmem %s3, 128
    %v916 = vld [vmem:[%s915] sm:$0xff]
    %v917 = vld [vmem:[%s915 + $0x8] sm:$0xff]
    %v918 = vld [vmem:[%s915 + $0x10] sm:$0xff]
    %v919 = vld [vmem:[%s915 + $0x18] sm:$0xff]
    %v921 = vsel %vm272, %v912, 0
    %v924 = vsel %vm272, %v913, 0
    %v927 = vsel %vm272, %v914, 0
    %929 = vmatprep.subr.mxu0 0.0
    %930 = vmatpush1.msra.mxu0 %v916
    %931 = vmatprep.subr.mxu0 0.0
    %932 = vmatpush1.msra.mxu0 %v917
    %933 = vmatprep.subr.mxu0 0.0
    %934 = vmatpush1.msra.mxu0 %v918
    %935 = vmatprep.subr.mxu0 0.0
    %936 = vmatpush1.msra.mxu0 %v919
    %937 = vmatprep.subr.mxu0 0.0
    %938 = vmatpush1.msra.mxu0 0.0
    %939 = vmatprep.subr.mxu0 0.0
    %940 = vmatpush1.msra.mxu0 0.0
    %941 = vmatprep.subr.mxu0 0.0
    %942 = vmatpush1.msra.mxu0 0.0
    %943 = vmatprep.subr.mxu0 0.0
    %944 = vmatpush1.msra.mxu0 0.0
    %945 = vmatprep.subr.mxu0 0.0
    %946 = vmatpush1.msra.mxu0 0.0
    %947 = vmatprep.subr.mxu0 0.0
    %948 = vmatpush1.msra.mxu0 0.0
    %949 = vmatprep.subr.mxu0 0.0
    %950 = vmatpush1.msra.mxu0 0.0
    %951 = vmatprep.subr.mxu0 0.0
    %952 = vmatpush1.msra.mxu0 0.0
    %953 = vmatprep.subr.mxu0 0.0
    %954 = vmatpush1.msra.mxu0 0.0
    %955 = vmatprep.subr.mxu0 0.0
    %956 = vmatpush1.msra.mxu0 0.0
    %957 = vmatprep.subr.mxu0 0.0
    %958 = vmatpush1.msra.mxu0 0.0
    %959 = vmatprep.subr.mxu0 0.0
    %960 = vmatpush1.msra.mxu0 0.0
    %961 = vmatprep.subr.mxu0 0.0
    %962 = vmatpush1.msra.mxu0 0.0
    %963 = vmatprep.subr.mxu0 0.0
    %964 = vmatpush1.msra.mxu0 0.0
    %965 = vmatprep.subr.mxu0 0.0
    %966 = vmatpush1.msra.mxu0 0.0
    %967 = vmatprep.subr.mxu0 0.0
    %968 = vmatpush1.msra.mxu0 0.0
    %969 = vmatprep.subr.mxu0 0.0
    %970 = vmatpush1.msra.mxu0 0.0
    %971 = vmatprep.subr.mxu0 0.0
    %972 = vmatpush1.msra.mxu0 0.0
    %973 = vmatprep.subr.mxu0 0.0
    %974 = vmatpush1.msra.mxu0 0.0
    %975 = vmatprep.subr.mxu0 0.0
    %976 = vmatpush1.msra.mxu0 0.0
    %977 = vmatprep.subr.mxu0 0.0
    %978 = vmatpush1.msra.mxu0 0.0
    %979 = vmatprep.subr.mxu0 0.0
    %980 = vmatpush1.msra.mxu0 0.0
    %981 = vmatprep.subr.mxu0 0.0
    %982 = vmatpush1.msra.mxu0 0.0
    %983 = vmatprep.subr.mxu0 0.0
    %984 = vmatpush1.msra.mxu0 0.0
    %985 = vmatprep.subr.mxu0 0.0
    %986 = vmatpush1.msra.mxu0 0.0
    %987 = vmatprep.subr.mxu0 0.0
    %988 = vmatpush1.msra.mxu0 0.0
    %989 = vmatprep.subr.mxu0 0.0
    %990 = vmatpush1.msra.mxu0 0.0
    %991 = vmatprep.subr.mxu0 0.0
    %992 = vmatpush1.msra.mxu0 0.0
    %993 = vmatprep.mubr.f32.mxu0 0.0
    %994 = vmatmul.mubr.f32.gmra.mrb[0].mxu0 %v921
    %v995 = vpop.f32.mrb[0].mxu0
    %v996 = vadd.f32 0.0, %v995
    %v997 = vpop.f32.mrb[0].mxu0
    %998 = vmatprep.mubr.f32.mxu0 0.0
    %999 = vmatmul.mubr.f32.gmra.mrb[0].mxu0 %v924
    %v1000 = vpop.f32.mrb[0].mxu0
    %v1001 = vadd.f32 0.0, %v1000
    %v1002 = vpop.f32.mrb[0].mxu0
    %1003 = vmatprep.mubr.f32.mxu0 0.0
    %1004 = vmatmul.mubr.f32.gmra.mrb[0].mxu0 %v927
    %v1005 = vpop.f32.mrb[0].mxu0
    %v1006 = vadd.f32 0.0, %v1005
    %v1007 = vpop.f32.mrb[0].mxu0
    %1008 = vdwg.mxu0
    %v1009 = vadd.f32 %v822, %v996
    %v1010 = vadd.f32 %v823, %v1001
    %v1011 = vadd.f32 %v824, %v1006
    %s1012 = scalar_lea.vmem %s0, 240
    %v1013 = vld [vmem:[%s1012] sm:$0xff]
    %v1014 = vld [vmem:[%s1012 + $0x8] sm:$0xff]
    %v1015 = vld [vmem:[%s1012 + $0x10] sm:$0xff]
    %v1016 = vld [vmem:[%s1012 + $0x18] sm:$0xff]
    %v1017 = vld [vmem:[%s1012 + $0x20] sm:$0x3]
    %v1018 = vld [vmem:[%s1012 + $0x28] sm:$0x3]
    %1019 = vmatprep.subr.mxu0 0.0
    %1020 = vmatpush1.msra.mxu0 %v45
    %1021 = vmatprep.subr.mxu0 0.0
    %1022 = vmatpush1.msra.mxu0 %v46
    %1023 = vmatprep.subr.mxu0 0.0
    %1024 = vmatpush1.msra.mxu0 %v47
    %1025 = vmatprep.subr.mxu0 0.0
    %1026 = vmatpush1.msra.mxu0 %v48
    %1027 = vmatprep.subr.mxu0 0.0
    %1028 = vmatpush1.msra.mxu0 %v49
    %1029 = vmatprep.subr.mxu0 0.0
    %1030 = vmatpush1.msra.mxu0 %v50
    %1031 = vmatprep.subr.mxu0 0.0
    %1032 = vmatpush1.msra.mxu0 %v51
    %1033 = vmatprep.subr.mxu0 0.0
    %1034 = vmatpush1.msra.mxu0 %v52
    %1035 = vmatprep.subr.mxu0 0.0
    %1036 = vmatpush1.msra.mxu0 %v53
    %1037 = vmatprep.subr.mxu0 0.0
    %1038 = vmatpush1.msra.mxu0 %v54
    %1039 = vmatprep.subr.mxu0 0.0
    %1040 = vmatpush1.msra.mxu0 %v55
    %1041 = vmatprep.subr.mxu0 0.0
    %1042 = vmatpush1.msra.mxu0 %v56
    %1043 = vmatprep.subr.mxu0 0.0
    %1044 = vmatpush1.msra.mxu0 %v57
    %1045 = vmatprep.subr.mxu0 0.0
    %1046 = vmatpush1.msra.mxu0 %v58
    %1047 = vmatprep.subr.mxu0 0.0
    %1048 = vmatpush1.msra.mxu0 %v59
    %1049 = vmatprep.subr.mxu0 0.0
    %1050 = vmatpush1.msra.mxu0 %v60
    %1051 = vmatprep.subr.mxu0 0.0
    %1052 = vmatpush1.msra.mxu0 %v61
    %1053 = vmatprep.subr.mxu0 0.0
    %1054 = vmatpush1.msra.mxu0 %v62
    %1055 = vmatprep.subr.mxu0 0.0
    %1056 = vmatpush1.msra.mxu0 %v63
    %1057 = vmatprep.subr.mxu0 0.0
    %1058 = vmatpush1.msra.mxu0 %v64
    %1059 = vmatprep.subr.mxu0 0.0
    %1060 = vmatpush1.msra.mxu0 %v65
    %1061 = vmatprep.subr.mxu0 0.0
    %1062 = vmatpush1.msra.mxu0 %v66
    %1063 = vmatprep.subr.mxu0 0.0
    %1064 = vmatpush1.msra.mxu0 %v67
    %1065 = vmatprep.subr.mxu0 0.0
    %1066 = vmatpush1.msra.mxu0 %v68
    %1067 = vmatprep.subr.mxu0 0.0
    %1068 = vmatpush1.msra.mxu0 %v69
    %1069 = vmatprep.subr.mxu0 0.0
    %1070 = vmatpush1.msra.mxu0 %v70
    %1071 = vmatprep.subr.mxu0 0.0
    %1072 = vmatpush1.msra.mxu0 %v71
    %1073 = vmatprep.subr.mxu0 0.0
    %1074 = vmatpush1.msra.mxu0 %v72
    %1075 = vmatprep.subr.mxu0 0.0
    %1076 = vmatpush1.msra.mxu0 %v73
    %1077 = vmatprep.subr.mxu0 0.0
    %1078 = vmatpush1.msra.mxu0 %v74
    %1079 = vmatprep.subr.mxu0 0.0
    %1080 = vmatpush1.msra.mxu0 %v75
    %1081 = vmatprep.subr.mxu0 0.0
    %1082 = vmatpush1.msra.mxu0 %v76
    %1083 = vmatprep.mubr.f32.mxu0 %v1014
    %1084 = vmatmul.mubr.f32.gmra.mrb[0].mxu0 %v1013
    %v1085 = vpop.f32.mrb[0].mxu0
    %v1086 = vadd.f32 %v88, %v1085
    %v1087 = vpop.f32.mrb[0].mxu0
    %1088 = vmatprep.mubr.f32.mxu0 %v1016
    %1089 = vmatmul.mubr.f32.gmra.mrb[0].mxu0 %v1015
    %v1090 = vpop.f32.mrb[0].mxu0
    %v1091 = vadd.f32 %v88, %v1090
    %v1092 = vpop.f32.mrb[0].mxu0
    %1093 = vmatprep.mubr.f32.mxu0 %v1018
    %1094 = vmatmul.mubr.f32.gmra.mrb[0].mxu0 %v1017
    %v1095 = vpop.f32.mrb[0].mxu0
    %v1096 = vadd.f32 %v88, %v1095
    %v1097 = vpop.f32.mrb[0].mxu0
    %1098 = vdwg.mxu0
    %v1099 = vmax.f32 %v1086, 0.0
    %v1100 = vmax.f32 %v1091, 0.0
    %v1101 = vmax.f32 %v1096, 0.0
    %s1102 = scalar_lea.vmem %s3, 160
    %v1103 = vld [vmem:[%s1102] sm:$0xff]
    %v1104 = vld [vmem:[%s1102 + $0x8] sm:$0xff]
    %v1105 = vld [vmem:[%s1102 + $0x10] sm:$0xff]
    %v1106 = vld [vmem:[%s1102 + $0x18] sm:$0xff]
    %v1108 = vsel %vm272, %v1099, 0
    %v1111 = vsel %vm272, %v1100, 0
    %v1114 = vsel %vm272, %v1101, 0
    %1116 = vmatprep.subr.mxu0 0.0
    %1117 = vmatpush1.msra.mxu0 %v1103
    %1118 = vmatprep.subr.mxu0 0.0
    %1119 = vmatpush1.msra.mxu0 %v1104
    %1120 = vmatprep.subr.mxu0 0.0
    %1121 = vmatpush1.msra.mxu0 %v1105
    %1122 = vmatprep.subr.mxu0 0.0
    %1123 = vmatpush1.msra.mxu0 %v1106
    %1124 = vmatprep.subr.mxu0 0.0
    %1125 = vmatpush1.msra.mxu0 0.0
    %1126 = vmatprep.subr.mxu0 0.0
    %1127 = vmatpush1.msra.mxu0 0.0
    %1128 = vmatprep.subr.mxu0 0.0
    %1129 = vmatpush1.msra.mxu0 0.0
    %1130 = vmatprep.subr.mxu0 0.0
    %1131 = vmatpush1.msra.mxu0 0.0
    %1132 = vmatprep.subr.mxu0 0.0
    %1133 = vmatpush1.msra.mxu0 0.0
    %1134 = vmatprep.subr.mxu0 0.0
    %1135 = vmatpush1.msra.mxu0 0.0
    %1136 = vmatprep.subr.mxu0 0.0
    %1137 = vmatpush1.msra.mxu0 0.0
    %1138 = vmatprep.subr.mxu0 0.0
    %1139 = vmatpush1.msra.mxu0 0.0
    %1140 = vmatprep.subr.mxu0 0.0
    %1141 = vmatpush1.msra.mxu0 0.0
    %1142 = vmatprep.subr.mxu0 0.0
    %1143 = vmatpush1.msra.mxu0 0.0
    %1144 = vmatprep.subr.mxu0 0.0
    %1145 = vmatpush1.msra.mxu0 0.0
    %1146 = vmatprep.subr.mxu0 0.0
    %1147 = vmatpush1.msra.mxu0 0.0
    %1148 = vmatprep.subr.mxu0 0.0
    %1149 = vmatpush1.msra.mxu0 0.0
    %1150 = vmatprep.subr.mxu0 0.0
    %1151 = vmatpush1.msra.mxu0 0.0
    %1152 = vmatprep.subr.mxu0 0.0
    %1153 = vmatpush1.msra.mxu0 0.0
    %1154 = vmatprep.subr.mxu0 0.0
    %1155 = vmatpush1.msra.mxu0 0.0
    %1156 = vmatprep.subr.mxu0 0.0
    %1157 = vmatpush1.msra.mxu0 0.0
    %1158 = vmatprep.subr.mxu0 0.0
    %1159 = vmatpush1.msra.mxu0 0.0
    %1160 = vmatprep.subr.mxu0 0.0
    %1161 = vmatpush1.msra.mxu0 0.0
    %1162 = vmatprep.subr.mxu0 0.0
    %1163 = vmatpush1.msra.mxu0 0.0
    %1164 = vmatprep.subr.mxu0 0.0
    %1165 = vmatpush1.msra.mxu0 0.0
    %1166 = vmatprep.subr.mxu0 0.0
    %1167 = vmatpush1.msra.mxu0 0.0
    %1168 = vmatprep.subr.mxu0 0.0
    %1169 = vmatpush1.msra.mxu0 0.0
    %1170 = vmatprep.subr.mxu0 0.0
    %1171 = vmatpush1.msra.mxu0 0.0
    %1172 = vmatprep.subr.mxu0 0.0
    %1173 = vmatpush1.msra.mxu0 0.0
    %1174 = vmatprep.subr.mxu0 0.0
    %1175 = vmatpush1.msra.mxu0 0.0
    %1176 = vmatprep.subr.mxu0 0.0
    %1177 = vmatpush1.msra.mxu0 0.0
    %1178 = vmatprep.subr.mxu0 0.0
    %1179 = vmatpush1.msra.mxu0 0.0
    %1180 = vmatprep.mubr.f32.mxu0 0.0
    %1181 = vmatmul.mubr.f32.gmra.mrb[0].mxu0 %v1108
    %v1182 = vpop.f32.mrb[0].mxu0
    %v1183 = vadd.f32 0.0, %v1182
    %v1184 = vpop.f32.mrb[0].mxu0
    %1185 = vmatprep.mubr.f32.mxu0 0.0
    %1186 = vmatmul.mubr.f32.gmra.mrb[0].mxu0 %v1111
    %v1187 = vpop.f32.mrb[0].mxu0
    %v1188 = vadd.f32 0.0, %v1187
    %v1189 = vpop.f32.mrb[0].mxu0
    %1190 = vmatprep.mubr.f32.mxu0 0.0
    %1191 = vmatmul.mubr.f32.gmra.mrb[0].mxu0 %v1114
    %v1192 = vpop.f32.mrb[0].mxu0
    %v1193 = vadd.f32 0.0, %v1192
    %v1194 = vpop.f32.mrb[0].mxu0
    %1195 = vdwg.mxu0
    %v1196 = vadd.f32 %v1009, %v1183
    %v1197 = vadd.f32 %v1010, %v1188
    %v1198 = vadd.f32 %v1011, %v1193
    %s1199 = scalar_lea.vmem %s0, 288
    %v1200 = vld [vmem:[%s1199] sm:$0xff]
    %v1201 = vld [vmem:[%s1199 + $0x8] sm:$0xff]
    %v1202 = vld [vmem:[%s1199 + $0x10] sm:$0xff]
    %v1203 = vld [vmem:[%s1199 + $0x18] sm:$0xff]
    %v1204 = vld [vmem:[%s1199 + $0x20] sm:$0x3]
    %v1205 = vld [vmem:[%s1199 + $0x28] sm:$0x3]
    %1206 = vmatprep.subr.mxu0 0.0
    %1207 = vmatpush1.msra.mxu0 %v45
    %1208 = vmatprep.subr.mxu0 0.0
    %1209 = vmatpush1.msra.mxu0 %v46
    %1210 = vmatprep.subr.mxu0 0.0
    %1211 = vmatpush1.msra.mxu0 %v47
    %1212 = vmatprep.subr.mxu0 0.0
    %1213 = vmatpush1.msra.mxu0 %v48
    %1214 = vmatprep.subr.mxu0 0.0
    %1215 = vmatpush1.msra.mxu0 %v49
    %1216 = vmatprep.subr.mxu0 0.0
    %1217 = vmatpush1.msra.mxu0 %v50
    %1218 = vmatprep.subr.mxu0 0.0
    %1219 = vmatpush1.msra.mxu0 %v51
    %1220 = vmatprep.subr.mxu0 0.0
    %1221 = vmatpush1.msra.mxu0 %v52
    %1222 = vmatprep.subr.mxu0 0.0
    %1223 = vmatpush1.msra.mxu0 %v53
    %1224 = vmatprep.subr.mxu0 0.0
    %1225 = vmatpush1.msra.mxu0 %v54
    %1226 = vmatprep.subr.mxu0 0.0
    %1227 = vmatpush1.msra.mxu0 %v55
    %1228 = vmatprep.subr.mxu0 0.0
    %1229 = vmatpush1.msra.mxu0 %v56
    %1230 = vmatprep.subr.mxu0 0.0
    %1231 = vmatpush1.msra.mxu0 %v57
    %1232 = vmatprep.subr.mxu0 0.0
    %1233 = vmatpush1.msra.mxu0 %v58
    %1234 = vmatprep.subr.mxu0 0.0
    %1235 = vmatpush1.msra.mxu0 %v59
    %1236 = vmatprep.subr.mxu0 0.0
    %1237 = vmatpush1.msra.mxu0 %v60
    %1238 = vmatprep.subr.mxu0 0.0
    %1239 = vmatpush1.msra.mxu0 %v61
    %1240 = vmatprep.subr.mxu0 0.0
    %1241 = vmatpush1.msra.mxu0 %v62
    %1242 = vmatprep.subr.mxu0 0.0
    %1243 = vmatpush1.msra.mxu0 %v63
    %1244 = vmatprep.subr.mxu0 0.0
    %1245 = vmatpush1.msra.mxu0 %v64
    %1246 = vmatprep.subr.mxu0 0.0
    %1247 = vmatpush1.msra.mxu0 %v65
    %1248 = vmatprep.subr.mxu0 0.0
    %1249 = vmatpush1.msra.mxu0 %v66
    %1250 = vmatprep.subr.mxu0 0.0
    %1251 = vmatpush1.msra.mxu0 %v67
    %1252 = vmatprep.subr.mxu0 0.0
    %1253 = vmatpush1.msra.mxu0 %v68
    %1254 = vmatprep.subr.mxu0 0.0
    %1255 = vmatpush1.msra.mxu0 %v69
    %1256 = vmatprep.subr.mxu0 0.0
    %1257 = vmatpush1.msra.mxu0 %v70
    %1258 = vmatprep.subr.mxu0 0.0
    %1259 = vmatpush1.msra.mxu0 %v71
    %1260 = vmatprep.subr.mxu0 0.0
    %1261 = vmatpush1.msra.mxu0 %v72
    %1262 = vmatprep.subr.mxu0 0.0
    %1263 = vmatpush1.msra.mxu0 %v73
    %1264 = vmatprep.subr.mxu0 0.0
    %1265 = vmatpush1.msra.mxu0 %v74
    %1266 = vmatprep.subr.mxu0 0.0
    %1267 = vmatpush1.msra.mxu0 %v75
    %1268 = vmatprep.subr.mxu0 0.0
    %1269 = vmatpush1.msra.mxu0 %v76
    %1270 = vmatprep.mubr.f32.mxu0 %v1201
    %1271 = vmatmul.mubr.f32.gmra.mrb[0].mxu0 %v1200
    %v1272 = vpop.f32.mrb[0].mxu0
    %v1273 = vadd.f32 %v88, %v1272
    %v1274 = vpop.f32.mrb[0].mxu0
    %1275 = vmatprep.mubr.f32.mxu0 %v1203
    %1276 = vmatmul.mubr.f32.gmra.mrb[0].mxu0 %v1202
    %v1277 = vpop.f32.mrb[0].mxu0
    %v1278 = vadd.f32 %v88, %v1277
    %v1279 = vpop.f32.mrb[0].mxu0
    %1280 = vmatprep.mubr.f32.mxu0 %v1205
    %1281 = vmatmul.mubr.f32.gmra.mrb[0].mxu0 %v1204
    %v1282 = vpop.f32.mrb[0].mxu0
    %v1283 = vadd.f32 %v88, %v1282
    %v1284 = vpop.f32.mrb[0].mxu0
    %1285 = vdwg.mxu0
    %v1286 = vmax.f32 %v1273, 0.0
    %v1287 = vmax.f32 %v1278, 0.0
    %v1288 = vmax.f32 %v1283, 0.0
    %s1289 = scalar_lea.vmem %s3, 192
    %v1290 = vld [vmem:[%s1289] sm:$0xff]
    %v1291 = vld [vmem:[%s1289 + $0x8] sm:$0xff]
    %v1292 = vld [vmem:[%s1289 + $0x10] sm:$0xff]
    %v1293 = vld [vmem:[%s1289 + $0x18] sm:$0xff]
    %v1295 = vsel %vm272, %v1286, 0
    %v1298 = vsel %vm272, %v1287, 0
    %v1301 = vsel %vm272, %v1288, 0
    %1303 = vmatprep.subr.mxu0 0.0
    %1304 = vmatpush1.msra.mxu0 %v1290
    %1305 = vmatprep.subr.mxu0 0.0
    %1306 = vmatpush1.msra.mxu0 %v1291
    %1307 = vmatprep.subr.mxu0 0.0
    %1308 = vmatpush1.msra.mxu0 %v1292
    %1309 = vmatprep.subr.mxu0 0.0
    %1310 = vmatpush1.msra.mxu0 %v1293
    %1311 = vmatprep.subr.mxu0 0.0
    %1312 = vmatpush1.msra.mxu0 0.0
    %1313 = vmatprep.subr.mxu0 0.0
    %1314 = vmatpush1.msra.mxu0 0.0
    %1315 = vmatprep.subr.mxu0 0.0
    %1316 = vmatpush1.msra.mxu0 0.0
    %1317 = vmatprep.subr.mxu0 0.0
    %1318 = vmatpush1.msra.mxu0 0.0
    %1319 = vmatprep.subr.mxu0 0.0
    %1320 = vmatpush1.msra.mxu0 0.0
    %1321 = vmatprep.subr.mxu0 0.0
    %1322 = vmatpush1.msra.mxu0 0.0
    %1323 = vmatprep.subr.mxu0 0.0
    %1324 = vmatpush1.msra.mxu0 0.0
    %1325 = vmatprep.subr.mxu0 0.0
    %1326 = vmatpush1.msra.mxu0 0.0
    %1327 = vmatprep.subr.mxu0 0.0
    %1328 = vmatpush1.msra.mxu0 0.0
    %1329 = vmatprep.subr.mxu0 0.0
    %1330 = vmatpush1.msra.mxu0 0.0
    %1331 = vmatprep.subr.mxu0 0.0
    %1332 = vmatpush1.msra.mxu0 0.0
    %1333 = vmatprep.subr.mxu0 0.0
    %1334 = vmatpush1.msra.mxu0 0.0
    %1335 = vmatprep.subr.mxu0 0.0
    %1336 = vmatpush1.msra.mxu0 0.0
    %1337 = vmatprep.subr.mxu0 0.0
    %1338 = vmatpush1.msra.mxu0 0.0
    %1339 = vmatprep.subr.mxu0 0.0
    %1340 = vmatpush1.msra.mxu0 0.0
    %1341 = vmatprep.subr.mxu0 0.0
    %1342 = vmatpush1.msra.mxu0 0.0
    %1343 = vmatprep.subr.mxu0 0.0
    %1344 = vmatpush1.msra.mxu0 0.0
    %1345 = vmatprep.subr.mxu0 0.0
    %1346 = vmatpush1.msra.mxu0 0.0
    %1347 = vmatprep.subr.mxu0 0.0
    %1348 = vmatpush1.msra.mxu0 0.0
    %1349 = vmatprep.subr.mxu0 0.0
    %1350 = vmatpush1.msra.mxu0 0.0
    %1351 = vmatprep.subr.mxu0 0.0
    %1352 = vmatpush1.msra.mxu0 0.0
    %1353 = vmatprep.subr.mxu0 0.0
    %1354 = vmatpush1.msra.mxu0 0.0
    %1355 = vmatprep.subr.mxu0 0.0
    %1356 = vmatpush1.msra.mxu0 0.0
    %1357 = vmatprep.subr.mxu0 0.0
    %1358 = vmatpush1.msra.mxu0 0.0
    %1359 = vmatprep.subr.mxu0 0.0
    %1360 = vmatpush1.msra.mxu0 0.0
    %1361 = vmatprep.subr.mxu0 0.0
    %1362 = vmatpush1.msra.mxu0 0.0
    %1363 = vmatprep.subr.mxu0 0.0
    %1364 = vmatpush1.msra.mxu0 0.0
    %1365 = vmatprep.subr.mxu0 0.0
    %1366 = vmatpush1.msra.mxu0 0.0
    %1367 = vmatprep.mubr.f32.mxu0 0.0
    %1368 = vmatmul.mubr.f32.gmra.mrb[0].mxu0 %v1295
    %v1369 = vpop.f32.mrb[0].mxu0
    %v1370 = vadd.f32 0.0, %v1369
    %v1371 = vpop.f32.mrb[0].mxu0
    %1372 = vmatprep.mubr.f32.mxu0 0.0
    %1373 = vmatmul.mubr.f32.gmra.mrb[0].mxu0 %v1298
    %v1374 = vpop.f32.mrb[0].mxu0
    %v1375 = vadd.f32 0.0, %v1374
    %v1376 = vpop.f32.mrb[0].mxu0
    %1377 = vmatprep.mubr.f32.mxu0 0.0
    %1378 = vmatmul.mubr.f32.gmra.mrb[0].mxu0 %v1301
    %v1379 = vpop.f32.mrb[0].mxu0
    %v1380 = vadd.f32 0.0, %v1379
    %v1381 = vpop.f32.mrb[0].mxu0
    %1382 = vdwg.mxu0
    %v1383 = vadd.f32 %v1196, %v1370
    %v1384 = vadd.f32 %v1197, %v1375
    %v1385 = vadd.f32 %v1198, %v1380
    %s1386 = scalar_lea.vmem %s0, 336
    %v1387 = vld [vmem:[%s1386] sm:$0xff]
    %v1388 = vld [vmem:[%s1386 + $0x8] sm:$0xff]
    %v1389 = vld [vmem:[%s1386 + $0x10] sm:$0xff]
    %v1390 = vld [vmem:[%s1386 + $0x18] sm:$0xff]
    %v1391 = vld [vmem:[%s1386 + $0x20] sm:$0x3]
    %v1392 = vld [vmem:[%s1386 + $0x28] sm:$0x3]
    %1393 = vmatprep.subr.mxu0 0.0
    %1394 = vmatpush1.msra.mxu0 %v45
    %1395 = vmatprep.subr.mxu0 0.0
    %1396 = vmatpush1.msra.mxu0 %v46
    %1397 = vmatprep.subr.mxu0 0.0
    %1398 = vmatpush1.msra.mxu0 %v47
    %1399 = vmatprep.subr.mxu0 0.0
    %1400 = vmatpush1.msra.mxu0 %v48
    %1401 = vmatprep.subr.mxu0 0.0
    %1402 = vmatpush1.msra.mxu0 %v49
    %1403 = vmatprep.subr.mxu0 0.0
    %1404 = vmatpush1.msra.mxu0 %v50
    %1405 = vmatprep.subr.mxu0 0.0
    %1406 = vmatpush1.msra.mxu0 %v51
    %1407 = vmatprep.subr.mxu0 0.0
    %1408 = vmatpush1.msra.mxu0 %v52
    %1409 = vmatprep.subr.mxu0 0.0
    %1410 = vmatpush1.msra.mxu0 %v53
    %1411 = vmatprep.subr.mxu0 0.0
    %1412 = vmatpush1.msra.mxu0 %v54
    %1413 = vmatprep.subr.mxu0 0.0
    %1414 = vmatpush1.msra.mxu0 %v55
    %1415 = vmatprep.subr.mxu0 0.0
    %1416 = vmatpush1.msra.mxu0 %v56
    %1417 = vmatprep.subr.mxu0 0.0
    %1418 = vmatpush1.msra.mxu0 %v57
    %1419 = vmatprep.subr.mxu0 0.0
    %1420 = vmatpush1.msra.mxu0 %v58
    %1421 = vmatprep.subr.mxu0 0.0
    %1422 = vmatpush1.msra.mxu0 %v59
    %1423 = vmatprep.subr.mxu0 0.0
    %1424 = vmatpush1.msra.mxu0 %v60
    %1425 = vmatprep.subr.mxu0 0.0
    %1426 = vmatpush1.msra.mxu0 %v61
    %1427 = vmatprep.subr.mxu0 0.0
    %1428 = vmatpush1.msra.mxu0 %v62
    %1429 = vmatprep.subr.mxu0 0.0
    %1430 = vmatpush1.msra.mxu0 %v63
    %1431 = vmatprep.subr.mxu0 0.0
    %1432 = vmatpush1.msra.mxu0 %v64
    %1433 = vmatprep.subr.mxu0 0.0
    %1434 = vmatpush1.msra.mxu0 %v65
    %1435 = vmatprep.subr.mxu0 0.0
    %1436 = vmatpush1.msra.mxu0 %v66
    %1437 = vmatprep.subr.mxu0 0.0
    %1438 = vmatpush1.msra.mxu0 %v67
    %1439 = vmatprep.subr.mxu0 0.0
    %1440 = vmatpush1.msra.mxu0 %v68
    %1441 = vmatprep.subr.mxu0 0.0
    %1442 = vmatpush1.msra.mxu0 %v69
    %1443 = vmatprep.subr.mxu0 0.0
    %1444 = vmatpush1.msra.mxu0 %v70
    %1445 = vmatprep.subr.mxu0 0.0
    %1446 = vmatpush1.msra.mxu0 %v71
    %1447 = vmatprep.subr.mxu0 0.0
    %1448 = vmatpush1.msra.mxu0 %v72
    %1449 = vmatprep.subr.mxu0 0.0
    %1450 = vmatpush1.msra.mxu0 %v73
    %1451 = vmatprep.subr.mxu0 0.0
    %1452 = vmatpush1.msra.mxu0 %v74
    %1453 = vmatprep.subr.mxu0 0.0
    %1454 = vmatpush1.msra.mxu0 %v75
    %1455 = vmatprep.subr.mxu0 0.0
    %1456 = vmatpush1.msra.mxu0 %v76
    %1457 = vmatprep.mubr.f32.mxu0 %v1388
    %1458 = vmatmul.mubr.f32.gmra.mrb[0].mxu0 %v1387
    %v1459 = vpop.f32.mrb[0].mxu0
    %v1460 = vadd.f32 %v88, %v1459
    %v1461 = vpop.f32.mrb[0].mxu0
    %1462 = vmatprep.mubr.f32.mxu0 %v1390
    %1463 = vmatmul.mubr.f32.gmra.mrb[0].mxu0 %v1389
    %v1464 = vpop.f32.mrb[0].mxu0
    %v1465 = vadd.f32 %v88, %v1464
    %v1466 = vpop.f32.mrb[0].mxu0
    %1467 = vmatprep.mubr.f32.mxu0 %v1392
    %1468 = vmatmul.mubr.f32.gmra.mrb[0].mxu0 %v1391
    %v1469 = vpop.f32.mrb[0].mxu0
    %v1470 = vadd.f32 %v88, %v1469
    %v1471 = vpop.f32.mrb[0].mxu0
    %1472 = vdwg.mxu0
    %v1473 = vmax.f32 %v1460, 0.0
    %v1474 = vmax.f32 %v1465, 0.0
    %v1475 = vmax.f32 %v1470, 0.0
    %s1476 = scalar_lea.vmem %s3, 224
    %v1477 = vld [vmem:[%s1476] sm:$0xff]
    %v1478 = vld [vmem:[%s1476 + $0x8] sm:$0xff]
    %v1479 = vld [vmem:[%s1476 + $0x10] sm:$0xff]
    %v1480 = vld [vmem:[%s1476 + $0x18] sm:$0xff]
    %v1482 = vsel %vm272, %v1473, 0
    %v1485 = vsel %vm272, %v1474, 0
    %v1488 = vsel %vm272, %v1475, 0
    %1490 = vmatprep.subr.mxu0 0.0
    %1491 = vmatpush1.msra.mxu0 %v1477
    %1492 = vmatprep.subr.mxu0 0.0
    %1493 = vmatpush1.msra.mxu0 %v1478
    %1494 = vmatprep.subr.mxu0 0.0
    %1495 = vmatpush1.msra.mxu0 %v1479
    %1496 = vmatprep.subr.mxu0 0.0
    %1497 = vmatpush1.msra.mxu0 %v1480
    %1498 = vmatprep.subr.mxu0 0.0
    %1499 = vmatpush1.msra.mxu0 0.0
    %1500 = vmatprep.subr.mxu0 0.0
    %1501 = vmatpush1.msra.mxu0 0.0
    %1502 = vmatprep.subr.mxu0 0.0
    %1503 = vmatpush1.msra.mxu0 0.0
    %1504 = vmatprep.subr.mxu0 0.0
    %1505 = vmatpush1.msra.mxu0 0.0
    %1506 = vmatprep.subr.mxu0 0.0
    %1507 = vmatpush1.msra.mxu0 0.0
    %1508 = vmatprep.subr.mxu0 0.0
    %1509 = vmatpush1.msra.mxu0 0.0
    %1510 = vmatprep.subr.mxu0 0.0
    %1511 = vmatpush1.msra.mxu0 0.0
    %1512 = vmatprep.subr.mxu0 0.0
    %1513 = vmatpush1.msra.mxu0 0.0
    %1514 = vmatprep.subr.mxu0 0.0
    %1515 = vmatpush1.msra.mxu0 0.0
    %1516 = vmatprep.subr.mxu0 0.0
    %1517 = vmatpush1.msra.mxu0 0.0
    %1518 = vmatprep.subr.mxu0 0.0
    %1519 = vmatpush1.msra.mxu0 0.0
    %1520 = vmatprep.subr.mxu0 0.0
    %1521 = vmatpush1.msra.mxu0 0.0
    %1522 = vmatprep.subr.mxu0 0.0
    %1523 = vmatpush1.msra.mxu0 0.0
    %1524 = vmatprep.subr.mxu0 0.0
    %1525 = vmatpush1.msra.mxu0 0.0
    %1526 = vmatprep.subr.mxu0 0.0
    %1527 = vmatpush1.msra.mxu0 0.0
    %1528 = vmatprep.subr.mxu0 0.0
    %1529 = vmatpush1.msra.mxu0 0.0
    %1530 = vmatprep.subr.mxu0 0.0
    %1531 = vmatpush1.msra.mxu0 0.0
    %1532 = vmatprep.subr.mxu0 0.0
    %1533 = vmatpush1.msra.mxu0 0.0
    %1534 = vmatprep.subr.mxu0 0.0
    %1535 = vmatpush1.msra.mxu0 0.0
    %1536 = vmatprep.subr.mxu0 0.0
    %1537 = vmatpush1.msra.mxu0 0.0
    %1538 = vmatprep.subr.mxu0 0.0
    %1539 = vmatpush1.msra.mxu0 0.0
    %1540 = vmatprep.subr.mxu0 0.0
    %1541 = vmatpush1.msra.mxu0 0.0
    %1542 = vmatprep.subr.mxu0 0.0
    %1543 = vmatpush1.msra.mxu0 0.0
    %1544 = vmatprep.subr.mxu0 0.0
    %1545 = vmatpush1.msra.mxu0 0.0
    %1546 = vmatprep.subr.mxu0 0.0
    %1547 = vmatpush1.msra.mxu0 0.0
    %1548 = vmatprep.subr.mxu0 0.0
    %1549 = vmatpush1.msra.mxu0 0.0
    %1550 = vmatprep.subr.mxu0 0.0
    %1551 = vmatpush1.msra.mxu0 0.0
    %1552 = vmatprep.subr.mxu0 0.0
    %1553 = vmatpush1.msra.mxu0 0.0
    %1554 = vmatprep.mubr.f32.mxu0 0.0
    %1555 = vmatmul.mubr.f32.gmra.mrb[0].mxu0 %v1482
    %v1556 = vpop.f32.mrb[0].mxu0
    %v1557 = vadd.f32 0.0, %v1556
    %v1558 = vpop.f32.mrb[0].mxu0
    %1559 = vmatprep.mubr.f32.mxu0 0.0
    %1560 = vmatmul.mubr.f32.gmra.mrb[0].mxu0 %v1485
    %v1561 = vpop.f32.mrb[0].mxu0
    %v1562 = vadd.f32 0.0, %v1561
    %v1563 = vpop.f32.mrb[0].mxu0
    %1564 = vmatprep.mubr.f32.mxu0 0.0
    %1565 = vmatmul.mubr.f32.gmra.mrb[0].mxu0 %v1488
    %v1566 = vpop.f32.mrb[0].mxu0
    %v1567 = vadd.f32 0.0, %v1566
    %v1568 = vpop.f32.mrb[0].mxu0
    %1569 = vdwg.mxu0
    %v1570 = vadd.f32 %v1383, %v1557
    %v1571 = vadd.f32 %v1384, %v1562
    %v1572 = vadd.f32 %v1385, %v1567
    %s1573 = scalar_lea.vmem %s0, 384
    %v1574 = vld [vmem:[%s1573] sm:$0xff]
    %v1575 = vld [vmem:[%s1573 + $0x8] sm:$0xff]
    %v1576 = vld [vmem:[%s1573 + $0x10] sm:$0xff]
    %v1577 = vld [vmem:[%s1573 + $0x18] sm:$0xff]
    %v1578 = vld [vmem:[%s1573 + $0x20] sm:$0x3]
    %v1579 = vld [vmem:[%s1573 + $0x28] sm:$0x3]
    %1580 = vmatprep.subr.mxu0 0.0
    %1581 = vmatpush1.msra.mxu0 %v45
    %1582 = vmatprep.subr.mxu0 0.0
    %1583 = vmatpush1.msra.mxu0 %v46
    %1584 = vmatprep.subr.mxu0 0.0
    %1585 = vmatpush1.msra.mxu0 %v47
    %1586 = vmatprep.subr.mxu0 0.0
    %1587 = vmatpush1.msra.mxu0 %v48
    %1588 = vmatprep.subr.mxu0 0.0
    %1589 = vmatpush1.msra.mxu0 %v49
    %1590 = vmatprep.subr.mxu0 0.0
    %1591 = vmatpush1.msra.mxu0 %v50
    %1592 = vmatprep.subr.mxu0 0.0
    %1593 = vmatpush1.msra.mxu0 %v51
    %1594 = vmatprep.subr.mxu0 0.0
    %1595 = vmatpush1.msra.mxu0 %v52
    %1596 = vmatprep.subr.mxu0 0.0
    %1597 = vmatpush1.msra.mxu0 %v53
    %1598 = vmatprep.subr.mxu0 0.0
    %1599 = vmatpush1.msra.mxu0 %v54
    %1600 = vmatprep.subr.mxu0 0.0
    %1601 = vmatpush1.msra.mxu0 %v55
    %1602 = vmatprep.subr.mxu0 0.0
    %1603 = vmatpush1.msra.mxu0 %v56
    %1604 = vmatprep.subr.mxu0 0.0
    %1605 = vmatpush1.msra.mxu0 %v57
    %1606 = vmatprep.subr.mxu0 0.0
    %1607 = vmatpush1.msra.mxu0 %v58
    %1608 = vmatprep.subr.mxu0 0.0
    %1609 = vmatpush1.msra.mxu0 %v59
    %1610 = vmatprep.subr.mxu0 0.0
    %1611 = vmatpush1.msra.mxu0 %v60
    %1612 = vmatprep.subr.mxu0 0.0
    %1613 = vmatpush1.msra.mxu0 %v61
    %1614 = vmatprep.subr.mxu0 0.0
    %1615 = vmatpush1.msra.mxu0 %v62
    %1616 = vmatprep.subr.mxu0 0.0
    %1617 = vmatpush1.msra.mxu0 %v63
    %1618 = vmatprep.subr.mxu0 0.0
    %1619 = vmatpush1.msra.mxu0 %v64
    %1620 = vmatprep.subr.mxu0 0.0
    %1621 = vmatpush1.msra.mxu0 %v65
    %1622 = vmatprep.subr.mxu0 0.0
    %1623 = vmatpush1.msra.mxu0 %v66
    %1624 = vmatprep.subr.mxu0 0.0
    %1625 = vmatpush1.msra.mxu0 %v67
    %1626 = vmatprep.subr.mxu0 0.0
    %1627 = vmatpush1.msra.mxu0 %v68
    %1628 = vmatprep.subr.mxu0 0.0
    %1629 = vmatpush1.msra.mxu0 %v69
    %1630 = vmatprep.subr.mxu0 0.0
    %1631 = vmatpush1.msra.mxu0 %v70
    %1632 = vmatprep.subr.mxu0 0.0
    %1633 = vmatpush1.msra.mxu0 %v71
    %1634 = vmatprep.subr.mxu0 0.0
    %1635 = vmatpush1.msra.mxu0 %v72
    %1636 = vmatprep.subr.mxu0 0.0
    %1637 = vmatpush1.msra.mxu0 %v73
    %1638 = vmatprep.subr.mxu0 0.0
    %1639 = vmatpush1.msra.mxu0 %v74
    %1640 = vmatprep.subr.mxu0 0.0
    %1641 = vmatpush1.msra.mxu0 %v75
    %1642 = vmatprep.subr.mxu0 0.0
    %1643 = vmatpush1.msra.mxu0 %v76
    %1644 = vmatprep.mubr.f32.mxu0 %v1575
    %1645 = vmatmul.mubr.f32.gmra.mrb[0].mxu0 %v1574
    %v1646 = vpop.f32.mrb[0].mxu0
    %v1647 = vadd.f32 %v88, %v1646
    %v1648 = vpop.f32.mrb[0].mxu0
    %1649 = vmatprep.mubr.f32.mxu0 %v1577
    %1650 = vmatmul.mubr.f32.gmra.mrb[0].mxu0 %v1576
    %v1651 = vpop.f32.mrb[0].mxu0
    %v1652 = vadd.f32 %v88, %v1651
    %v1653 = vpop.f32.mrb[0].mxu0
    %1654 = vmatprep.mubr.f32.mxu0 %v1579
    %1655 = vmatmul.mubr.f32.gmra.mrb[0].mxu0 %v1578
    %v1656 = vpop.f32.mrb[0].mxu0
    %v1657 = vadd.f32 %v88, %v1656
    %v1658 = vpop.f32.mrb[0].mxu0
    %1659 = vdwg.mxu0
    %v1660 = vmax.f32 %v1647, 0.0
    %v1661 = vmax.f32 %v1652, 0.0
    %v1662 = vmax.f32 %v1657, 0.0
    %s1663 = scalar_lea.vmem %s3, 256
    %v1664 = vld [vmem:[%s1663] sm:$0xff]
    %v1665 = vld [vmem:[%s1663 + $0x8] sm:$0xff]
    %v1666 = vld [vmem:[%s1663 + $0x10] sm:$0xff]
    %v1667 = vld [vmem:[%s1663 + $0x18] sm:$0xff]
    %v1669 = vsel %vm272, %v1660, 0
    %v1672 = vsel %vm272, %v1661, 0
    %v1675 = vsel %vm272, %v1662, 0
    %1677 = vmatprep.subr.mxu0 0.0
    %1678 = vmatpush1.msra.mxu0 %v1664
    %1679 = vmatprep.subr.mxu0 0.0
    %1680 = vmatpush1.msra.mxu0 %v1665
    %1681 = vmatprep.subr.mxu0 0.0
    %1682 = vmatpush1.msra.mxu0 %v1666
    %1683 = vmatprep.subr.mxu0 0.0
    %1684 = vmatpush1.msra.mxu0 %v1667
    %1685 = vmatprep.subr.mxu0 0.0
    %1686 = vmatpush1.msra.mxu0 0.0
    %1687 = vmatprep.subr.mxu0 0.0
    %1688 = vmatpush1.msra.mxu0 0.0
    %1689 = vmatprep.subr.mxu0 0.0
    %1690 = vmatpush1.msra.mxu0 0.0
    %1691 = vmatprep.subr.mxu0 0.0
    %1692 = vmatpush1.msra.mxu0 0.0
    %1693 = vmatprep.subr.mxu0 0.0
    %1694 = vmatpush1.msra.mxu0 0.0
    %1695 = vmatprep.subr.mxu0 0.0
    %1696 = vmatpush1.msra.mxu0 0.0
    %1697 = vmatprep.subr.mxu0 0.0
    %1698 = vmatpush1.msra.mxu0 0.0
    %1699 = vmatprep.subr.mxu0 0.0
    %1700 = vmatpush1.msra.mxu0 0.0
    %1701 = vmatprep.subr.mxu0 0.0
    %1702 = vmatpush1.msra.mxu0 0.0
    %1703 = vmatprep.subr.mxu0 0.0
    %1704 = vmatpush1.msra.mxu0 0.0
    %1705 = vmatprep.subr.mxu0 0.0
    %1706 = vmatpush1.msra.mxu0 0.0
    %1707 = vmatprep.subr.mxu0 0.0
    %1708 = vmatpush1.msra.mxu0 0.0
    %1709 = vmatprep.subr.mxu0 0.0
    %1710 = vmatpush1.msra.mxu0 0.0
    %1711 = vmatprep.subr.mxu0 0.0
    %1712 = vmatpush1.msra.mxu0 0.0
    %1713 = vmatprep.subr.mxu0 0.0
    %1714 = vmatpush1.msra.mxu0 0.0
    %1715 = vmatprep.subr.mxu0 0.0
    %1716 = vmatpush1.msra.mxu0 0.0
    %1717 = vmatprep.subr.mxu0 0.0
    %1718 = vmatpush1.msra.mxu0 0.0
    %1719 = vmatprep.subr.mxu0 0.0
    %1720 = vmatpush1.msra.mxu0 0.0
    %1721 = vmatprep.subr.mxu0 0.0
    %1722 = vmatpush1.msra.mxu0 0.0
    %1723 = vmatprep.subr.mxu0 0.0
    %1724 = vmatpush1.msra.mxu0 0.0
    %1725 = vmatprep.subr.mxu0 0.0
    %1726 = vmatpush1.msra.mxu0 0.0
    %1727 = vmatprep.subr.mxu0 0.0
    %1728 = vmatpush1.msra.mxu0 0.0
    %1729 = vmatprep.subr.mxu0 0.0
    %1730 = vmatpush1.msra.mxu0 0.0
    %1731 = vmatprep.subr.mxu0 0.0
    %1732 = vmatpush1.msra.mxu0 0.0
    %1733 = vmatprep.subr.mxu0 0.0
    %1734 = vmatpush1.msra.mxu0 0.0
    %1735 = vmatprep.subr.mxu0 0.0
    %1736 = vmatpush1.msra.mxu0 0.0
    %1737 = vmatprep.subr.mxu0 0.0
    %1738 = vmatpush1.msra.mxu0 0.0
    %1739 = vmatprep.subr.mxu0 0.0
    %1740 = vmatpush1.msra.mxu0 0.0
    %1741 = vmatprep.mubr.f32.mxu0 0.0
    %1742 = vmatmul.mubr.f32.gmra.mrb[0].mxu0 %v1669
    %v1743 = vpop.f32.mrb[0].mxu0
    %v1744 = vadd.f32 0.0, %v1743
    %v1745 = vpop.f32.mrb[0].mxu0
    %1746 = vmatprep.mubr.f32.mxu0 0.0
    %1747 = vmatmul.mubr.f32.gmra.mrb[0].mxu0 %v1672
    %v1748 = vpop.f32.mrb[0].mxu0
    %v1749 = vadd.f32 0.0, %v1748
    %v1750 = vpop.f32.mrb[0].mxu0
    %1751 = vmatprep.mubr.f32.mxu0 0.0
    %1752 = vmatmul.mubr.f32.gmra.mrb[0].mxu0 %v1675
    %v1753 = vpop.f32.mrb[0].mxu0
    %v1754 = vadd.f32 0.0, %v1753
    %v1755 = vpop.f32.mrb[0].mxu0
    %1756 = vdwg.mxu0
    %v1757 = vadd.f32 %v1570, %v1744
    %v1758 = vadd.f32 %v1571, %v1749
    %v1759 = vadd.f32 %v1572, %v1754
    %s1760 = scalar_lea.vmem %s0, 432
    %v1761 = vld [vmem:[%s1760] sm:$0xff]
    %v1762 = vld [vmem:[%s1760 + $0x8] sm:$0xff]
    %v1763 = vld [vmem:[%s1760 + $0x10] sm:$0xff]
    %v1764 = vld [vmem:[%s1760 + $0x18] sm:$0xff]
    %v1765 = vld [vmem:[%s1760 + $0x20] sm:$0x3]
    %v1766 = vld [vmem:[%s1760 + $0x28] sm:$0x3]
    %1767 = vmatprep.subr.mxu0 0.0
    %1768 = vmatpush1.msra.mxu0 %v45
    %1769 = vmatprep.subr.mxu0 0.0
    %1770 = vmatpush1.msra.mxu0 %v46
    %1771 = vmatprep.subr.mxu0 0.0
    %1772 = vmatpush1.msra.mxu0 %v47
    %1773 = vmatprep.subr.mxu0 0.0
    %1774 = vmatpush1.msra.mxu0 %v48
    %1775 = vmatprep.subr.mxu0 0.0
    %1776 = vmatpush1.msra.mxu0 %v49
    %1777 = vmatprep.subr.mxu0 0.0
    %1778 = vmatpush1.msra.mxu0 %v50
    %1779 = vmatprep.subr.mxu0 0.0
    %1780 = vmatpush1.msra.mxu0 %v51
    %1781 = vmatprep.subr.mxu0 0.0
    %1782 = vmatpush1.msra.mxu0 %v52
    %1783 = vmatprep.subr.mxu0 0.0
    %1784 = vmatpush1.msra.mxu0 %v53
    %1785 = vmatprep.subr.mxu0 0.0
    %1786 = vmatpush1.msra.mxu0 %v54
    %1787 = vmatprep.subr.mxu0 0.0
    %1788 = vmatpush1.msra.mxu0 %v55
    %1789 = vmatprep.subr.mxu0 0.0
    %1790 = vmatpush1.msra.mxu0 %v56
    %1791 = vmatprep.subr.mxu0 0.0
    %1792 = vmatpush1.msra.mxu0 %v57
    %1793 = vmatprep.subr.mxu0 0.0
    %1794 = vmatpush1.msra.mxu0 %v58
    %1795 = vmatprep.subr.mxu0 0.0
    %1796 = vmatpush1.msra.mxu0 %v59
    %1797 = vmatprep.subr.mxu0 0.0
    %1798 = vmatpush1.msra.mxu0 %v60
    %1799 = vmatprep.subr.mxu0 0.0
    %1800 = vmatpush1.msra.mxu0 %v61
    %1801 = vmatprep.subr.mxu0 0.0
    %1802 = vmatpush1.msra.mxu0 %v62
    %1803 = vmatprep.subr.mxu0 0.0
    %1804 = vmatpush1.msra.mxu0 %v63
    %1805 = vmatprep.subr.mxu0 0.0
    %1806 = vmatpush1.msra.mxu0 %v64
    %1807 = vmatprep.subr.mxu0 0.0
    %1808 = vmatpush1.msra.mxu0 %v65
    %1809 = vmatprep.subr.mxu0 0.0
    %1810 = vmatpush1.msra.mxu0 %v66
    %1811 = vmatprep.subr.mxu0 0.0
    %1812 = vmatpush1.msra.mxu0 %v67
    %1813 = vmatprep.subr.mxu0 0.0
    %1814 = vmatpush1.msra.mxu0 %v68
    %1815 = vmatprep.subr.mxu0 0.0
    %1816 = vmatpush1.msra.mxu0 %v69
    %1817 = vmatprep.subr.mxu0 0.0
    %1818 = vmatpush1.msra.mxu0 %v70
    %1819 = vmatprep.subr.mxu0 0.0
    %1820 = vmatpush1.msra.mxu0 %v71
    %1821 = vmatprep.subr.mxu0 0.0
    %1822 = vmatpush1.msra.mxu0 %v72
    %1823 = vmatprep.subr.mxu0 0.0
    %1824 = vmatpush1.msra.mxu0 %v73
    %1825 = vmatprep.subr.mxu0 0.0
    %1826 = vmatpush1.msra.mxu0 %v74
    %1827 = vmatprep.subr.mxu0 0.0
    %1828 = vmatpush1.msra.mxu0 %v75
    %1829 = vmatprep.subr.mxu0 0.0
    %1830 = vmatpush1.msra.mxu0 %v76
    %1831 = vmatprep.mubr.f32.mxu0 %v1762
    %1832 = vmatmul.mubr.f32.gmra.mrb[0].mxu0 %v1761
    %v1833 = vpop.f32.mrb[0].mxu0
    %v1834 = vadd.f32 %v88, %v1833
    %v1835 = vpop.f32.mrb[0].mxu0
    %1836 = vmatprep.mubr.f32.mxu0 %v1764
    %1837 = vmatmul.mubr.f32.gmra.mrb[0].mxu0 %v1763
    %v1838 = vpop.f32.mrb[0].mxu0
    %v1839 = vadd.f32 %v88, %v1838
    %v1840 = vpop.f32.mrb[0].mxu0
    %1841 = vmatprep.mubr.f32.mxu0 %v1766
    %1842 = vmatmul.mubr.f32.gmra.mrb[0].mxu0 %v1765
    %v1843 = vpop.f32.mrb[0].mxu0
    %v1844 = vadd.f32 %v88, %v1843
    %v1845 = vpop.f32.mrb[0].mxu0
    %1846 = vdwg.mxu0
    %v1847 = vmax.f32 %v1834, 0.0
    %v1848 = vmax.f32 %v1839, 0.0
    %v1849 = vmax.f32 %v1844, 0.0
    %s1850 = scalar_lea.vmem %s3, 288
    %v1851 = vld [vmem:[%s1850] sm:$0xff]
    %v1852 = vld [vmem:[%s1850 + $0x8] sm:$0xff]
    %v1853 = vld [vmem:[%s1850 + $0x10] sm:$0xff]
    %v1854 = vld [vmem:[%s1850 + $0x18] sm:$0xff]
    %v1856 = vsel %vm272, %v1847, 0
    %v1859 = vsel %vm272, %v1848, 0
    %v1862 = vsel %vm272, %v1849, 0
    %1864 = vmatprep.subr.mxu0 0.0
    %1865 = vmatpush1.msra.mxu0 %v1851
    %1866 = vmatprep.subr.mxu0 0.0
    %1867 = vmatpush1.msra.mxu0 %v1852
    %1868 = vmatprep.subr.mxu0 0.0
    %1869 = vmatpush1.msra.mxu0 %v1853
    %1870 = vmatprep.subr.mxu0 0.0
    %1871 = vmatpush1.msra.mxu0 %v1854
    %1872 = vmatprep.subr.mxu0 0.0
    %1873 = vmatpush1.msra.mxu0 0.0
    %1874 = vmatprep.subr.mxu0 0.0
    %1875 = vmatpush1.msra.mxu0 0.0
    %1876 = vmatprep.subr.mxu0 0.0
    %1877 = vmatpush1.msra.mxu0 0.0
    %1878 = vmatprep.subr.mxu0 0.0
    %1879 = vmatpush1.msra.mxu0 0.0
    %1880 = vmatprep.subr.mxu0 0.0
    %1881 = vmatpush1.msra.mxu0 0.0
    %1882 = vmatprep.subr.mxu0 0.0
    %1883 = vmatpush1.msra.mxu0 0.0
    %1884 = vmatprep.subr.mxu0 0.0
    %1885 = vmatpush1.msra.mxu0 0.0
    %1886 = vmatprep.subr.mxu0 0.0
    %1887 = vmatpush1.msra.mxu0 0.0
    %1888 = vmatprep.subr.mxu0 0.0
    %1889 = vmatpush1.msra.mxu0 0.0
    %1890 = vmatprep.subr.mxu0 0.0
    %1891 = vmatpush1.msra.mxu0 0.0
    %1892 = vmatprep.subr.mxu0 0.0
    %1893 = vmatpush1.msra.mxu0 0.0
    %1894 = vmatprep.subr.mxu0 0.0
    %1895 = vmatpush1.msra.mxu0 0.0
    %1896 = vmatprep.subr.mxu0 0.0
    %1897 = vmatpush1.msra.mxu0 0.0
    %1898 = vmatprep.subr.mxu0 0.0
    %1899 = vmatpush1.msra.mxu0 0.0
    %1900 = vmatprep.subr.mxu0 0.0
    %1901 = vmatpush1.msra.mxu0 0.0
    %1902 = vmatprep.subr.mxu0 0.0
    %1903 = vmatpush1.msra.mxu0 0.0
    %1904 = vmatprep.subr.mxu0 0.0
    %1905 = vmatpush1.msra.mxu0 0.0
    %1906 = vmatprep.subr.mxu0 0.0
    %1907 = vmatpush1.msra.mxu0 0.0
    %1908 = vmatprep.subr.mxu0 0.0
    %1909 = vmatpush1.msra.mxu0 0.0
    %1910 = vmatprep.subr.mxu0 0.0
    %1911 = vmatpush1.msra.mxu0 0.0
    %1912 = vmatprep.subr.mxu0 0.0
    %1913 = vmatpush1.msra.mxu0 0.0
    %1914 = vmatprep.subr.mxu0 0.0
    %1915 = vmatpush1.msra.mxu0 0.0
    %1916 = vmatprep.subr.mxu0 0.0
    %1917 = vmatpush1.msra.mxu0 0.0
    %1918 = vmatprep.subr.mxu0 0.0
    %1919 = vmatpush1.msra.mxu0 0.0
    %1920 = vmatprep.subr.mxu0 0.0
    %1921 = vmatpush1.msra.mxu0 0.0
    %1922 = vmatprep.subr.mxu0 0.0
    %1923 = vmatpush1.msra.mxu0 0.0
    %1924 = vmatprep.subr.mxu0 0.0
    %1925 = vmatpush1.msra.mxu0 0.0
    %1926 = vmatprep.subr.mxu0 0.0
    %1927 = vmatpush1.msra.mxu0 0.0
    %1928 = vmatprep.mubr.f32.mxu0 0.0
    %1929 = vmatmul.mubr.f32.gmra.mrb[0].mxu0 %v1856
    %v1930 = vpop.f32.mrb[0].mxu0
    %v1931 = vadd.f32 0.0, %v1930
    %v1932 = vpop.f32.mrb[0].mxu0
    %1933 = vmatprep.mubr.f32.mxu0 0.0
    %1934 = vmatmul.mubr.f32.gmra.mrb[0].mxu0 %v1859
    %v1935 = vpop.f32.mrb[0].mxu0
    %v1936 = vadd.f32 0.0, %v1935
    %v1937 = vpop.f32.mrb[0].mxu0
    %1938 = vmatprep.mubr.f32.mxu0 0.0
    %1939 = vmatmul.mubr.f32.gmra.mrb[0].mxu0 %v1862
    %v1940 = vpop.f32.mrb[0].mxu0
    %v1941 = vadd.f32 0.0, %v1940
    %v1942 = vpop.f32.mrb[0].mxu0
    %1943 = vdwg.mxu0
    %v1944 = vadd.f32 %v1757, %v1931
    %v1945 = vadd.f32 %v1758, %v1936
    %v1946 = vadd.f32 %v1759, %v1941
    %s1947 = scalar_lea.vmem %s0, 480
    %v1948 = vld [vmem:[%s1947] sm:$0xff]
    %v1949 = vld [vmem:[%s1947 + $0x8] sm:$0xff]
    %v1950 = vld [vmem:[%s1947 + $0x10] sm:$0xff]
    %v1951 = vld [vmem:[%s1947 + $0x18] sm:$0xff]
    %v1952 = vld [vmem:[%s1947 + $0x20] sm:$0x3]
    %v1953 = vld [vmem:[%s1947 + $0x28] sm:$0x3]
    %1954 = vmatprep.subr.mxu0 0.0
    %1955 = vmatpush1.msra.mxu0 %v45
    %1956 = vmatprep.subr.mxu0 0.0
    %1957 = vmatpush1.msra.mxu0 %v46
    %1958 = vmatprep.subr.mxu0 0.0
    %1959 = vmatpush1.msra.mxu0 %v47
    %1960 = vmatprep.subr.mxu0 0.0
    %1961 = vmatpush1.msra.mxu0 %v48
    %1962 = vmatprep.subr.mxu0 0.0
    %1963 = vmatpush1.msra.mxu0 %v49
    %1964 = vmatprep.subr.mxu0 0.0
    %1965 = vmatpush1.msra.mxu0 %v50
    %1966 = vmatprep.subr.mxu0 0.0
    %1967 = vmatpush1.msra.mxu0 %v51
    %1968 = vmatprep.subr.mxu0 0.0
    %1969 = vmatpush1.msra.mxu0 %v52
    %1970 = vmatprep.subr.mxu0 0.0
    %1971 = vmatpush1.msra.mxu0 %v53
    %1972 = vmatprep.subr.mxu0 0.0
    %1973 = vmatpush1.msra.mxu0 %v54
    %1974 = vmatprep.subr.mxu0 0.0
    %1975 = vmatpush1.msra.mxu0 %v55
    %1976 = vmatprep.subr.mxu0 0.0
    %1977 = vmatpush1.msra.mxu0 %v56
    %1978 = vmatprep.subr.mxu0 0.0
    %1979 = vmatpush1.msra.mxu0 %v57
    %1980 = vmatprep.subr.mxu0 0.0
    %1981 = vmatpush1.msra.mxu0 %v58
    %1982 = vmatprep.subr.mxu0 0.0
    %1983 = vmatpush1.msra.mxu0 %v59
    %1984 = vmatprep.subr.mxu0 0.0
    %1985 = vmatpush1.msra.mxu0 %v60
    %1986 = vmatprep.subr.mxu0 0.0
    %1987 = vmatpush1.msra.mxu0 %v61
    %1988 = vmatprep.subr.mxu0 0.0
    %1989 = vmatpush1.msra.mxu0 %v62
    %1990 = vmatprep.subr.mxu0 0.0
    %1991 = vmatpush1.msra.mxu0 %v63
    %1992 = vmatprep.subr.mxu0 0.0
    %1993 = vmatpush1.msra.mxu0 %v64
    %1994 = vmatprep.subr.mxu0 0.0
    %1995 = vmatpush1.msra.mxu0 %v65
    %1996 = vmatprep.subr.mxu0 0.0
    %1997 = vmatpush1.msra.mxu0 %v66
    %1998 = vmatprep.subr.mxu0 0.0
    %1999 = vmatpush1.msra.mxu0 %v67
    %2000 = vmatprep.subr.mxu0 0.0
    %2001 = vmatpush1.msra.mxu0 %v68
    %2002 = vmatprep.subr.mxu0 0.0
    %2003 = vmatpush1.msra.mxu0 %v69
    %2004 = vmatprep.subr.mxu0 0.0
    %2005 = vmatpush1.msra.mxu0 %v70
    %2006 = vmatprep.subr.mxu0 0.0
    %2007 = vmatpush1.msra.mxu0 %v71
    %2008 = vmatprep.subr.mxu0 0.0
    %2009 = vmatpush1.msra.mxu0 %v72
    %2010 = vmatprep.subr.mxu0 0.0
    %2011 = vmatpush1.msra.mxu0 %v73
    %2012 = vmatprep.subr.mxu0 0.0
    %2013 = vmatpush1.msra.mxu0 %v74
    %2014 = vmatprep.subr.mxu0 0.0
    %2015 = vmatpush1.msra.mxu0 %v75
    %2016 = vmatprep.subr.mxu0 0.0
    %2017 = vmatpush1.msra.mxu0 %v76
    %2018 = vmatprep.mubr.f32.mxu0 %v1949
    %2019 = vmatmul.mubr.f32.gmra.mrb[0].mxu0 %v1948
    %v2020 = vpop.f32.mrb[0].mxu0
    %v2021 = vadd.f32 %v88, %v2020
    %v2022 = vpop.f32.mrb[0].mxu0
    %2023 = vmatprep.mubr.f32.mxu0 %v1951
    %2024 = vmatmul.mubr.f32.gmra.mrb[0].mxu0 %v1950
    %v2025 = vpop.f32.mrb[0].mxu0
    %v2026 = vadd.f32 %v88, %v2025
    %v2027 = vpop.f32.mrb[0].mxu0
    %2028 = vmatprep.mubr.f32.mxu0 %v1953
    %2029 = vmatmul.mubr.f32.gmra.mrb[0].mxu0 %v1952
    %v2030 = vpop.f32.mrb[0].mxu0
    %v2031 = vadd.f32 %v88, %v2030
    %v2032 = vpop.f32.mrb[0].mxu0
    %2033 = vdwg.mxu0
    %v2034 = vmax.f32 %v2021, 0.0
    %v2035 = vmax.f32 %v2026, 0.0
    %v2036 = vmax.f32 %v2031, 0.0
    %s2037 = scalar_lea.vmem %s3, 320
    %v2038 = vld [vmem:[%s2037] sm:$0xff]
    %v2039 = vld [vmem:[%s2037 + $0x8] sm:$0xff]
    %v2040 = vld [vmem:[%s2037 + $0x10] sm:$0xff]
    %v2041 = vld [vmem:[%s2037 + $0x18] sm:$0xff]
    %v2043 = vsel %vm272, %v2034, 0
    %v2046 = vsel %vm272, %v2035, 0
    %v2049 = vsel %vm272, %v2036, 0
    %2051 = vmatprep.subr.mxu0 0.0
    %2052 = vmatpush1.msra.mxu0 %v2038
    %2053 = vmatprep.subr.mxu0 0.0
    %2054 = vmatpush1.msra.mxu0 %v2039
    %2055 = vmatprep.subr.mxu0 0.0
    %2056 = vmatpush1.msra.mxu0 %v2040
    %2057 = vmatprep.subr.mxu0 0.0
    %2058 = vmatpush1.msra.mxu0 %v2041
    %2059 = vmatprep.subr.mxu0 0.0
    %2060 = vmatpush1.msra.mxu0 0.0
    %2061 = vmatprep.subr.mxu0 0.0
    %2062 = vmatpush1.msra.mxu0 0.0
    %2063 = vmatprep.subr.mxu0 0.0
    %2064 = vmatpush1.msra.mxu0 0.0
    %2065 = vmatprep.subr.mxu0 0.0
    %2066 = vmatpush1.msra.mxu0 0.0
    %2067 = vmatprep.subr.mxu0 0.0
    %2068 = vmatpush1.msra.mxu0 0.0
    %2069 = vmatprep.subr.mxu0 0.0
    %2070 = vmatpush1.msra.mxu0 0.0
    %2071 = vmatprep.subr.mxu0 0.0
    %2072 = vmatpush1.msra.mxu0 0.0
    %2073 = vmatprep.subr.mxu0 0.0
    %2074 = vmatpush1.msra.mxu0 0.0
    %2075 = vmatprep.subr.mxu0 0.0
    %2076 = vmatpush1.msra.mxu0 0.0
    %2077 = vmatprep.subr.mxu0 0.0
    %2078 = vmatpush1.msra.mxu0 0.0
    %2079 = vmatprep.subr.mxu0 0.0
    %2080 = vmatpush1.msra.mxu0 0.0
    %2081 = vmatprep.subr.mxu0 0.0
    %2082 = vmatpush1.msra.mxu0 0.0
    %2083 = vmatprep.subr.mxu0 0.0
    %2084 = vmatpush1.msra.mxu0 0.0
    %2085 = vmatprep.subr.mxu0 0.0
    %2086 = vmatpush1.msra.mxu0 0.0
    %2087 = vmatprep.subr.mxu0 0.0
    %2088 = vmatpush1.msra.mxu0 0.0
    %2089 = vmatprep.subr.mxu0 0.0
    %2090 = vmatpush1.msra.mxu0 0.0
    %2091 = vmatprep.subr.mxu0 0.0
    %2092 = vmatpush1.msra.mxu0 0.0
    %2093 = vmatprep.subr.mxu0 0.0
    %2094 = vmatpush1.msra.mxu0 0.0
    %2095 = vmatprep.subr.mxu0 0.0
    %2096 = vmatpush1.msra.mxu0 0.0
    %2097 = vmatprep.subr.mxu0 0.0
    %2098 = vmatpush1.msra.mxu0 0.0
    %2099 = vmatprep.subr.mxu0 0.0
    %2100 = vmatpush1.msra.mxu0 0.0
    %2101 = vmatprep.subr.mxu0 0.0
    %2102 = vmatpush1.msra.mxu0 0.0
    %2103 = vmatprep.subr.mxu0 0.0
    %2104 = vmatpush1.msra.mxu0 0.0
    %2105 = vmatprep.subr.mxu0 0.0
    %2106 = vmatpush1.msra.mxu0 0.0
    %2107 = vmatprep.subr.mxu0 0.0
    %2108 = vmatpush1.msra.mxu0 0.0
    %2109 = vmatprep.subr.mxu0 0.0
    %2110 = vmatpush1.msra.mxu0 0.0
    %2111 = vmatprep.subr.mxu0 0.0
    %2112 = vmatpush1.msra.mxu0 0.0
    %2113 = vmatprep.subr.mxu0 0.0
    %2114 = vmatpush1.msra.mxu0 0.0
    %2115 = vmatprep.mubr.f32.mxu0 0.0
    %2116 = vmatmul.mubr.f32.gmra.mrb[0].mxu0 %v2043
    %v2117 = vpop.f32.mrb[0].mxu0
    %v2118 = vadd.f32 0.0, %v2117
    %v2119 = vpop.f32.mrb[0].mxu0
    %2120 = vmatprep.mubr.f32.mxu0 0.0
    %2121 = vmatmul.mubr.f32.gmra.mrb[0].mxu0 %v2046
    %v2122 = vpop.f32.mrb[0].mxu0
    %v2123 = vadd.f32 0.0, %v2122
    %v2124 = vpop.f32.mrb[0].mxu0
    %2125 = vmatprep.mubr.f32.mxu0 0.0
    %2126 = vmatmul.mubr.f32.gmra.mrb[0].mxu0 %v2049
    %v2127 = vpop.f32.mrb[0].mxu0
    %v2128 = vadd.f32 0.0, %v2127
    %v2129 = vpop.f32.mrb[0].mxu0
    %2130 = vdwg.mxu0
    %v2131 = vadd.f32 %v1944, %v2118
    %v2132 = vadd.f32 %v1945, %v2123
    %v2133 = vadd.f32 %v1946, %v2128
    %s2134 = scalar_lea.vmem %s0, 528
    %v2135 = vld [vmem:[%s2134] sm:$0xff]
    %v2136 = vld [vmem:[%s2134 + $0x8] sm:$0xff]
    %v2137 = vld [vmem:[%s2134 + $0x10] sm:$0xff]
    %v2138 = vld [vmem:[%s2134 + $0x18] sm:$0xff]
    %v2139 = vld [vmem:[%s2134 + $0x20] sm:$0x3]
    %v2140 = vld [vmem:[%s2134 + $0x28] sm:$0x3]
    %2141 = vmatprep.subr.mxu0 0.0
    %2142 = vmatpush1.msra.mxu0 %v45
    %2143 = vmatprep.subr.mxu0 0.0
    %2144 = vmatpush1.msra.mxu0 %v46
    %2145 = vmatprep.subr.mxu0 0.0
    %2146 = vmatpush1.msra.mxu0 %v47
    %2147 = vmatprep.subr.mxu0 0.0
    %2148 = vmatpush1.msra.mxu0 %v48
    %2149 = vmatprep.subr.mxu0 0.0
    %2150 = vmatpush1.msra.mxu0 %v49
    %2151 = vmatprep.subr.mxu0 0.0
    %2152 = vmatpush1.msra.mxu0 %v50
    %2153 = vmatprep.subr.mxu0 0.0
    %2154 = vmatpush1.msra.mxu0 %v51
    %2155 = vmatprep.subr.mxu0 0.0
    %2156 = vmatpush1.msra.mxu0 %v52
    %2157 = vmatprep.subr.mxu0 0.0
    %2158 = vmatpush1.msra.mxu0 %v53
    %2159 = vmatprep.subr.mxu0 0.0
    %2160 = vmatpush1.msra.mxu0 %v54
    %2161 = vmatprep.subr.mxu0 0.0
    %2162 = vmatpush1.msra.mxu0 %v55
    %2163 = vmatprep.subr.mxu0 0.0
    %2164 = vmatpush1.msra.mxu0 %v56
    %2165 = vmatprep.subr.mxu0 0.0
    %2166 = vmatpush1.msra.mxu0 %v57
    %2167 = vmatprep.subr.mxu0 0.0
    %2168 = vmatpush1.msra.mxu0 %v58
    %2169 = vmatprep.subr.mxu0 0.0
    %2170 = vmatpush1.msra.mxu0 %v59
    %2171 = vmatprep.subr.mxu0 0.0
    %2172 = vmatpush1.msra.mxu0 %v60
    %2173 = vmatprep.subr.mxu0 0.0
    %2174 = vmatpush1.msra.mxu0 %v61
    %2175 = vmatprep.subr.mxu0 0.0
    %2176 = vmatpush1.msra.mxu0 %v62
    %2177 = vmatprep.subr.mxu0 0.0
    %2178 = vmatpush1.msra.mxu0 %v63
    %2179 = vmatprep.subr.mxu0 0.0
    %2180 = vmatpush1.msra.mxu0 %v64
    %2181 = vmatprep.subr.mxu0 0.0
    %2182 = vmatpush1.msra.mxu0 %v65
    %2183 = vmatprep.subr.mxu0 0.0
    %2184 = vmatpush1.msra.mxu0 %v66
    %2185 = vmatprep.subr.mxu0 0.0
    %2186 = vmatpush1.msra.mxu0 %v67
    %2187 = vmatprep.subr.mxu0 0.0
    %2188 = vmatpush1.msra.mxu0 %v68
    %2189 = vmatprep.subr.mxu0 0.0
    %2190 = vmatpush1.msra.mxu0 %v69
    %2191 = vmatprep.subr.mxu0 0.0
    %2192 = vmatpush1.msra.mxu0 %v70
    %2193 = vmatprep.subr.mxu0 0.0
    %2194 = vmatpush1.msra.mxu0 %v71
    %2195 = vmatprep.subr.mxu0 0.0
    %2196 = vmatpush1.msra.mxu0 %v72
    %2197 = vmatprep.subr.mxu0 0.0
    %2198 = vmatpush1.msra.mxu0 %v73
    %2199 = vmatprep.subr.mxu0 0.0
    %2200 = vmatpush1.msra.mxu0 %v74
    %2201 = vmatprep.subr.mxu0 0.0
    %2202 = vmatpush1.msra.mxu0 %v75
    %2203 = vmatprep.subr.mxu0 0.0
    %2204 = vmatpush1.msra.mxu0 %v76
    %2205 = vmatprep.mubr.f32.mxu0 %v2136
    %2206 = vmatmul.mubr.f32.gmra.mrb[0].mxu0 %v2135
    %v2207 = vpop.f32.mrb[0].mxu0
    %v2208 = vadd.f32 %v88, %v2207
    %v2209 = vpop.f32.mrb[0].mxu0
    %2210 = vmatprep.mubr.f32.mxu0 %v2138
    %2211 = vmatmul.mubr.f32.gmra.mrb[0].mxu0 %v2137
    %v2212 = vpop.f32.mrb[0].mxu0
    %v2213 = vadd.f32 %v88, %v2212
    %v2214 = vpop.f32.mrb[0].mxu0
    %2215 = vmatprep.mubr.f32.mxu0 %v2140
    %2216 = vmatmul.mubr.f32.gmra.mrb[0].mxu0 %v2139
    %v2217 = vpop.f32.mrb[0].mxu0
    %v2218 = vadd.f32 %v88, %v2217
    %v2219 = vpop.f32.mrb[0].mxu0
    %2220 = vdwg.mxu0
    %v2221 = vmax.f32 %v2208, 0.0
    %v2222 = vmax.f32 %v2213, 0.0
    %v2223 = vmax.f32 %v2218, 0.0
    %s2224 = scalar_lea.vmem %s3, 352
    %v2225 = vld [vmem:[%s2224] sm:$0xff]
    %v2226 = vld [vmem:[%s2224 + $0x8] sm:$0xff]
    %v2227 = vld [vmem:[%s2224 + $0x10] sm:$0xff]
    %v2228 = vld [vmem:[%s2224 + $0x18] sm:$0xff]
    %v2230 = vsel %vm272, %v2221, 0
    %v2233 = vsel %vm272, %v2222, 0
    %v2236 = vsel %vm272, %v2223, 0
    %2238 = vmatprep.subr.mxu0 0.0
    %2239 = vmatpush1.msra.mxu0 %v2225
    %2240 = vmatprep.subr.mxu0 0.0
    %2241 = vmatpush1.msra.mxu0 %v2226
    %2242 = vmatprep.subr.mxu0 0.0
    %2243 = vmatpush1.msra.mxu0 %v2227
    %2244 = vmatprep.subr.mxu0 0.0
    %2245 = vmatpush1.msra.mxu0 %v2228
    %2246 = vmatprep.subr.mxu0 0.0
    %2247 = vmatpush1.msra.mxu0 0.0
    %2248 = vmatprep.subr.mxu0 0.0
    %2249 = vmatpush1.msra.mxu0 0.0
    %2250 = vmatprep.subr.mxu0 0.0
    %2251 = vmatpush1.msra.mxu0 0.0
    %2252 = vmatprep.subr.mxu0 0.0
    %2253 = vmatpush1.msra.mxu0 0.0
    %2254 = vmatprep.subr.mxu0 0.0
    %2255 = vmatpush1.msra.mxu0 0.0
    %2256 = vmatprep.subr.mxu0 0.0
    %2257 = vmatpush1.msra.mxu0 0.0
    %2258 = vmatprep.subr.mxu0 0.0
    %2259 = vmatpush1.msra.mxu0 0.0
    %2260 = vmatprep.subr.mxu0 0.0
    %2261 = vmatpush1.msra.mxu0 0.0
    %2262 = vmatprep.subr.mxu0 0.0
    %2263 = vmatpush1.msra.mxu0 0.0
    %2264 = vmatprep.subr.mxu0 0.0
    %2265 = vmatpush1.msra.mxu0 0.0
    %2266 = vmatprep.subr.mxu0 0.0
    %2267 = vmatpush1.msra.mxu0 0.0
    %2268 = vmatprep.subr.mxu0 0.0
    %2269 = vmatpush1.msra.mxu0 0.0
    %2270 = vmatprep.subr.mxu0 0.0
    %2271 = vmatpush1.msra.mxu0 0.0
    %2272 = vmatprep.subr.mxu0 0.0
    %2273 = vmatpush1.msra.mxu0 0.0
    %2274 = vmatprep.subr.mxu0 0.0
    %2275 = vmatpush1.msra.mxu0 0.0
    %2276 = vmatprep.subr.mxu0 0.0
    %2277 = vmatpush1.msra.mxu0 0.0
    %2278 = vmatprep.subr.mxu0 0.0
    %2279 = vmatpush1.msra.mxu0 0.0
    %2280 = vmatprep.subr.mxu0 0.0
    %2281 = vmatpush1.msra.mxu0 0.0
    %2282 = vmatprep.subr.mxu0 0.0
    %2283 = vmatpush1.msra.mxu0 0.0
    %2284 = vmatprep.subr.mxu0 0.0
    %2285 = vmatpush1.msra.mxu0 0.0
    %2286 = vmatprep.subr.mxu0 0.0
    %2287 = vmatpush1.msra.mxu0 0.0
    %2288 = vmatprep.subr.mxu0 0.0
    %2289 = vmatpush1.msra.mxu0 0.0
    %2290 = vmatprep.subr.mxu0 0.0
    %2291 = vmatpush1.msra.mxu0 0.0
    %2292 = vmatprep.subr.mxu0 0.0
    %2293 = vmatpush1.msra.mxu0 0.0
    %2294 = vmatprep.subr.mxu0 0.0
    %2295 = vmatpush1.msra.mxu0 0.0
    %2296 = vmatprep.subr.mxu0 0.0
    %2297 = vmatpush1.msra.mxu0 0.0
    %2298 = vmatprep.subr.mxu0 0.0
    %2299 = vmatpush1.msra.mxu0 0.0
    %2300 = vmatprep.subr.mxu0 0.0
    %2301 = vmatpush1.msra.mxu0 0.0
    %2302 = vmatprep.mubr.f32.mxu0 0.0
    %2303 = vmatmul.mubr.f32.gmra.mrb[0].mxu0 %v2230
    %v2304 = vpop.f32.mrb[0].mxu0
    %v2305 = vadd.f32 0.0, %v2304
    %v2306 = vpop.f32.mrb[0].mxu0
    %2307 = vmatprep.mubr.f32.mxu0 0.0
    %2308 = vmatmul.mubr.f32.gmra.mrb[0].mxu0 %v2233
    %v2309 = vpop.f32.mrb[0].mxu0
    %v2310 = vadd.f32 0.0, %v2309
    %v2311 = vpop.f32.mrb[0].mxu0
    %2312 = vmatprep.mubr.f32.mxu0 0.0
    %2313 = vmatmul.mubr.f32.gmra.mrb[0].mxu0 %v2236
    %v2314 = vpop.f32.mrb[0].mxu0
    %v2315 = vadd.f32 0.0, %v2314
    %v2316 = vpop.f32.mrb[0].mxu0
    %2317 = vdwg.mxu0
    %v2318 = vadd.f32 %v2131, %v2305
    %v2319 = vadd.f32 %v2132, %v2310
    %v2320 = vadd.f32 %v2133, %v2315
    %s2321 = scalar_lea.vmem %s0, 576
    %v2322 = vld [vmem:[%s2321] sm:$0xff]
    %v2323 = vld [vmem:[%s2321 + $0x8] sm:$0xff]
    %v2324 = vld [vmem:[%s2321 + $0x10] sm:$0xff]
    %v2325 = vld [vmem:[%s2321 + $0x18] sm:$0xff]
    %v2326 = vld [vmem:[%s2321 + $0x20] sm:$0x3]
    %v2327 = vld [vmem:[%s2321 + $0x28] sm:$0x3]
    %2328 = vmatprep.subr.mxu0 0.0
    %2329 = vmatpush1.msra.mxu0 %v45
    %2330 = vmatprep.subr.mxu0 0.0
    %2331 = vmatpush1.msra.mxu0 %v46
    %2332 = vmatprep.subr.mxu0 0.0
    %2333 = vmatpush1.msra.mxu0 %v47
    %2334 = vmatprep.subr.mxu0 0.0
    %2335 = vmatpush1.msra.mxu0 %v48
    %2336 = vmatprep.subr.mxu0 0.0
    %2337 = vmatpush1.msra.mxu0 %v49
    %2338 = vmatprep.subr.mxu0 0.0
    %2339 = vmatpush1.msra.mxu0 %v50
    %2340 = vmatprep.subr.mxu0 0.0
    %2341 = vmatpush1.msra.mxu0 %v51
    %2342 = vmatprep.subr.mxu0 0.0
    %2343 = vmatpush1.msra.mxu0 %v52
    %2344 = vmatprep.subr.mxu0 0.0
    %2345 = vmatpush1.msra.mxu0 %v53
    %2346 = vmatprep.subr.mxu0 0.0
    %2347 = vmatpush1.msra.mxu0 %v54
    %2348 = vmatprep.subr.mxu0 0.0
    %2349 = vmatpush1.msra.mxu0 %v55
    %2350 = vmatprep.subr.mxu0 0.0
    %2351 = vmatpush1.msra.mxu0 %v56
    %2352 = vmatprep.subr.mxu0 0.0
    %2353 = vmatpush1.msra.mxu0 %v57
    %2354 = vmatprep.subr.mxu0 0.0
    %2355 = vmatpush1.msra.mxu0 %v58
    %2356 = vmatprep.subr.mxu0 0.0
    %2357 = vmatpush1.msra.mxu0 %v59
    %2358 = vmatprep.subr.mxu0 0.0
    %2359 = vmatpush1.msra.mxu0 %v60
    %2360 = vmatprep.subr.mxu0 0.0
    %2361 = vmatpush1.msra.mxu0 %v61
    %2362 = vmatprep.subr.mxu0 0.0
    %2363 = vmatpush1.msra.mxu0 %v62
    %2364 = vmatprep.subr.mxu0 0.0
    %2365 = vmatpush1.msra.mxu0 %v63
    %2366 = vmatprep.subr.mxu0 0.0
    %2367 = vmatpush1.msra.mxu0 %v64
    %2368 = vmatprep.subr.mxu0 0.0
    %2369 = vmatpush1.msra.mxu0 %v65
    %2370 = vmatprep.subr.mxu0 0.0
    %2371 = vmatpush1.msra.mxu0 %v66
    %2372 = vmatprep.subr.mxu0 0.0
    %2373 = vmatpush1.msra.mxu0 %v67
    %2374 = vmatprep.subr.mxu0 0.0
    %2375 = vmatpush1.msra.mxu0 %v68
    %2376 = vmatprep.subr.mxu0 0.0
    %2377 = vmatpush1.msra.mxu0 %v69
    %2378 = vmatprep.subr.mxu0 0.0
    %2379 = vmatpush1.msra.mxu0 %v70
    %2380 = vmatprep.subr.mxu0 0.0
    %2381 = vmatpush1.msra.mxu0 %v71
    %2382 = vmatprep.subr.mxu0 0.0
    %2383 = vmatpush1.msra.mxu0 %v72
    %2384 = vmatprep.subr.mxu0 0.0
    %2385 = vmatpush1.msra.mxu0 %v73
    %2386 = vmatprep.subr.mxu0 0.0
    %2387 = vmatpush1.msra.mxu0 %v74
    %2388 = vmatprep.subr.mxu0 0.0
    %2389 = vmatpush1.msra.mxu0 %v75
    %2390 = vmatprep.subr.mxu0 0.0
    %2391 = vmatpush1.msra.mxu0 %v76
    %2392 = vmatprep.mubr.f32.mxu0 %v2323
    %2393 = vmatmul.mubr.f32.gmra.mrb[0].mxu0 %v2322
    %v2394 = vpop.f32.mrb[0].mxu0
    %v2395 = vadd.f32 %v88, %v2394
    %v2396 = vpop.f32.mrb[0].mxu0
    %2397 = vmatprep.mubr.f32.mxu0 %v2325
    %2398 = vmatmul.mubr.f32.gmra.mrb[0].mxu0 %v2324
    %v2399 = vpop.f32.mrb[0].mxu0
    %v2400 = vadd.f32 %v88, %v2399
    %v2401 = vpop.f32.mrb[0].mxu0
    %2402 = vmatprep.mubr.f32.mxu0 %v2327
    %2403 = vmatmul.mubr.f32.gmra.mrb[0].mxu0 %v2326
    %v2404 = vpop.f32.mrb[0].mxu0
    %v2405 = vadd.f32 %v88, %v2404
    %v2406 = vpop.f32.mrb[0].mxu0
    %2407 = vdwg.mxu0
    %v2408 = vmax.f32 %v2395, 0.0
    %v2409 = vmax.f32 %v2400, 0.0
    %v2410 = vmax.f32 %v2405, 0.0
    %s2411 = scalar_lea.vmem %s3, 384
    %v2412 = vld [vmem:[%s2411] sm:$0xff]
    %v2413 = vld [vmem:[%s2411 + $0x8] sm:$0xff]
    %v2414 = vld [vmem:[%s2411 + $0x10] sm:$0xff]
    %v2415 = vld [vmem:[%s2411 + $0x18] sm:$0xff]
    %v2417 = vsel %vm272, %v2408, 0
    %v2420 = vsel %vm272, %v2409, 0
    %v2423 = vsel %vm272, %v2410, 0
    %2425 = vmatprep.subr.mxu0 0.0
    %2426 = vmatpush1.msra.mxu0 %v2412
    %2427 = vmatprep.subr.mxu0 0.0
    %2428 = vmatpush1.msra.mxu0 %v2413
    %2429 = vmatprep.subr.mxu0 0.0
    %2430 = vmatpush1.msra.mxu0 %v2414
    %2431 = vmatprep.subr.mxu0 0.0
    %2432 = vmatpush1.msra.mxu0 %v2415
    %2433 = vmatprep.subr.mxu0 0.0
    %2434 = vmatpush1.msra.mxu0 0.0
    %2435 = vmatprep.subr.mxu0 0.0
    %2436 = vmatpush1.msra.mxu0 0.0
    %2437 = vmatprep.subr.mxu0 0.0
    %2438 = vmatpush1.msra.mxu0 0.0
    %2439 = vmatprep.subr.mxu0 0.0
    %2440 = vmatpush1.msra.mxu0 0.0
    %2441 = vmatprep.subr.mxu0 0.0
    %2442 = vmatpush1.msra.mxu0 0.0
    %2443 = vmatprep.subr.mxu0 0.0
    %2444 = vmatpush1.msra.mxu0 0.0
    %2445 = vmatprep.subr.mxu0 0.0
    %2446 = vmatpush1.msra.mxu0 0.0
    %2447 = vmatprep.subr.mxu0 0.0
    %2448 = vmatpush1.msra.mxu0 0.0
    %2449 = vmatprep.subr.mxu0 0.0
    %2450 = vmatpush1.msra.mxu0 0.0
    %2451 = vmatprep.subr.mxu0 0.0
    %2452 = vmatpush1.msra.mxu0 0.0
    %2453 = vmatprep.subr.mxu0 0.0
    %2454 = vmatpush1.msra.mxu0 0.0
    %2455 = vmatprep.subr.mxu0 0.0
    %2456 = vmatpush1.msra.mxu0 0.0
    %2457 = vmatprep.subr.mxu0 0.0
    %2458 = vmatpush1.msra.mxu0 0.0
    %2459 = vmatprep.subr.mxu0 0.0
    %2460 = vmatpush1.msra.mxu0 0.0
    %2461 = vmatprep.subr.mxu0 0.0
    %2462 = vmatpush1.msra.mxu0 0.0
    %2463 = vmatprep.subr.mxu0 0.0
    %2464 = vmatpush1.msra.mxu0 0.0
    %2465 = vmatprep.subr.mxu0 0.0
    %2466 = vmatpush1.msra.mxu0 0.0
    %2467 = vmatprep.subr.mxu0 0.0
    %2468 = vmatpush1.msra.mxu0 0.0
    %2469 = vmatprep.subr.mxu0 0.0
    %2470 = vmatpush1.msra.mxu0 0.0
    %2471 = vmatprep.subr.mxu0 0.0
    %2472 = vmatpush1.msra.mxu0 0.0
    %2473 = vmatprep.subr.mxu0 0.0
    %2474 = vmatpush1.msra.mxu0 0.0
    %2475 = vmatprep.subr.mxu0 0.0
    %2476 = vmatpush1.msra.mxu0 0.0
    %2477 = vmatprep.subr.mxu0 0.0
    %2478 = vmatpush1.msra.mxu0 0.0
    %2479 = vmatprep.subr.mxu0 0.0
    %2480 = vmatpush1.msra.mxu0 0.0
    %2481 = vmatprep.subr.mxu0 0.0
    %2482 = vmatpush1.msra.mxu0 0.0
    %2483 = vmatprep.subr.mxu0 0.0
    %2484 = vmatpush1.msra.mxu0 0.0
    %2485 = vmatprep.subr.mxu0 0.0
    %2486 = vmatpush1.msra.mxu0 0.0
    %2487 = vmatprep.subr.mxu0 0.0
    %2488 = vmatpush1.msra.mxu0 0.0
    %2489 = vmatprep.mubr.f32.mxu0 0.0
    %2490 = vmatmul.mubr.f32.gmra.mrb[0].mxu0 %v2417
    %v2491 = vpop.f32.mrb[0].mxu0
    %v2492 = vadd.f32 0.0, %v2491
    %v2493 = vpop.f32.mrb[0].mxu0
    %2494 = vmatprep.mubr.f32.mxu0 0.0
    %2495 = vmatmul.mubr.f32.gmra.mrb[0].mxu0 %v2420
    %v2496 = vpop.f32.mrb[0].mxu0
    %v2497 = vadd.f32 0.0, %v2496
    %v2498 = vpop.f32.mrb[0].mxu0
    %2499 = vmatprep.mubr.f32.mxu0 0.0
    %2500 = vmatmul.mubr.f32.gmra.mrb[0].mxu0 %v2423
    %v2501 = vpop.f32.mrb[0].mxu0
    %v2502 = vadd.f32 0.0, %v2501
    %v2503 = vpop.f32.mrb[0].mxu0
    %2504 = vdwg.mxu0
    %v2505 = vadd.f32 %v2318, %v2492
    %v2506 = vadd.f32 %v2319, %v2497
    %v2507 = vadd.f32 %v2320, %v2502
    %s2508 = scalar_lea.vmem %s0, 624
    %v2509 = vld [vmem:[%s2508] sm:$0xff]
    %v2510 = vld [vmem:[%s2508 + $0x8] sm:$0xff]
    %v2511 = vld [vmem:[%s2508 + $0x10] sm:$0xff]
    %v2512 = vld [vmem:[%s2508 + $0x18] sm:$0xff]
    %v2513 = vld [vmem:[%s2508 + $0x20] sm:$0x3]
    %v2514 = vld [vmem:[%s2508 + $0x28] sm:$0x3]
    %2515 = vmatprep.subr.mxu0 0.0
    %2516 = vmatpush1.msra.mxu0 %v45
    %2517 = vmatprep.subr.mxu0 0.0
    %2518 = vmatpush1.msra.mxu0 %v46
    %2519 = vmatprep.subr.mxu0 0.0
    %2520 = vmatpush1.msra.mxu0 %v47
    %2521 = vmatprep.subr.mxu0 0.0
    %2522 = vmatpush1.msra.mxu0 %v48
    %2523 = vmatprep.subr.mxu0 0.0
    %2524 = vmatpush1.msra.mxu0 %v49
    %2525 = vmatprep.subr.mxu0 0.0
    %2526 = vmatpush1.msra.mxu0 %v50
    %2527 = vmatprep.subr.mxu0 0.0
    %2528 = vmatpush1.msra.mxu0 %v51
    %2529 = vmatprep.subr.mxu0 0.0
    %2530 = vmatpush1.msra.mxu0 %v52
    %2531 = vmatprep.subr.mxu0 0.0
    %2532 = vmatpush1.msra.mxu0 %v53
    %2533 = vmatprep.subr.mxu0 0.0
    %2534 = vmatpush1.msra.mxu0 %v54
    %2535 = vmatprep.subr.mxu0 0.0
    %2536 = vmatpush1.msra.mxu0 %v55
    %2537 = vmatprep.subr.mxu0 0.0
    %2538 = vmatpush1.msra.mxu0 %v56
    %2539 = vmatprep.subr.mxu0 0.0
    %2540 = vmatpush1.msra.mxu0 %v57
    %2541 = vmatprep.subr.mxu0 0.0
    %2542 = vmatpush1.msra.mxu0 %v58
    %2543 = vmatprep.subr.mxu0 0.0
    %2544 = vmatpush1.msra.mxu0 %v59
    %2545 = vmatprep.subr.mxu0 0.0
    %2546 = vmatpush1.msra.mxu0 %v60
    %2547 = vmatprep.subr.mxu0 0.0
    %2548 = vmatpush1.msra.mxu0 %v61
    %2549 = vmatprep.subr.mxu0 0.0
    %2550 = vmatpush1.msra.mxu0 %v62
    %2551 = vmatprep.subr.mxu0 0.0
    %2552 = vmatpush1.msra.mxu0 %v63
    %2553 = vmatprep.subr.mxu0 0.0
    %2554 = vmatpush1.msra.mxu0 %v64
    %2555 = vmatprep.subr.mxu0 0.0
    %2556 = vmatpush1.msra.mxu0 %v65
    %2557 = vmatprep.subr.mxu0 0.0
    %2558 = vmatpush1.msra.mxu0 %v66
    %2559 = vmatprep.subr.mxu0 0.0
    %2560 = vmatpush1.msra.mxu0 %v67
    %2561 = vmatprep.subr.mxu0 0.0
    %2562 = vmatpush1.msra.mxu0 %v68
    %2563 = vmatprep.subr.mxu0 0.0
    %2564 = vmatpush1.msra.mxu0 %v69
    %2565 = vmatprep.subr.mxu0 0.0
    %2566 = vmatpush1.msra.mxu0 %v70
    %2567 = vmatprep.subr.mxu0 0.0
    %2568 = vmatpush1.msra.mxu0 %v71
    %2569 = vmatprep.subr.mxu0 0.0
    %2570 = vmatpush1.msra.mxu0 %v72
    %2571 = vmatprep.subr.mxu0 0.0
    %2572 = vmatpush1.msra.mxu0 %v73
    %2573 = vmatprep.subr.mxu0 0.0
    %2574 = vmatpush1.msra.mxu0 %v74
    %2575 = vmatprep.subr.mxu0 0.0
    %2576 = vmatpush1.msra.mxu0 %v75
    %2577 = vmatprep.subr.mxu0 0.0
    %2578 = vmatpush1.msra.mxu0 %v76
    %2579 = vmatprep.mubr.f32.mxu0 %v2510
    %2580 = vmatmul.mubr.f32.gmra.mrb[0].mxu0 %v2509
    %v2581 = vpop.f32.mrb[0].mxu0
    %v2582 = vadd.f32 %v88, %v2581
    %v2583 = vpop.f32.mrb[0].mxu0
    %2584 = vmatprep.mubr.f32.mxu0 %v2512
    %2585 = vmatmul.mubr.f32.gmra.mrb[0].mxu0 %v2511
    %v2586 = vpop.f32.mrb[0].mxu0
    %v2587 = vadd.f32 %v88, %v2586
    %v2588 = vpop.f32.mrb[0].mxu0
    %2589 = vmatprep.mubr.f32.mxu0 %v2514
    %2590 = vmatmul.mubr.f32.gmra.mrb[0].mxu0 %v2513
    %v2591 = vpop.f32.mrb[0].mxu0
    %v2592 = vadd.f32 %v88, %v2591
    %v2593 = vpop.f32.mrb[0].mxu0
    %2594 = vdwg.mxu0
    %v2595 = vmax.f32 %v2582, 0.0
    %v2596 = vmax.f32 %v2587, 0.0
    %v2597 = vmax.f32 %v2592, 0.0
    %s2598 = scalar_lea.vmem %s3, 416
    %v2599 = vld [vmem:[%s2598] sm:$0xff]
    %v2600 = vld [vmem:[%s2598 + $0x8] sm:$0xff]
    %v2601 = vld [vmem:[%s2598 + $0x10] sm:$0xff]
    %v2602 = vld [vmem:[%s2598 + $0x18] sm:$0xff]
    %v2604 = vsel %vm272, %v2595, 0
    %v2607 = vsel %vm272, %v2596, 0
    %v2610 = vsel %vm272, %v2597, 0
    %2612 = vmatprep.subr.mxu0 0.0
    %2613 = vmatpush1.msra.mxu0 %v2599
    %2614 = vmatprep.subr.mxu0 0.0
    %2615 = vmatpush1.msra.mxu0 %v2600
    %2616 = vmatprep.subr.mxu0 0.0
    %2617 = vmatpush1.msra.mxu0 %v2601
    %2618 = vmatprep.subr.mxu0 0.0
    %2619 = vmatpush1.msra.mxu0 %v2602
    %2620 = vmatprep.subr.mxu0 0.0
    %2621 = vmatpush1.msra.mxu0 0.0
    %2622 = vmatprep.subr.mxu0 0.0
    %2623 = vmatpush1.msra.mxu0 0.0
    %2624 = vmatprep.subr.mxu0 0.0
    %2625 = vmatpush1.msra.mxu0 0.0
    %2626 = vmatprep.subr.mxu0 0.0
    %2627 = vmatpush1.msra.mxu0 0.0
    %2628 = vmatprep.subr.mxu0 0.0
    %2629 = vmatpush1.msra.mxu0 0.0
    %2630 = vmatprep.subr.mxu0 0.0
    %2631 = vmatpush1.msra.mxu0 0.0
    %2632 = vmatprep.subr.mxu0 0.0
    %2633 = vmatpush1.msra.mxu0 0.0
    %2634 = vmatprep.subr.mxu0 0.0
    %2635 = vmatpush1.msra.mxu0 0.0
    %2636 = vmatprep.subr.mxu0 0.0
    %2637 = vmatpush1.msra.mxu0 0.0
    %2638 = vmatprep.subr.mxu0 0.0
    %2639 = vmatpush1.msra.mxu0 0.0
    %2640 = vmatprep.subr.mxu0 0.0
    %2641 = vmatpush1.msra.mxu0 0.0
    %2642 = vmatprep.subr.mxu0 0.0
    %2643 = vmatpush1.msra.mxu0 0.0
    %2644 = vmatprep.subr.mxu0 0.0
    %2645 = vmatpush1.msra.mxu0 0.0
    %2646 = vmatprep.subr.mxu0 0.0
    %2647 = vmatpush1.msra.mxu0 0.0
    %2648 = vmatprep.subr.mxu0 0.0
    %2649 = vmatpush1.msra.mxu0 0.0
    %2650 = vmatprep.subr.mxu0 0.0
    %2651 = vmatpush1.msra.mxu0 0.0
    %2652 = vmatprep.subr.mxu0 0.0
    %2653 = vmatpush1.msra.mxu0 0.0
    %2654 = vmatprep.subr.mxu0 0.0
    %2655 = vmatpush1.msra.mxu0 0.0
    %2656 = vmatprep.subr.mxu0 0.0
    %2657 = vmatpush1.msra.mxu0 0.0
    %2658 = vmatprep.subr.mxu0 0.0
    %2659 = vmatpush1.msra.mxu0 0.0
    %2660 = vmatprep.subr.mxu0 0.0
    %2661 = vmatpush1.msra.mxu0 0.0
    %2662 = vmatprep.subr.mxu0 0.0
    %2663 = vmatpush1.msra.mxu0 0.0
    %2664 = vmatprep.subr.mxu0 0.0
    %2665 = vmatpush1.msra.mxu0 0.0
    %2666 = vmatprep.subr.mxu0 0.0
    %2667 = vmatpush1.msra.mxu0 0.0
    %2668 = vmatprep.subr.mxu0 0.0
    %2669 = vmatpush1.msra.mxu0 0.0
    %2670 = vmatprep.subr.mxu0 0.0
    %2671 = vmatpush1.msra.mxu0 0.0
    %2672 = vmatprep.subr.mxu0 0.0
    %2673 = vmatpush1.msra.mxu0 0.0
    %2674 = vmatprep.subr.mxu0 0.0
    %2675 = vmatpush1.msra.mxu0 0.0
    %2676 = vmatprep.mubr.f32.mxu0 0.0
    %2677 = vmatmul.mubr.f32.gmra.mrb[0].mxu0 %v2604
    %v2678 = vpop.f32.mrb[0].mxu0
    %v2679 = vadd.f32 0.0, %v2678
    %v2680 = vpop.f32.mrb[0].mxu0
    %2681 = vmatprep.mubr.f32.mxu0 0.0
    %2682 = vmatmul.mubr.f32.gmra.mrb[0].mxu0 %v2607
    %v2683 = vpop.f32.mrb[0].mxu0
    %v2684 = vadd.f32 0.0, %v2683
    %v2685 = vpop.f32.mrb[0].mxu0
    %2686 = vmatprep.mubr.f32.mxu0 0.0
    %2687 = vmatmul.mubr.f32.gmra.mrb[0].mxu0 %v2610
    %v2688 = vpop.f32.mrb[0].mxu0
    %v2689 = vadd.f32 0.0, %v2688
    %v2690 = vpop.f32.mrb[0].mxu0
    %2691 = vdwg.mxu0
    %v2692 = vadd.f32 %v2505, %v2679
    %v2693 = vadd.f32 %v2506, %v2684
    %v2694 = vadd.f32 %v2507, %v2689
    %s2695 = scalar_lea.vmem %s0, 672
    %v2696 = vld [vmem:[%s2695] sm:$0xff]
    %v2697 = vld [vmem:[%s2695 + $0x8] sm:$0xff]
    %v2698 = vld [vmem:[%s2695 + $0x10] sm:$0xff]
    %v2699 = vld [vmem:[%s2695 + $0x18] sm:$0xff]
    %v2700 = vld [vmem:[%s2695 + $0x20] sm:$0x3]
    %v2701 = vld [vmem:[%s2695 + $0x28] sm:$0x3]
    %2702 = vmatprep.subr.mxu0 0.0
    %2703 = vmatpush1.msra.mxu0 %v45
    %2704 = vmatprep.subr.mxu0 0.0
    %2705 = vmatpush1.msra.mxu0 %v46
    %2706 = vmatprep.subr.mxu0 0.0
    %2707 = vmatpush1.msra.mxu0 %v47
    %2708 = vmatprep.subr.mxu0 0.0
    %2709 = vmatpush1.msra.mxu0 %v48
    %2710 = vmatprep.subr.mxu0 0.0
    %2711 = vmatpush1.msra.mxu0 %v49
    %2712 = vmatprep.subr.mxu0 0.0
    %2713 = vmatpush1.msra.mxu0 %v50
    %2714 = vmatprep.subr.mxu0 0.0
    %2715 = vmatpush1.msra.mxu0 %v51
    %2716 = vmatprep.subr.mxu0 0.0
    %2717 = vmatpush1.msra.mxu0 %v52
    %2718 = vmatprep.subr.mxu0 0.0
    %2719 = vmatpush1.msra.mxu0 %v53
    %2720 = vmatprep.subr.mxu0 0.0
    %2721 = vmatpush1.msra.mxu0 %v54
    %2722 = vmatprep.subr.mxu0 0.0
    %2723 = vmatpush1.msra.mxu0 %v55
    %2724 = vmatprep.subr.mxu0 0.0
    %2725 = vmatpush1.msra.mxu0 %v56
    %2726 = vmatprep.subr.mxu0 0.0
    %2727 = vmatpush1.msra.mxu0 %v57
    %2728 = vmatprep.subr.mxu0 0.0
    %2729 = vmatpush1.msra.mxu0 %v58
    %2730 = vmatprep.subr.mxu0 0.0
    %2731 = vmatpush1.msra.mxu0 %v59
    %2732 = vmatprep.subr.mxu0 0.0
    %2733 = vmatpush1.msra.mxu0 %v60
    %2734 = vmatprep.subr.mxu0 0.0
    %2735 = vmatpush1.msra.mxu0 %v61
    %2736 = vmatprep.subr.mxu0 0.0
    %2737 = vmatpush1.msra.mxu0 %v62
    %2738 = vmatprep.subr.mxu0 0.0
    %2739 = vmatpush1.msra.mxu0 %v63
    %2740 = vmatprep.subr.mxu0 0.0
    %2741 = vmatpush1.msra.mxu0 %v64
    %2742 = vmatprep.subr.mxu0 0.0
    %2743 = vmatpush1.msra.mxu0 %v65
    %2744 = vmatprep.subr.mxu0 0.0
    %2745 = vmatpush1.msra.mxu0 %v66
    %2746 = vmatprep.subr.mxu0 0.0
    %2747 = vmatpush1.msra.mxu0 %v67
    %2748 = vmatprep.subr.mxu0 0.0
    %2749 = vmatpush1.msra.mxu0 %v68
    %2750 = vmatprep.subr.mxu0 0.0
    %2751 = vmatpush1.msra.mxu0 %v69
    %2752 = vmatprep.subr.mxu0 0.0
    %2753 = vmatpush1.msra.mxu0 %v70
    %2754 = vmatprep.subr.mxu0 0.0
    %2755 = vmatpush1.msra.mxu0 %v71
    %2756 = vmatprep.subr.mxu0 0.0
    %2757 = vmatpush1.msra.mxu0 %v72
    %2758 = vmatprep.subr.mxu0 0.0
    %2759 = vmatpush1.msra.mxu0 %v73
    %2760 = vmatprep.subr.mxu0 0.0
    %2761 = vmatpush1.msra.mxu0 %v74
    %2762 = vmatprep.subr.mxu0 0.0
    %2763 = vmatpush1.msra.mxu0 %v75
    %2764 = vmatprep.subr.mxu0 0.0
    %2765 = vmatpush1.msra.mxu0 %v76
    %2766 = vmatprep.mubr.f32.mxu0 %v2697
    %2767 = vmatmul.mubr.f32.gmra.mrb[0].mxu0 %v2696
    %v2768 = vpop.f32.mrb[0].mxu0
    %v2769 = vadd.f32 %v88, %v2768
    %v2770 = vpop.f32.mrb[0].mxu0
    %2771 = vmatprep.mubr.f32.mxu0 %v2699
    %2772 = vmatmul.mubr.f32.gmra.mrb[0].mxu0 %v2698
    %v2773 = vpop.f32.mrb[0].mxu0
    %v2774 = vadd.f32 %v88, %v2773
    %v2775 = vpop.f32.mrb[0].mxu0
    %2776 = vmatprep.mubr.f32.mxu0 %v2701
    %2777 = vmatmul.mubr.f32.gmra.mrb[0].mxu0 %v2700
    %v2778 = vpop.f32.mrb[0].mxu0
    %v2779 = vadd.f32 %v88, %v2778
    %v2780 = vpop.f32.mrb[0].mxu0
    %2781 = vdwg.mxu0
    %v2782 = vmax.f32 %v2769, 0.0
    %v2783 = vmax.f32 %v2774, 0.0
    %v2784 = vmax.f32 %v2779, 0.0
    %s2785 = scalar_lea.vmem %s3, 448
    %v2786 = vld [vmem:[%s2785] sm:$0xff]
    %v2787 = vld [vmem:[%s2785 + $0x8] sm:$0xff]
    %v2788 = vld [vmem:[%s2785 + $0x10] sm:$0xff]
    %v2789 = vld [vmem:[%s2785 + $0x18] sm:$0xff]
    %v2791 = vsel %vm272, %v2782, 0
    %v2794 = vsel %vm272, %v2783, 0
    %v2797 = vsel %vm272, %v2784, 0
    %2799 = vmatprep.subr.mxu0 0.0
    %2800 = vmatpush1.msra.mxu0 %v2786
    %2801 = vmatprep.subr.mxu0 0.0
    %2802 = vmatpush1.msra.mxu0 %v2787
    %2803 = vmatprep.subr.mxu0 0.0
    %2804 = vmatpush1.msra.mxu0 %v2788
    %2805 = vmatprep.subr.mxu0 0.0
    %2806 = vmatpush1.msra.mxu0 %v2789
    %2807 = vmatprep.subr.mxu0 0.0
    %2808 = vmatpush1.msra.mxu0 0.0
    %2809 = vmatprep.subr.mxu0 0.0
    %2810 = vmatpush1.msra.mxu0 0.0
    %2811 = vmatprep.subr.mxu0 0.0
    %2812 = vmatpush1.msra.mxu0 0.0
    %2813 = vmatprep.subr.mxu0 0.0
    %2814 = vmatpush1.msra.mxu0 0.0
    %2815 = vmatprep.subr.mxu0 0.0
    %2816 = vmatpush1.msra.mxu0 0.0
    %2817 = vmatprep.subr.mxu0 0.0
    %2818 = vmatpush1.msra.mxu0 0.0
    %2819 = vmatprep.subr.mxu0 0.0
    %2820 = vmatpush1.msra.mxu0 0.0
    %2821 = vmatprep.subr.mxu0 0.0
    %2822 = vmatpush1.msra.mxu0 0.0
    %2823 = vmatprep.subr.mxu0 0.0
    %2824 = vmatpush1.msra.mxu0 0.0
    %2825 = vmatprep.subr.mxu0 0.0
    %2826 = vmatpush1.msra.mxu0 0.0
    %2827 = vmatprep.subr.mxu0 0.0
    %2828 = vmatpush1.msra.mxu0 0.0
    %2829 = vmatprep.subr.mxu0 0.0
    %2830 = vmatpush1.msra.mxu0 0.0
    %2831 = vmatprep.subr.mxu0 0.0
    %2832 = vmatpush1.msra.mxu0 0.0
    %2833 = vmatprep.subr.mxu0 0.0
    %2834 = vmatpush1.msra.mxu0 0.0
    %2835 = vmatprep.subr.mxu0 0.0
    %2836 = vmatpush1.msra.mxu0 0.0
    %2837 = vmatprep.subr.mxu0 0.0
    %2838 = vmatpush1.msra.mxu0 0.0
    %2839 = vmatprep.subr.mxu0 0.0
    %2840 = vmatpush1.msra.mxu0 0.0
    %2841 = vmatprep.subr.mxu0 0.0
    %2842 = vmatpush1.msra.mxu0 0.0
    %2843 = vmatprep.subr.mxu0 0.0
    %2844 = vmatpush1.msra.mxu0 0.0
    %2845 = vmatprep.subr.mxu0 0.0
    %2846 = vmatpush1.msra.mxu0 0.0
    %2847 = vmatprep.subr.mxu0 0.0
    %2848 = vmatpush1.msra.mxu0 0.0
    %2849 = vmatprep.subr.mxu0 0.0
    %2850 = vmatpush1.msra.mxu0 0.0
    %2851 = vmatprep.subr.mxu0 0.0
    %2852 = vmatpush1.msra.mxu0 0.0
    %2853 = vmatprep.subr.mxu0 0.0
    %2854 = vmatpush1.msra.mxu0 0.0
    %2855 = vmatprep.subr.mxu0 0.0
    %2856 = vmatpush1.msra.mxu0 0.0
    %2857 = vmatprep.subr.mxu0 0.0
    %2858 = vmatpush1.msra.mxu0 0.0
    %2859 = vmatprep.subr.mxu0 0.0
    %2860 = vmatpush1.msra.mxu0 0.0
    %2861 = vmatprep.subr.mxu0 0.0
    %2862 = vmatpush1.msra.mxu0 0.0
    %2863 = vmatprep.mubr.f32.mxu0 0.0
    %2864 = vmatmul.mubr.f32.gmra.mrb[0].mxu0 %v2791
    %v2865 = vpop.f32.mrb[0].mxu0
    %v2866 = vadd.f32 0.0, %v2865
    %v2867 = vpop.f32.mrb[0].mxu0
    %2868 = vmatprep.mubr.f32.mxu0 0.0
    %2869 = vmatmul.mubr.f32.gmra.mrb[0].mxu0 %v2794
    %v2870 = vpop.f32.mrb[0].mxu0
    %v2871 = vadd.f32 0.0, %v2870
    %v2872 = vpop.f32.mrb[0].mxu0
    %2873 = vmatprep.mubr.f32.mxu0 0.0
    %2874 = vmatmul.mubr.f32.gmra.mrb[0].mxu0 %v2797
    %v2875 = vpop.f32.mrb[0].mxu0
    %v2876 = vadd.f32 0.0, %v2875
    %v2877 = vpop.f32.mrb[0].mxu0
    %2878 = vdwg.mxu0
    %v2879 = vadd.f32 %v2692, %v2866
    %v2880 = vadd.f32 %v2693, %v2871
    %v2881 = vadd.f32 %v2694, %v2876
    %s2882 = scalar_lea.vmem %s0, 720
    %v2883 = vld [vmem:[%s2882] sm:$0xff]
    %v2884 = vld [vmem:[%s2882 + $0x8] sm:$0xff]
    %v2885 = vld [vmem:[%s2882 + $0x10] sm:$0xff]
    %v2886 = vld [vmem:[%s2882 + $0x18] sm:$0xff]
    %v2887 = vld [vmem:[%s2882 + $0x20] sm:$0x3]
    %v2888 = vld [vmem:[%s2882 + $0x28] sm:$0x3]
    %2889 = vmatprep.subr.mxu0 0.0
    %2890 = vmatpush1.msra.mxu0 %v45
    %2891 = vmatprep.subr.mxu0 0.0
    %2892 = vmatpush1.msra.mxu0 %v46
    %2893 = vmatprep.subr.mxu0 0.0
    %2894 = vmatpush1.msra.mxu0 %v47
    %2895 = vmatprep.subr.mxu0 0.0
    %2896 = vmatpush1.msra.mxu0 %v48
    %2897 = vmatprep.subr.mxu0 0.0
    %2898 = vmatpush1.msra.mxu0 %v49
    %2899 = vmatprep.subr.mxu0 0.0
    %2900 = vmatpush1.msra.mxu0 %v50
    %2901 = vmatprep.subr.mxu0 0.0
    %2902 = vmatpush1.msra.mxu0 %v51
    %2903 = vmatprep.subr.mxu0 0.0
    %2904 = vmatpush1.msra.mxu0 %v52
    %2905 = vmatprep.subr.mxu0 0.0
    %2906 = vmatpush1.msra.mxu0 %v53
    %2907 = vmatprep.subr.mxu0 0.0
    %2908 = vmatpush1.msra.mxu0 %v54
    %2909 = vmatprep.subr.mxu0 0.0
    %2910 = vmatpush1.msra.mxu0 %v55
    %2911 = vmatprep.subr.mxu0 0.0
    %2912 = vmatpush1.msra.mxu0 %v56
    %2913 = vmatprep.subr.mxu0 0.0
    %2914 = vmatpush1.msra.mxu0 %v57
    %2915 = vmatprep.subr.mxu0 0.0
    %2916 = vmatpush1.msra.mxu0 %v58
    %2917 = vmatprep.subr.mxu0 0.0
    %2918 = vmatpush1.msra.mxu0 %v59
    %2919 = vmatprep.subr.mxu0 0.0
    %2920 = vmatpush1.msra.mxu0 %v60
    %2921 = vmatprep.subr.mxu0 0.0
    %2922 = vmatpush1.msra.mxu0 %v61
    %2923 = vmatprep.subr.mxu0 0.0
    %2924 = vmatpush1.msra.mxu0 %v62
    %2925 = vmatprep.subr.mxu0 0.0
    %2926 = vmatpush1.msra.mxu0 %v63
    %2927 = vmatprep.subr.mxu0 0.0
    %2928 = vmatpush1.msra.mxu0 %v64
    %2929 = vmatprep.subr.mxu0 0.0
    %2930 = vmatpush1.msra.mxu0 %v65
    %2931 = vmatprep.subr.mxu0 0.0
    %2932 = vmatpush1.msra.mxu0 %v66
    %2933 = vmatprep.subr.mxu0 0.0
    %2934 = vmatpush1.msra.mxu0 %v67
    %2935 = vmatprep.subr.mxu0 0.0
    %2936 = vmatpush1.msra.mxu0 %v68
    %2937 = vmatprep.subr.mxu0 0.0
    %2938 = vmatpush1.msra.mxu0 %v69
    %2939 = vmatprep.subr.mxu0 0.0
    %2940 = vmatpush1.msra.mxu0 %v70
    %2941 = vmatprep.subr.mxu0 0.0
    %2942 = vmatpush1.msra.mxu0 %v71
    %2943 = vmatprep.subr.mxu0 0.0
    %2944 = vmatpush1.msra.mxu0 %v72
    %2945 = vmatprep.subr.mxu0 0.0
    %2946 = vmatpush1.msra.mxu0 %v73
    %2947 = vmatprep.subr.mxu0 0.0
    %2948 = vmatpush1.msra.mxu0 %v74
    %2949 = vmatprep.subr.mxu0 0.0
    %2950 = vmatpush1.msra.mxu0 %v75
    %2951 = vmatprep.subr.mxu0 0.0
    %2952 = vmatpush1.msra.mxu0 %v76
    %2953 = vmatprep.mubr.f32.mxu0 %v2884
    %2954 = vmatmul.mubr.f32.gmra.mrb[0].mxu0 %v2883
    %v2955 = vpop.f32.mrb[0].mxu0
    %v2956 = vadd.f32 %v88, %v2955
    %v2957 = vpop.f32.mrb[0].mxu0
    %2958 = vmatprep.mubr.f32.mxu0 %v2886
    %2959 = vmatmul.mubr.f32.gmra.mrb[0].mxu0 %v2885
    %v2960 = vpop.f32.mrb[0].mxu0
    %v2961 = vadd.f32 %v88, %v2960
    %v2962 = vpop.f32.mrb[0].mxu0
    %2963 = vmatprep.mubr.f32.mxu0 %v2888
    %2964 = vmatmul.mubr.f32.gmra.mrb[0].mxu0 %v2887
    %v2965 = vpop.f32.mrb[0].mxu0
    %v2966 = vadd.f32 %v88, %v2965
    %v2967 = vpop.f32.mrb[0].mxu0
    %2968 = vdwg.mxu0
    %v2969 = vmax.f32 %v2956, 0.0
    %v2970 = vmax.f32 %v2961, 0.0
    %v2971 = vmax.f32 %v2966, 0.0
    %s2972 = scalar_lea.vmem %s3, 480
    %v2973 = vld [vmem:[%s2972] sm:$0xff]
    %v2974 = vld [vmem:[%s2972 + $0x8] sm:$0xff]
    %v2975 = vld [vmem:[%s2972 + $0x10] sm:$0xff]
    %v2976 = vld [vmem:[%s2972 + $0x18] sm:$0xff]
    %v2978 = vsel %vm272, %v2969, 0
    %v2981 = vsel %vm272, %v2970, 0
    %v2984 = vsel %vm272, %v2971, 0
    %2986 = vmatprep.subr.mxu0 0.0
    %2987 = vmatpush1.msra.mxu0 %v2973
    %2988 = vmatprep.subr.mxu0 0.0
    %2989 = vmatpush1.msra.mxu0 %v2974
    %2990 = vmatprep.subr.mxu0 0.0
    %2991 = vmatpush1.msra.mxu0 %v2975
    %2992 = vmatprep.subr.mxu0 0.0
    %2993 = vmatpush1.msra.mxu0 %v2976
    %2994 = vmatprep.subr.mxu0 0.0
    %2995 = vmatpush1.msra.mxu0 0.0
    %2996 = vmatprep.subr.mxu0 0.0
    %2997 = vmatpush1.msra.mxu0 0.0
    %2998 = vmatprep.subr.mxu0 0.0
    %2999 = vmatpush1.msra.mxu0 0.0
    %3000 = vmatprep.subr.mxu0 0.0
    %3001 = vmatpush1.msra.mxu0 0.0
    %3002 = vmatprep.subr.mxu0 0.0
    %3003 = vmatpush1.msra.mxu0 0.0
    %3004 = vmatprep.subr.mxu0 0.0
    %3005 = vmatpush1.msra.mxu0 0.0
    %3006 = vmatprep.subr.mxu0 0.0
    %3007 = vmatpush1.msra.mxu0 0.0
    %3008 = vmatprep.subr.mxu0 0.0
    %3009 = vmatpush1.msra.mxu0 0.0
    %3010 = vmatprep.subr.mxu0 0.0
    %3011 = vmatpush1.msra.mxu0 0.0
    %3012 = vmatprep.subr.mxu0 0.0
    %3013 = vmatpush1.msra.mxu0 0.0
    %3014 = vmatprep.subr.mxu0 0.0
    %3015 = vmatpush1.msra.mxu0 0.0
    %3016 = vmatprep.subr.mxu0 0.0
    %3017 = vmatpush1.msra.mxu0 0.0
    %3018 = vmatprep.subr.mxu0 0.0
    %3019 = vmatpush1.msra.mxu0 0.0
    %3020 = vmatprep.subr.mxu0 0.0
    %3021 = vmatpush1.msra.mxu0 0.0
    %3022 = vmatprep.subr.mxu0 0.0
    %3023 = vmatpush1.msra.mxu0 0.0
    %3024 = vmatprep.subr.mxu0 0.0
    %3025 = vmatpush1.msra.mxu0 0.0
    %3026 = vmatprep.subr.mxu0 0.0
    %3027 = vmatpush1.msra.mxu0 0.0
    %3028 = vmatprep.subr.mxu0 0.0
    %3029 = vmatpush1.msra.mxu0 0.0
    %3030 = vmatprep.subr.mxu0 0.0
    %3031 = vmatpush1.msra.mxu0 0.0
    %3032 = vmatprep.subr.mxu0 0.0
    %3033 = vmatpush1.msra.mxu0 0.0
    %3034 = vmatprep.subr.mxu0 0.0
    %3035 = vmatpush1.msra.mxu0 0.0
    %3036 = vmatprep.subr.mxu0 0.0
    %3037 = vmatpush1.msra.mxu0 0.0
    %3038 = vmatprep.subr.mxu0 0.0
    %3039 = vmatpush1.msra.mxu0 0.0
    %3040 = vmatprep.subr.mxu0 0.0
    %3041 = vmatpush1.msra.mxu0 0.0
    %3042 = vmatprep.subr.mxu0 0.0
    %3043 = vmatpush1.msra.mxu0 0.0
    %3044 = vmatprep.subr.mxu0 0.0
    %3045 = vmatpush1.msra.mxu0 0.0
    %3046 = vmatprep.subr.mxu0 0.0
    %3047 = vmatpush1.msra.mxu0 0.0
    %3048 = vmatprep.subr.mxu0 0.0
    %3049 = vmatpush1.msra.mxu0 0.0
    %3050 = vmatprep.mubr.f32.mxu0 0.0
    %3051 = vmatmul.mubr.f32.gmra.mrb[0].mxu0 %v2978
    %v3052 = vpop.f32.mrb[0].mxu0
    %v3053 = vadd.f32 0.0, %v3052
    %v3054 = vpop.f32.mrb[0].mxu0
    %3055 = vmatprep.mubr.f32.mxu0 0.0
    %3056 = vmatmul.mubr.f32.gmra.mrb[0].mxu0 %v2981
    %v3057 = vpop.f32.mrb[0].mxu0
    %v3058 = vadd.f32 0.0, %v3057
    %v3059 = vpop.f32.mrb[0].mxu0
    %3060 = vmatprep.mubr.f32.mxu0 0.0
    %3061 = vmatmul.mubr.f32.gmra.mrb[0].mxu0 %v2984
    %v3062 = vpop.f32.mrb[0].mxu0
    %v3063 = vadd.f32 0.0, %v3062
    %v3064 = vpop.f32.mrb[0].mxu0
    %3065 = vdwg.mxu0
    %v3066 = vadd.f32 %v2879, %v3053
    %v3067 = vadd.f32 %v2880, %v3058
    %v3068 = vadd.f32 %v2881, %v3063
    %v3069 = vld [vmem:[%s4] sm:$0x1]
    %v3071 = vlaneseq
    %v3072 = vshrl.u32 %v3071, 7
    %v3073 = vsub.s32 0, %v3072
    %v3074 = vrot.slane %v3069, %v3073
    %v3076 = vadd.f32 %v3066, %v3074
    %v3077 = vadd.f32 %v3067, %v3074
    %v3078 = vadd.f32 %v3068, %v3074
    %v3079 = vmax.f32 %v3076, 0.0
    %v3080 = vmax.f32 %v3077, 0.0
    %v3081 = vmax.f32 %v3078, 0.0
    %vm3082 = vcmask 523264
    %3083 = vst.msk [vmem:[#allocation2] sm:$0xff] %vm3082, %v3079
    %3084 = vst.msk [vmem:[#allocation2 + $0x8] sm:$0xff] %vm3082, %v3080
    %vm3085 = vcmask 517120
    %3086 = vst.msk [vmem:[#allocation2 + $0x10] sm:$0x3] %vm3085, %v3081
    %v3087 = vld [vmem:[#allocation2] sm:$0x3]
    %v3088 = vld [vmem:[%s5] sm:$0xff]
    %v3089 = vld [vmem:[%s5 + $0x8] sm:$0xff]
    %v3090 = vld [vmem:[%s5 + $0x10] sm:$0xff]
    %v3091 = vld [vmem:[%s5 + $0x18] sm:$0xff]
    %v3092 = vld [vmem:[%s5 + $0x20] sm:$0xff]
    %v3093 = vld [vmem:[%s5 + $0x28] sm:$0xff]
    %v3094 = vld [vmem:[%s5 + $0x30] sm:$0xff]
    %v3095 = vld [vmem:[%s5 + $0x38] sm:$0xff]
    %v3096 = vld [vmem:[#allocation2 + $0x2] sm:$0x3]
    %s3097 = scalar_lea.vmem %s5, 64
    %v3098 = vld [vmem:[%s3097] sm:$0xff]
    %v3099 = vld [vmem:[%s3097 + $0x8] sm:$0xff]
    %v3100 = vld [vmem:[%s3097 + $0x10] sm:$0xff]
    %v3101 = vld [vmem:[%s3097 + $0x18] sm:$0xff]
    %v3102 = vld [vmem:[%s3097 + $0x20] sm:$0xff]
    %v3103 = vld [vmem:[%s3097 + $0x28] sm:$0xff]
    %v3104 = vld [vmem:[%s3097 + $0x30] sm:$0xff]
    %v3105 = vld [vmem:[%s3097 + $0x38] sm:$0xff]
    %v3107 = vsel %vm3082, %v3096, 0
    %3109 = vmatprep.subr.mxu0 0.0
    %3110 = vmatpush1.msra.mxu0 %v3098
    %3111 = vmatprep.subr.mxu0 0.0
    %3112 = vmatpush1.msra.mxu0 %v3099
    %3113 = vmatprep.subr.mxu0 0.0
    %3114 = vmatpush1.msra.mxu0 %v3100
    %3115 = vmatprep.subr.mxu0 0.0
    %3116 = vmatpush1.msra.mxu0 %v3101
    %3117 = vmatprep.subr.mxu0 0.0
    %3118 = vmatpush1.msra.mxu0 %v3102
    %3119 = vmatprep.subr.mxu0 0.0
    %3120 = vmatpush1.msra.mxu0 %v3103
    %3121 = vmatprep.subr.mxu0 0.0
    %3122 = vmatpush1.msra.mxu0 %v3104
    %3123 = vmatprep.subr.mxu0 0.0
    %3124 = vmatpush1.msra.mxu0 %v3105
    %3125 = vmatprep.subr.mxu0 0.0
    %3126 = vmatpush1.msra.mxu0 0.0
    %3127 = vmatprep.subr.mxu0 0.0
    %3128 = vmatpush1.msra.mxu0 0.0
    %3129 = vmatprep.subr.mxu0 0.0
    %3130 = vmatpush1.msra.mxu0 0.0
    %3131 = vmatprep.subr.mxu0 0.0
    %3132 = vmatpush1.msra.mxu0 0.0
    %3133 = vmatprep.subr.mxu0 0.0
    %3134 = vmatpush1.msra.mxu0 0.0
    %3135 = vmatprep.subr.mxu0 0.0
    %3136 = vmatpush1.msra.mxu0 0.0
    %3137 = vmatprep.subr.mxu0 0.0
    %3138 = vmatpush1.msra.mxu0 0.0
    %3139 = vmatprep.subr.mxu0 0.0
    %3140 = vmatpush1.msra.mxu0 0.0
    %3141 = vmatprep.subr.mxu0 0.0
    %3142 = vmatpush1.msra.mxu0 0.0
    %3143 = vmatprep.subr.mxu0 0.0
    %3144 = vmatpush1.msra.mxu0 0.0
    %3145 = vmatprep.subr.mxu0 0.0
    %3146 = vmatpush1.msra.mxu0 0.0
    %3147 = vmatprep.subr.mxu0 0.0
    %3148 = vmatpush1.msra.mxu0 0.0
    %3149 = vmatprep.subr.mxu0 0.0
    %3150 = vmatpush1.msra.mxu0 0.0
    %3151 = vmatprep.subr.mxu0 0.0
    %3152 = vmatpush1.msra.mxu0 0.0
    %3153 = vmatprep.subr.mxu0 0.0
    %3154 = vmatpush1.msra.mxu0 0.0
    %3155 = vmatprep.subr.mxu0 0.0
    %3156 = vmatpush1.msra.mxu0 0.0
    %3157 = vmatprep.subr.mxu0 0.0
    %3158 = vmatpush1.msra.mxu0 0.0
    %3159 = vmatprep.subr.mxu0 0.0
    %3160 = vmatpush1.msra.mxu0 0.0
    %3161 = vmatprep.subr.mxu0 0.0
    %3162 = vmatpush1.msra.mxu0 0.0
    %3163 = vmatprep.subr.mxu0 0.0
    %3164 = vmatpush1.msra.mxu0 0.0
    %3165 = vmatprep.subr.mxu0 0.0
    %3166 = vmatpush1.msra.mxu0 0.0
    %3167 = vmatprep.subr.mxu0 0.0
    %3168 = vmatpush1.msra.mxu0 0.0
    %3169 = vmatprep.subr.mxu0 0.0
    %3170 = vmatpush1.msra.mxu0 0.0
    %3171 = vmatprep.subr.mxu0 0.0
    %3172 = vmatpush1.msra.mxu0 0.0
    %3173 = vmatprep.mubr.f32.mxu0 0.0
    %3174 = vmatmul.mubr.f32.gmra.mrb[0].mxu0 %v3107
    %v3175 = vpop.f32.mrb[0].mxu0
    %v3176 = vadd.f32 0.0, %v3175
    %v3177 = vpop.f32.mrb[0].mxu0
    %3178 = vdwg.mxu0
    %v3180 = vsel %vm3082, %v3087, 0
    %3182 = vmatprep.subr.mxu0 0.0
    %3183 = vmatpush1.msra.mxu0 %v3088
    %3184 = vmatprep.subr.mxu0 0.0
    %3185 = vmatpush1.msra.mxu0 %v3089
    %3186 = vmatprep.subr.mxu0 0.0
    %3187 = vmatpush1.msra.mxu0 %v3090
    %3188 = vmatprep.subr.mxu0 0.0
    %3189 = vmatpush1.msra.mxu0 %v3091
    %3190 = vmatprep.subr.mxu0 0.0
    %3191 = vmatpush1.msra.mxu0 %v3092
    %3192 = vmatprep.subr.mxu0 0.0
    %3193 = vmatpush1.msra.mxu0 %v3093
    %3194 = vmatprep.subr.mxu0 0.0
    %3195 = vmatpush1.msra.mxu0 %v3094
    %3196 = vmatprep.subr.mxu0 0.0
    %3197 = vmatpush1.msra.mxu0 %v3095
    %3198 = vmatprep.subr.mxu0 0.0
    %3199 = vmatpush1.msra.mxu0 0.0
    %3200 = vmatprep.subr.mxu0 0.0
    %3201 = vmatpush1.msra.mxu0 0.0
    %3202 = vmatprep.subr.mxu0 0.0
    %3203 = vmatpush1.msra.mxu0 0.0
    %3204 = vmatprep.subr.mxu0 0.0
    %3205 = vmatpush1.msra.mxu0 0.0
    %3206 = vmatprep.subr.mxu0 0.0
    %3207 = vmatpush1.msra.mxu0 0.0
    %3208 = vmatprep.subr.mxu0 0.0
    %3209 = vmatpush1.msra.mxu0 0.0
    %3210 = vmatprep.subr.mxu0 0.0
    %3211 = vmatpush1.msra.mxu0 0.0
    %3212 = vmatprep.subr.mxu0 0.0
    %3213 = vmatpush1.msra.mxu0 0.0
    %3214 = vmatprep.subr.mxu0 0.0
    %3215 = vmatpush1.msra.mxu0 0.0
    %3216 = vmatprep.subr.mxu0 0.0
    %3217 = vmatpush1.msra.mxu0 0.0
    %3218 = vmatprep.subr.mxu0 0.0
    %3219 = vmatpush1.msra.mxu0 0.0
    %3220 = vmatprep.subr.mxu0 0.0
    %3221 = vmatpush1.msra.mxu0 0.0
    %3222 = vmatprep.subr.mxu0 0.0
    %3223 = vmatpush1.msra.mxu0 0.0
    %3224 = vmatprep.subr.mxu0 0.0
    %3225 = vmatpush1.msra.mxu0 0.0
    %3226 = vmatprep.subr.mxu0 0.0
    %3227 = vmatpush1.msra.mxu0 0.0
    %3228 = vmatprep.subr.mxu0 0.0
    %3229 = vmatpush1.msra.mxu0 0.0
    %3230 = vmatprep.subr.mxu0 0.0
    %3231 = vmatpush1.msra.mxu0 0.0
    %3232 = vmatprep.subr.mxu0 0.0
    %3233 = vmatpush1.msra.mxu0 0.0
    %3234 = vmatprep.subr.mxu0 0.0
    %3235 = vmatpush1.msra.mxu0 0.0
    %3236 = vmatprep.subr.mxu0 0.0
    %3237 = vmatpush1.msra.mxu0 0.0
    %3238 = vmatprep.subr.mxu0 0.0
    %3239 = vmatpush1.msra.mxu0 0.0
    %3240 = vmatprep.subr.mxu0 0.0
    %3241 = vmatpush1.msra.mxu0 0.0
    %3242 = vmatprep.subr.mxu0 0.0
    %3243 = vmatpush1.msra.mxu0 0.0
    %3244 = vmatprep.subr.mxu0 0.0
    %3245 = vmatpush1.msra.mxu0 0.0
    %3246 = vmatprep.mubr.f32.mxu0 0.0
    %3247 = vmatmul.mubr.f32.gmra.mrb[0].mxu0 %v3180
    %v3248 = vpop.f32.mrb[0].mxu0
    %v3249 = vadd.f32 %v3176, %v3248
    %v3250 = vpop.f32.mrb[0].mxu0
    %3251 = vdwg.mxu0
    %v3252 = vld [vmem:[#allocation2 + $0x4] sm:$0x3]
    %s3253 = scalar_lea.vmem %s5, 128
    %v3254 = vld [vmem:[%s3253] sm:$0xff]
    %v3255 = vld [vmem:[%s3253 + $0x8] sm:$0xff]
    %v3256 = vld [vmem:[%s3253 + $0x10] sm:$0xff]
    %v3257 = vld [vmem:[%s3253 + $0x18] sm:$0xff]
    %v3258 = vld [vmem:[%s3253 + $0x20] sm:$0xff]
    %v3259 = vld [vmem:[%s3253 + $0x28] sm:$0xff]
    %v3260 = vld [vmem:[%s3253 + $0x30] sm:$0xff]
    %v3261 = vld [vmem:[%s3253 + $0x38] sm:$0xff]
    %v3263 = vsel %vm3082, %v3252, 0
    %3265 = vmatprep.subr.mxu0 0.0
    %3266 = vmatpush1.msra.mxu0 %v3254
    %3267 = vmatprep.subr.mxu0 0.0
    %3268 = vmatpush1.msra.mxu0 %v3255
    %3269 = vmatprep.subr.mxu0 0.0
    %3270 = vmatpush1.msra.mxu0 %v3256
    %3271 = vmatprep.subr.mxu0 0.0
    %3272 = vmatpush1.msra.mxu0 %v3257
    %3273 = vmatprep.subr.mxu0 0.0
    %3274 = vmatpush1.msra.mxu0 %v3258
    %3275 = vmatprep.subr.mxu0 0.0
    %3276 = vmatpush1.msra.mxu0 %v3259
    %3277 = vmatprep.subr.mxu0 0.0
    %3278 = vmatpush1.msra.mxu0 %v3260
    %3279 = vmatprep.subr.mxu0 0.0
    %3280 = vmatpush1.msra.mxu0 %v3261
    %3281 = vmatprep.subr.mxu0 0.0
    %3282 = vmatpush1.msra.mxu0 0.0
    %3283 = vmatprep.subr.mxu0 0.0
    %3284 = vmatpush1.msra.mxu0 0.0
    %3285 = vmatprep.subr.mxu0 0.0
    %3286 = vmatpush1.msra.mxu0 0.0
    %3287 = vmatprep.subr.mxu0 0.0
    %3288 = vmatpush1.msra.mxu0 0.0
    %3289 = vmatprep.subr.mxu0 0.0
    %3290 = vmatpush1.msra.mxu0 0.0
    %3291 = vmatprep.subr.mxu0 0.0
    %3292 = vmatpush1.msra.mxu0 0.0
    %3293 = vmatprep.subr.mxu0 0.0
    %3294 = vmatpush1.msra.mxu0 0.0
    %3295 = vmatprep.subr.mxu0 0.0
    %3296 = vmatpush1.msra.mxu0 0.0
    %3297 = vmatprep.subr.mxu0 0.0
    %3298 = vmatpush1.msra.mxu0 0.0
    %3299 = vmatprep.subr.mxu0 0.0
    %3300 = vmatpush1.msra.mxu0 0.0
    %3301 = vmatprep.subr.mxu0 0.0
    %3302 = vmatpush1.msra.mxu0 0.0
    %3303 = vmatprep.subr.mxu0 0.0
    %3304 = vmatpush1.msra.mxu0 0.0
    %3305 = vmatprep.subr.mxu0 0.0
    %3306 = vmatpush1.msra.mxu0 0.0
    %3307 = vmatprep.subr.mxu0 0.0
    %3308 = vmatpush1.msra.mxu0 0.0
    %3309 = vmatprep.subr.mxu0 0.0
    %3310 = vmatpush1.msra.mxu0 0.0
    %3311 = vmatprep.subr.mxu0 0.0
    %3312 = vmatpush1.msra.mxu0 0.0
    %3313 = vmatprep.subr.mxu0 0.0
    %3314 = vmatpush1.msra.mxu0 0.0
    %3315 = vmatprep.subr.mxu0 0.0
    %3316 = vmatpush1.msra.mxu0 0.0
    %3317 = vmatprep.subr.mxu0 0.0
    %3318 = vmatpush1.msra.mxu0 0.0
    %3319 = vmatprep.subr.mxu0 0.0
    %3320 = vmatpush1.msra.mxu0 0.0
    %3321 = vmatprep.subr.mxu0 0.0
    %3322 = vmatpush1.msra.mxu0 0.0
    %3323 = vmatprep.subr.mxu0 0.0
    %3324 = vmatpush1.msra.mxu0 0.0
    %3325 = vmatprep.subr.mxu0 0.0
    %3326 = vmatpush1.msra.mxu0 0.0
    %3327 = vmatprep.subr.mxu0 0.0
    %3328 = vmatpush1.msra.mxu0 0.0
    %3329 = vmatprep.mubr.f32.mxu0 0.0
    %3330 = vmatmul.mubr.f32.gmra.mrb[0].mxu0 %v3263
    %v3331 = vpop.f32.mrb[0].mxu0
    %v3332 = vadd.f32 0.0, %v3331
    %v3333 = vpop.f32.mrb[0].mxu0
    %3334 = vdwg.mxu0
    %v3335 = vadd.f32 %v3249, %v3332
    %v3336 = vld [vmem:[#allocation2 + $0x6] sm:$0x3]
    %s3337 = scalar_lea.vmem %s5, 192
    %v3338 = vld [vmem:[%s3337] sm:$0xff]
    %v3339 = vld [vmem:[%s3337 + $0x8] sm:$0xff]
    %v3340 = vld [vmem:[%s3337 + $0x10] sm:$0xff]
    %v3341 = vld [vmem:[%s3337 + $0x18] sm:$0xff]
    %v3342 = vld [vmem:[%s3337 + $0x20] sm:$0xff]
    %v3343 = vld [vmem:[%s3337 + $0x28] sm:$0xff]
    %v3344 = vld [vmem:[%s3337 + $0x30] sm:$0xff]
    %v3345 = vld [vmem:[%s3337 + $0x38] sm:$0xff]
    %v3347 = vsel %vm3082, %v3336, 0
    %3349 = vmatprep.subr.mxu0 0.0
    %3350 = vmatpush1.msra.mxu0 %v3338
    %3351 = vmatprep.subr.mxu0 0.0
    %3352 = vmatpush1.msra.mxu0 %v3339
    %3353 = vmatprep.subr.mxu0 0.0
    %3354 = vmatpush1.msra.mxu0 %v3340
    %3355 = vmatprep.subr.mxu0 0.0
    %3356 = vmatpush1.msra.mxu0 %v3341
    %3357 = vmatprep.subr.mxu0 0.0
    %3358 = vmatpush1.msra.mxu0 %v3342
    %3359 = vmatprep.subr.mxu0 0.0
    %3360 = vmatpush1.msra.mxu0 %v3343
    %3361 = vmatprep.subr.mxu0 0.0
    %3362 = vmatpush1.msra.mxu0 %v3344
    %3363 = vmatprep.subr.mxu0 0.0
    %3364 = vmatpush1.msra.mxu0 %v3345
    %3365 = vmatprep.subr.mxu0 0.0
    %3366 = vmatpush1.msra.mxu0 0.0
    %3367 = vmatprep.subr.mxu0 0.0
    %3368 = vmatpush1.msra.mxu0 0.0
    %3369 = vmatprep.subr.mxu0 0.0
    %3370 = vmatpush1.msra.mxu0 0.0
    %3371 = vmatprep.subr.mxu0 0.0
    %3372 = vmatpush1.msra.mxu0 0.0
    %3373 = vmatprep.subr.mxu0 0.0
    %3374 = vmatpush1.msra.mxu0 0.0
    %3375 = vmatprep.subr.mxu0 0.0
    %3376 = vmatpush1.msra.mxu0 0.0
    %3377 = vmatprep.subr.mxu0 0.0
    %3378 = vmatpush1.msra.mxu0 0.0
    %3379 = vmatprep.subr.mxu0 0.0
    %3380 = vmatpush1.msra.mxu0 0.0
    %3381 = vmatprep.subr.mxu0 0.0
    %3382 = vmatpush1.msra.mxu0 0.0
    %3383 = vmatprep.subr.mxu0 0.0
    %3384 = vmatpush1.msra.mxu0 0.0
    %3385 = vmatprep.subr.mxu0 0.0
    %3386 = vmatpush1.msra.mxu0 0.0
    %3387 = vmatprep.subr.mxu0 0.0
    %3388 = vmatpush1.msra.mxu0 0.0
    %3389 = vmatprep.subr.mxu0 0.0
    %3390 = vmatpush1.msra.mxu0 0.0
    %3391 = vmatprep.subr.mxu0 0.0
    %3392 = vmatpush1.msra.mxu0 0.0
    %3393 = vmatprep.subr.mxu0 0.0
    %3394 = vmatpush1.msra.mxu0 0.0
    %3395 = vmatprep.subr.mxu0 0.0
    %3396 = vmatpush1.msra.mxu0 0.0
    %3397 = vmatprep.subr.mxu0 0.0
    %3398 = vmatpush1.msra.mxu0 0.0
    %3399 = vmatprep.subr.mxu0 0.0
    %3400 = vmatpush1.msra.mxu0 0.0
    %3401 = vmatprep.subr.mxu0 0.0
    %3402 = vmatpush1.msra.mxu0 0.0
    %3403 = vmatprep.subr.mxu0 0.0
    %3404 = vmatpush1.msra.mxu0 0.0
    %3405 = vmatprep.subr.mxu0 0.0
    %3406 = vmatpush1.msra.mxu0 0.0
    %3407 = vmatprep.subr.mxu0 0.0
    %3408 = vmatpush1.msra.mxu0 0.0
    %3409 = vmatprep.subr.mxu0 0.0
    %3410 = vmatpush1.msra.mxu0 0.0
    %3411 = vmatprep.subr.mxu0 0.0
    %3412 = vmatpush1.msra.mxu0 0.0
    %3413 = vmatprep.mubr.f32.mxu0 0.0
    %3414 = vmatmul.mubr.f32.gmra.mrb[0].mxu0 %v3347
    %v3415 = vpop.f32.mrb[0].mxu0
    %v3416 = vadd.f32 0.0, %v3415
    %v3417 = vpop.f32.mrb[0].mxu0
    %3418 = vdwg.mxu0
    %v3419 = vadd.f32 %v3335, %v3416
    %v3420 = vld [vmem:[#allocation2 + $0x8] sm:$0x3]
    %s3421 = scalar_lea.vmem %s5, 256
    %v3422 = vld [vmem:[%s3421] sm:$0xff]
    %v3423 = vld [vmem:[%s3421 + $0x8] sm:$0xff]
    %v3424 = vld [vmem:[%s3421 + $0x10] sm:$0xff]
    %v3425 = vld [vmem:[%s3421 + $0x18] sm:$0xff]
    %v3426 = vld [vmem:[%s3421 + $0x20] sm:$0xff]
    %v3427 = vld [vmem:[%s3421 + $0x28] sm:$0xff]
    %v3428 = vld [vmem:[%s3421 + $0x30] sm:$0xff]
    %v3429 = vld [vmem:[%s3421 + $0x38] sm:$0xff]
    %v3431 = vsel %vm3082, %v3420, 0
    %3433 = vmatprep.subr.mxu0 0.0
    %3434 = vmatpush1.msra.mxu0 %v3422
    %3435 = vmatprep.subr.mxu0 0.0
    %3436 = vmatpush1.msra.mxu0 %v3423
    %3437 = vmatprep.subr.mxu0 0.0
    %3438 = vmatpush1.msra.mxu0 %v3424
    %3439 = vmatprep.subr.mxu0 0.0
    %3440 = vmatpush1.msra.mxu0 %v3425
    %3441 = vmatprep.subr.mxu0 0.0
    %3442 = vmatpush1.msra.mxu0 %v3426
    %3443 = vmatprep.subr.mxu0 0.0
    %3444 = vmatpush1.msra.mxu0 %v3427
    %3445 = vmatprep.subr.mxu0 0.0
    %3446 = vmatpush1.msra.mxu0 %v3428
    %3447 = vmatprep.subr.mxu0 0.0
    %3448 = vmatpush1.msra.mxu0 %v3429
    %3449 = vmatprep.subr.mxu0 0.0
    %3450 = vmatpush1.msra.mxu0 0.0
    %3451 = vmatprep.subr.mxu0 0.0
    %3452 = vmatpush1.msra.mxu0 0.0
    %3453 = vmatprep.subr.mxu0 0.0
    %3454 = vmatpush1.msra.mxu0 0.0
    %3455 = vmatprep.subr.mxu0 0.0
    %3456 = vmatpush1.msra.mxu0 0.0
    %3457 = vmatprep.subr.mxu0 0.0
    %3458 = vmatpush1.msra.mxu0 0.0
    %3459 = vmatprep.subr.mxu0 0.0
    %3460 = vmatpush1.msra.mxu0 0.0
    %3461 = vmatprep.subr.mxu0 0.0
    %3462 = vmatpush1.msra.mxu0 0.0
    %3463 = vmatprep.subr.mxu0 0.0
    %3464 = vmatpush1.msra.mxu0 0.0
    %3465 = vmatprep.subr.mxu0 0.0
    %3466 = vmatpush1.msra.mxu0 0.0
    %3467 = vmatprep.subr.mxu0 0.0
    %3468 = vmatpush1.msra.mxu0 0.0
    %3469 = vmatprep.subr.mxu0 0.0
    %3470 = vmatpush1.msra.mxu0 0.0
    %3471 = vmatprep.subr.mxu0 0.0
    %3472 = vmatpush1.msra.mxu0 0.0
    %3473 = vmatprep.subr.mxu0 0.0
    %3474 = vmatpush1.msra.mxu0 0.0
    %3475 = vmatprep.subr.mxu0 0.0
    %3476 = vmatpush1.msra.mxu0 0.0
    %3477 = vmatprep.subr.mxu0 0.0
    %3478 = vmatpush1.msra.mxu0 0.0
    %3479 = vmatprep.subr.mxu0 0.0
    %3480 = vmatpush1.msra.mxu0 0.0
    %3481 = vmatprep.subr.mxu0 0.0
    %3482 = vmatpush1.msra.mxu0 0.0
    %3483 = vmatprep.subr.mxu0 0.0
    %3484 = vmatpush1.msra.mxu0 0.0
    %3485 = vmatprep.subr.mxu0 0.0
    %3486 = vmatpush1.msra.mxu0 0.0
    %3487 = vmatprep.subr.mxu0 0.0
    %3488 = vmatpush1.msra.mxu0 0.0
    %3489 = vmatprep.subr.mxu0 0.0
    %3490 = vmatpush1.msra.mxu0 0.0
    %3491 = vmatprep.subr.mxu0 0.0
    %3492 = vmatpush1.msra.mxu0 0.0
    %3493 = vmatprep.subr.mxu0 0.0
    %3494 = vmatpush1.msra.mxu0 0.0
    %3495 = vmatprep.subr.mxu0 0.0
    %3496 = vmatpush1.msra.mxu0 0.0
    %3497 = vmatprep.mubr.f32.mxu0 0.0
    %3498 = vmatmul.mubr.f32.gmra.mrb[0].mxu0 %v3431
    %v3499 = vpop.f32.mrb[0].mxu0
    %v3500 = vadd.f32 0.0, %v3499
    %v3501 = vpop.f32.mrb[0].mxu0
    %3502 = vdwg.mxu0
    %v3503 = vadd.f32 %v3419, %v3500
    %v3504 = vld [vmem:[#allocation2 + $0xa] sm:$0x3]
    %s3505 = scalar_lea.vmem %s5, 320
    %v3506 = vld [vmem:[%s3505] sm:$0xff]
    %v3507 = vld [vmem:[%s3505 + $0x8] sm:$0xff]
    %v3508 = vld [vmem:[%s3505 + $0x10] sm:$0xff]
    %v3509 = vld [vmem:[%s3505 + $0x18] sm:$0xff]
    %v3510 = vld [vmem:[%s3505 + $0x20] sm:$0xff]
    %v3511 = vld [vmem:[%s3505 + $0x28] sm:$0xff]
    %v3512 = vld [vmem:[%s3505 + $0x30] sm:$0xff]
    %v3513 = vld [vmem:[%s3505 + $0x38] sm:$0xff]
    %v3515 = vsel %vm3082, %v3504, 0
    %3517 = vmatprep.subr.mxu0 0.0
    %3518 = vmatpush1.msra.mxu0 %v3506
    %3519 = vmatprep.subr.mxu0 0.0
    %3520 = vmatpush1.msra.mxu0 %v3507
    %3521 = vmatprep.subr.mxu0 0.0
    %3522 = vmatpush1.msra.mxu0 %v3508
    %3523 = vmatprep.subr.mxu0 0.0
    %3524 = vmatpush1.msra.mxu0 %v3509
    %3525 = vmatprep.subr.mxu0 0.0
    %3526 = vmatpush1.msra.mxu0 %v3510
    %3527 = vmatprep.subr.mxu0 0.0
    %3528 = vmatpush1.msra.mxu0 %v3511
    %3529 = vmatprep.subr.mxu0 0.0
    %3530 = vmatpush1.msra.mxu0 %v3512
    %3531 = vmatprep.subr.mxu0 0.0
    %3532 = vmatpush1.msra.mxu0 %v3513
    %3533 = vmatprep.subr.mxu0 0.0
    %3534 = vmatpush1.msra.mxu0 0.0
    %3535 = vmatprep.subr.mxu0 0.0
    %3536 = vmatpush1.msra.mxu0 0.0
    %3537 = vmatprep.subr.mxu0 0.0
    %3538 = vmatpush1.msra.mxu0 0.0
    %3539 = vmatprep.subr.mxu0 0.0
    %3540 = vmatpush1.msra.mxu0 0.0
    %3541 = vmatprep.subr.mxu0 0.0
    %3542 = vmatpush1.msra.mxu0 0.0
    %3543 = vmatprep.subr.mxu0 0.0
    %3544 = vmatpush1.msra.mxu0 0.0
    %3545 = vmatprep.subr.mxu0 0.0
    %3546 = vmatpush1.msra.mxu0 0.0
    %3547 = vmatprep.subr.mxu0 0.0
    %3548 = vmatpush1.msra.mxu0 0.0
    %3549 = vmatprep.subr.mxu0 0.0
    %3550 = vmatpush1.msra.mxu0 0.0
    %3551 = vmatprep.subr.mxu0 0.0
    %3552 = vmatpush1.msra.mxu0 0.0
    %3553 = vmatprep.subr.mxu0 0.0
    %3554 = vmatpush1.msra.mxu0 0.0
    %3555 = vmatprep.subr.mxu0 0.0
    %3556 = vmatpush1.msra.mxu0 0.0
    %3557 = vmatprep.subr.mxu0 0.0
    %3558 = vmatpush1.msra.mxu0 0.0
    %3559 = vmatprep.subr.mxu0 0.0
    %3560 = vmatpush1.msra.mxu0 0.0
    %3561 = vmatprep.subr.mxu0 0.0
    %3562 = vmatpush1.msra.mxu0 0.0
    %3563 = vmatprep.subr.mxu0 0.0
    %3564 = vmatpush1.msra.mxu0 0.0
    %3565 = vmatprep.subr.mxu0 0.0
    %3566 = vmatpush1.msra.mxu0 0.0
    %3567 = vmatprep.subr.mxu0 0.0
    %3568 = vmatpush1.msra.mxu0 0.0
    %3569 = vmatprep.subr.mxu0 0.0
    %3570 = vmatpush1.msra.mxu0 0.0
    %3571 = vmatprep.subr.mxu0 0.0
    %3572 = vmatpush1.msra.mxu0 0.0
    %3573 = vmatprep.subr.mxu0 0.0
    %3574 = vmatpush1.msra.mxu0 0.0
    %3575 = vmatprep.subr.mxu0 0.0
    %3576 = vmatpush1.msra.mxu0 0.0
    %3577 = vmatprep.subr.mxu0 0.0
    %3578 = vmatpush1.msra.mxu0 0.0
    %3579 = vmatprep.subr.mxu0 0.0
    %3580 = vmatpush1.msra.mxu0 0.0
    %3581 = vmatprep.mubr.f32.mxu0 0.0
    %3582 = vmatmul.mubr.f32.gmra.mrb[0].mxu0 %v3515
    %v3583 = vpop.f32.mrb[0].mxu0
    %v3584 = vadd.f32 0.0, %v3583
    %v3585 = vpop.f32.mrb[0].mxu0
    %3586 = vdwg.mxu0
    %v3587 = vadd.f32 %v3503, %v3584
    %v3588 = vld [vmem:[#allocation2 + $0xc] sm:$0x3]
    %s3589 = scalar_lea.vmem %s5, 384
    %v3590 = vld [vmem:[%s3589] sm:$0xff]
    %v3591 = vld [vmem:[%s3589 + $0x8] sm:$0xff]
    %v3592 = vld [vmem:[%s3589 + $0x10] sm:$0xff]
    %v3593 = vld [vmem:[%s3589 + $0x18] sm:$0xff]
    %v3594 = vld [vmem:[%s3589 + $0x20] sm:$0xff]
    %v3595 = vld [vmem:[%s3589 + $0x28] sm:$0xff]
    %v3596 = vld [vmem:[%s3589 + $0x30] sm:$0xff]
    %v3597 = vld [vmem:[%s3589 + $0x38] sm:$0xff]
    %v3599 = vsel %vm3082, %v3588, 0
    %3601 = vmatprep.subr.mxu0 0.0
    %3602 = vmatpush1.msra.mxu0 %v3590
    %3603 = vmatprep.subr.mxu0 0.0
    %3604 = vmatpush1.msra.mxu0 %v3591
    %3605 = vmatprep.subr.mxu0 0.0
    %3606 = vmatpush1.msra.mxu0 %v3592
    %3607 = vmatprep.subr.mxu0 0.0
    %3608 = vmatpush1.msra.mxu0 %v3593
    %3609 = vmatprep.subr.mxu0 0.0
    %3610 = vmatpush1.msra.mxu0 %v3594
    %3611 = vmatprep.subr.mxu0 0.0
    %3612 = vmatpush1.msra.mxu0 %v3595
    %3613 = vmatprep.subr.mxu0 0.0
    %3614 = vmatpush1.msra.mxu0 %v3596
    %3615 = vmatprep.subr.mxu0 0.0
    %3616 = vmatpush1.msra.mxu0 %v3597
    %3617 = vmatprep.subr.mxu0 0.0
    %3618 = vmatpush1.msra.mxu0 0.0
    %3619 = vmatprep.subr.mxu0 0.0
    %3620 = vmatpush1.msra.mxu0 0.0
    %3621 = vmatprep.subr.mxu0 0.0
    %3622 = vmatpush1.msra.mxu0 0.0
    %3623 = vmatprep.subr.mxu0 0.0
    %3624 = vmatpush1.msra.mxu0 0.0
    %3625 = vmatprep.subr.mxu0 0.0
    %3626 = vmatpush1.msra.mxu0 0.0
    %3627 = vmatprep.subr.mxu0 0.0
    %3628 = vmatpush1.msra.mxu0 0.0
    %3629 = vmatprep.subr.mxu0 0.0
    %3630 = vmatpush1.msra.mxu0 0.0
    %3631 = vmatprep.subr.mxu0 0.0
    %3632 = vmatpush1.msra.mxu0 0.0
    %3633 = vmatprep.subr.mxu0 0.0
    %3634 = vmatpush1.msra.mxu0 0.0
    %3635 = vmatprep.subr.mxu0 0.0
    %3636 = vmatpush1.msra.mxu0 0.0
    %3637 = vmatprep.subr.mxu0 0.0
    %3638 = vmatpush1.msra.mxu0 0.0
    %3639 = vmatprep.subr.mxu0 0.0
    %3640 = vmatpush1.msra.mxu0 0.0
    %3641 = vmatprep.subr.mxu0 0.0
    %3642 = vmatpush1.msra.mxu0 0.0
    %3643 = vmatprep.subr.mxu0 0.0
    %3644 = vmatpush1.msra.mxu0 0.0
    %3645 = vmatprep.subr.mxu0 0.0
    %3646 = vmatpush1.msra.mxu0 0.0
    %3647 = vmatprep.subr.mxu0 0.0
    %3648 = vmatpush1.msra.mxu0 0.0
    %3649 = vmatprep.subr.mxu0 0.0
    %3650 = vmatpush1.msra.mxu0 0.0
    %3651 = vmatprep.subr.mxu0 0.0
    %3652 = vmatpush1.msra.mxu0 0.0
    %3653 = vmatprep.subr.mxu0 0.0
    %3654 = vmatpush1.msra.mxu0 0.0
    %3655 = vmatprep.subr.mxu0 0.0
    %3656 = vmatpush1.msra.mxu0 0.0
    %3657 = vmatprep.subr.mxu0 0.0
    %3658 = vmatpush1.msra.mxu0 0.0
    %3659 = vmatprep.subr.mxu0 0.0
    %3660 = vmatpush1.msra.mxu0 0.0
    %3661 = vmatprep.subr.mxu0 0.0
    %3662 = vmatpush1.msra.mxu0 0.0
    %3663 = vmatprep.subr.mxu0 0.0
    %3664 = vmatpush1.msra.mxu0 0.0
    %3665 = vmatprep.mubr.f32.mxu0 0.0
    %3666 = vmatmul.mubr.f32.gmra.mrb[0].mxu0 %v3599
    %v3667 = vpop.f32.mrb[0].mxu0
    %v3668 = vadd.f32 0.0, %v3667
    %v3669 = vpop.f32.mrb[0].mxu0
    %3670 = vdwg.mxu0
    %v3671 = vadd.f32 %v3587, %v3668
    %v3672 = vld [vmem:[#allocation2 + $0xe] sm:$0x3]
    %s3673 = scalar_lea.vmem %s5, 448
    %v3674 = vld [vmem:[%s3673] sm:$0xff]
    %v3675 = vld [vmem:[%s3673 + $0x8] sm:$0xff]
    %v3676 = vld [vmem:[%s3673 + $0x10] sm:$0xff]
    %v3677 = vld [vmem:[%s3673 + $0x18] sm:$0xff]
    %v3678 = vld [vmem:[%s3673 + $0x20] sm:$0xff]
    %v3679 = vld [vmem:[%s3673 + $0x28] sm:$0xff]
    %v3680 = vld [vmem:[%s3673 + $0x30] sm:$0xff]
    %v3681 = vld [vmem:[%s3673 + $0x38] sm:$0xff]
    %v3683 = vsel %vm3082, %v3672, 0
    %3685 = vmatprep.subr.mxu0 0.0
    %3686 = vmatpush1.msra.mxu0 %v3674
    %3687 = vmatprep.subr.mxu0 0.0
    %3688 = vmatpush1.msra.mxu0 %v3675
    %3689 = vmatprep.subr.mxu0 0.0
    %3690 = vmatpush1.msra.mxu0 %v3676
    %3691 = vmatprep.subr.mxu0 0.0
    %3692 = vmatpush1.msra.mxu0 %v3677
    %3693 = vmatprep.subr.mxu0 0.0
    %3694 = vmatpush1.msra.mxu0 %v3678
    %3695 = vmatprep.subr.mxu0 0.0
    %3696 = vmatpush1.msra.mxu0 %v3679
    %3697 = vmatprep.subr.mxu0 0.0
    %3698 = vmatpush1.msra.mxu0 %v3680
    %3699 = vmatprep.subr.mxu0 0.0
    %3700 = vmatpush1.msra.mxu0 %v3681
    %3701 = vmatprep.subr.mxu0 0.0
    %3702 = vmatpush1.msra.mxu0 0.0
    %3703 = vmatprep.subr.mxu0 0.0
    %3704 = vmatpush1.msra.mxu0 0.0
    %3705 = vmatprep.subr.mxu0 0.0
    %3706 = vmatpush1.msra.mxu0 0.0
    %3707 = vmatprep.subr.mxu0 0.0
    %3708 = vmatpush1.msra.mxu0 0.0
    %3709 = vmatprep.subr.mxu0 0.0
    %3710 = vmatpush1.msra.mxu0 0.0
    %3711 = vmatprep.subr.mxu0 0.0
    %3712 = vmatpush1.msra.mxu0 0.0
    %3713 = vmatprep.subr.mxu0 0.0
    %3714 = vmatpush1.msra.mxu0 0.0
    %3715 = vmatprep.subr.mxu0 0.0
    %3716 = vmatpush1.msra.mxu0 0.0
    %3717 = vmatprep.subr.mxu0 0.0
    %3718 = vmatpush1.msra.mxu0 0.0
    %3719 = vmatprep.subr.mxu0 0.0
    %3720 = vmatpush1.msra.mxu0 0.0
    %3721 = vmatprep.subr.mxu0 0.0
    %3722 = vmatpush1.msra.mxu0 0.0
    %3723 = vmatprep.subr.mxu0 0.0
    %3724 = vmatpush1.msra.mxu0 0.0
    %3725 = vmatprep.subr.mxu0 0.0
    %3726 = vmatpush1.msra.mxu0 0.0
    %3727 = vmatprep.subr.mxu0 0.0
    %3728 = vmatpush1.msra.mxu0 0.0
    %3729 = vmatprep.subr.mxu0 0.0
    %3730 = vmatpush1.msra.mxu0 0.0
    %3731 = vmatprep.subr.mxu0 0.0
    %3732 = vmatpush1.msra.mxu0 0.0
    %3733 = vmatprep.subr.mxu0 0.0
    %3734 = vmatpush1.msra.mxu0 0.0
    %3735 = vmatprep.subr.mxu0 0.0
    %3736 = vmatpush1.msra.mxu0 0.0
    %3737 = vmatprep.subr.mxu0 0.0
    %3738 = vmatpush1.msra.mxu0 0.0
    %3739 = vmatprep.subr.mxu0 0.0
    %3740 = vmatpush1.msra.mxu0 0.0
    %3741 = vmatprep.subr.mxu0 0.0
    %3742 = vmatpush1.msra.mxu0 0.0
    %3743 = vmatprep.subr.mxu0 0.0
    %3744 = vmatpush1.msra.mxu0 0.0
    %3745 = vmatprep.subr.mxu0 0.0
    %3746 = vmatpush1.msra.mxu0 0.0
    %3747 = vmatprep.subr.mxu0 0.0
    %3748 = vmatpush1.msra.mxu0 0.0
    %3749 = vmatprep.mubr.f32.mxu0 0.0
    %3750 = vmatmul.mubr.f32.gmra.mrb[0].mxu0 %v3683
    %v3751 = vpop.f32.mrb[0].mxu0
    %v3752 = vadd.f32 0.0, %v3751
    %v3753 = vpop.f32.mrb[0].mxu0
    %3754 = vdwg.mxu0
    %v3755 = vadd.f32 %v3671, %v3752
    %v3756 = vld [vmem:[#allocation2 + $0x10] sm:$0x3]
    %s3757 = scalar_lea.vmem %s5, 512
    %v3758 = vld [vmem:[%s3757] sm:$0xff]
    %v3759 = vld [vmem:[%s3757 + $0x8] sm:$0xff]
    %v3760 = vld [vmem:[%s3757 + $0x10] sm:$0xff]
    %v3761 = vld [vmem:[%s3757 + $0x18] sm:$0xff]
    %v3762 = vld [vmem:[%s3757 + $0x20] sm:$0xff]
    %v3763 = vld [vmem:[%s3757 + $0x28] sm:$0xff]
    %v3764 = vld [vmem:[%s3757 + $0x30] sm:$0xff]
    %v3765 = vld [vmem:[%s3757 + $0x38] sm:$0xff]
    %v3767 = vsel %vm3082, %v3756, 0
    %3769 = vmatprep.subr.mxu0 0.0
    %3770 = vmatpush1.msra.mxu0 %v3758
    %3771 = vmatprep.subr.mxu0 0.0
    %3772 = vmatpush1.msra.mxu0 %v3759
    %3773 = vmatprep.subr.mxu0 0.0
    %3774 = vmatpush1.msra.mxu0 %v3760
    %3775 = vmatprep.subr.mxu0 0.0
    %3776 = vmatpush1.msra.mxu0 %v3761
    %3777 = vmatprep.subr.mxu0 0.0
    %3778 = vmatpush1.msra.mxu0 %v3762
    %3779 = vmatprep.subr.mxu0 0.0
    %3780 = vmatpush1.msra.mxu0 %v3763
    %3781 = vmatprep.subr.mxu0 0.0
    %3782 = vmatpush1.msra.mxu0 %v3764
    %3783 = vmatprep.subr.mxu0 0.0
    %3784 = vmatpush1.msra.mxu0 %v3765
    %3785 = vmatprep.subr.mxu0 0.0
    %3786 = vmatpush1.msra.mxu0 0.0
    %3787 = vmatprep.subr.mxu0 0.0
    %3788 = vmatpush1.msra.mxu0 0.0
    %3789 = vmatprep.subr.mxu0 0.0
    %3790 = vmatpush1.msra.mxu0 0.0
    %3791 = vmatprep.subr.mxu0 0.0
    %3792 = vmatpush1.msra.mxu0 0.0
    %3793 = vmatprep.subr.mxu0 0.0
    %3794 = vmatpush1.msra.mxu0 0.0
    %3795 = vmatprep.subr.mxu0 0.0
    %3796 = vmatpush1.msra.mxu0 0.0
    %3797 = vmatprep.subr.mxu0 0.0
    %3798 = vmatpush1.msra.mxu0 0.0
    %3799 = vmatprep.subr.mxu0 0.0
    %3800 = vmatpush1.msra.mxu0 0.0
    %3801 = vmatprep.subr.mxu0 0.0
    %3802 = vmatpush1.msra.mxu0 0.0
    %3803 = vmatprep.subr.mxu0 0.0
    %3804 = vmatpush1.msra.mxu0 0.0
    %3805 = vmatprep.subr.mxu0 0.0
    %3806 = vmatpush1.msra.mxu0 0.0
    %3807 = vmatprep.subr.mxu0 0.0
    %3808 = vmatpush1.msra.mxu0 0.0
    %3809 = vmatprep.subr.mxu0 0.0
    %3810 = vmatpush1.msra.mxu0 0.0
    %3811 = vmatprep.subr.mxu0 0.0
    %3812 = vmatpush1.msra.mxu0 0.0
    %3813 = vmatprep.subr.mxu0 0.0
    %3814 = vmatpush1.msra.mxu0 0.0
    %3815 = vmatprep.subr.mxu0 0.0
    %3816 = vmatpush1.msra.mxu0 0.0
    %3817 = vmatprep.subr.mxu0 0.0
    %3818 = vmatpush1.msra.mxu0 0.0
    %3819 = vmatprep.subr.mxu0 0.0
    %3820 = vmatpush1.msra.mxu0 0.0
    %3821 = vmatprep.subr.mxu0 0.0
    %3822 = vmatpush1.msra.mxu0 0.0
    %3823 = vmatprep.subr.mxu0 0.0
    %3824 = vmatpush1.msra.mxu0 0.0
    %3825 = vmatprep.subr.mxu0 0.0
    %3826 = vmatpush1.msra.mxu0 0.0
    %3827 = vmatprep.subr.mxu0 0.0
    %3828 = vmatpush1.msra.mxu0 0.0
    %3829 = vmatprep.subr.mxu0 0.0
    %3830 = vmatpush1.msra.mxu0 0.0
    %3831 = vmatprep.subr.mxu0 0.0
    %3832 = vmatpush1.msra.mxu0 0.0
    %3833 = vmatprep.mubr.f32.mxu0 0.0
    %3834 = vmatmul.mubr.f32.gmra.mrb[0].mxu0 %v3767
    %v3835 = vpop.f32.mrb[0].mxu0
    %v3836 = vadd.f32 0.0, %v3835
    %v3837 = vpop.f32.mrb[0].mxu0
    %3838 = vdwg.mxu0
    %v3839 = vadd.f32 %v3755, %v3836
    %v3840 = vld [vmem:[%s6] sm:$0x1]
    %v3842 = vlaneseq
    %v3843 = vshrl.u32 %v3842, 7
    %v3844 = vsub.s32 0, %v3843
    %v3845 = vrot.slane %v3840, %v3844
    %v3847 = vadd.f32 %v3839, %v3845
    %v3848 = vmax.f32 %v3847, 0.0
    %v3849 = vld [vmem:[%s7] sm:$0xff]
    %v3850 = vld [vmem:[%s7 + $0x8] sm:$0xff]
    %v3851 = vld [vmem:[%s7 + $0x10] sm:$0xff]
    %v3852 = vld [vmem:[%s7 + $0x18] sm:$0xff]
    %v3853 = vld [vmem:[%s7 + $0x20] sm:$0xff]
    %v3854 = vld [vmem:[%s7 + $0x28] sm:$0xff]
    %v3855 = vld [vmem:[%s7 + $0x30] sm:$0xff]
    %v3856 = vld [vmem:[%s7 + $0x38] sm:$0xff]
    %v3857 = vld [vmem:[%s7 + $0x40] sm:$0xff]
    %v3858 = vld [vmem:[%s7 + $0x48] sm:$0xff]
    %v3859 = vld [vmem:[%s7 + $0x50] sm:$0xff]
    %v3860 = vld [vmem:[%s7 + $0x58] sm:$0xff]
    %v3861 = vld [vmem:[%s7 + $0x60] sm:$0xff]
    %v3862 = vld [vmem:[%s7 + $0x68] sm:$0xff]
    %v3863 = vld [vmem:[%s7 + $0x70] sm:$0xff]
    %v3864 = vld [vmem:[%s7 + $0x78] sm:$0xff]
    %v3865 = vld [vmem:[%s7 + $0x80] sm:$0xff]
    %v3866 = vld [vmem:[%s7 + $0x88] sm:$0xff]
    %v3867 = vld [vmem:[%s7 + $0x90] sm:$0xff]
    %v3868 = vld [vmem:[%s7 + $0x98] sm:$0xff]
    %v3869 = vld [vmem:[%s7 + $0xa0] sm:$0xff]
    %v3870 = vld [vmem:[%s7 + $0xa8] sm:$0xff]
    %v3871 = vld [vmem:[%s7 + $0xb0] sm:$0xff]
    %v3872 = vld [vmem:[%s7 + $0xb8] sm:$0xff]
    %v3873 = vld [vmem:[%s7 + $0xc0] sm:$0xff]
    %v3874 = vld [vmem:[%s7 + $0xc8] sm:$0xff]
    %v3875 = vld [vmem:[%s7 + $0xd0] sm:$0xff]
    %v3876 = vld [vmem:[%s7 + $0xd8] sm:$0xff]
    %v3877 = vld [vmem:[%s7 + $0xe0] sm:$0xff]
    %v3878 = vld [vmem:[%s7 + $0xe8] sm:$0xff]
    %v3879 = vld [vmem:[%s7 + $0xf0] sm:$0xff]
    %v3880 = vld [vmem:[%s7 + $0xf8] sm:$0xff]
    %v3881 = vld [vmem:[%s8] sm:$0xf]
    %v3883 = vlaneseq
    %v3884 = vshrl.u32 %v3883, 7
    %v3885 = vsub.s32 0, %v3884
    %v3886 = vrot.slane %v3881, %v3885
    %v3887 = vlaneseq
    %v3888 = vshrl.u32 %v3887, 7
    %v3889 = vsub.s32 1, %v3888
    %v3890 = vrot.slane %v3881, %v3889
    %v3891 = vlaneseq
    %v3892 = vshrl.u32 %v3891, 7
    %v3893 = vsub.s32 2, %v3892
    %v3894 = vrot.slane %v3881, %v3893
    %v3895 = vlaneseq
    %v3896 = vshrl.u32 %v3895, 7
    %v3897 = vsub.s32 3, %v3896
    %v3898 = vrot.slane %v3881, %v3897
    %v3904 = vsel %vm3082, %v3848, 0
    %3906 = vmatprep.subr.mxu0 %v3850
    %3907 = vmatpush1.msra.mxu0 %v3849
    %3908 = vmatprep.subr.mxu0 %v3854
    %3909 = vmatpush1.msra.mxu0 %v3853
    %3910 = vmatprep.subr.mxu0 %v3858
    %3911 = vmatpush1.msra.mxu0 %v3857
    %3912 = vmatprep.subr.mxu0 %v3862
    %3913 = vmatpush1.msra.mxu0 %v3861
    %3914 = vmatprep.subr.mxu0 %v3866
    %3915 = vmatpush1.msra.mxu0 %v3865
    %3916 = vmatprep.subr.mxu0 %v3870
    %3917 = vmatpush1.msra.mxu0 %v3869
    %3918 = vmatprep.subr.mxu0 %v3874
    %3919 = vmatpush1.msra.mxu0 %v3873
    %3920 = vmatprep.subr.mxu0 %v3878
    %3921 = vmatpush1.msra.mxu0 %v3877
    %3922 = vmatprep.subr.mxu0 0.0
    %3923 = vmatpush1.msra.mxu0 0.0
    %3924 = vmatprep.subr.mxu0 0.0
    %3925 = vmatpush1.msra.mxu0 0.0
    %3926 = vmatprep.subr.mxu0 0.0
    %3927 = vmatpush1.msra.mxu0 0.0
    %3928 = vmatprep.subr.mxu0 0.0
    %3929 = vmatpush1.msra.mxu0 0.0
    %3930 = vmatprep.subr.mxu0 0.0
    %3931 = vmatpush1.msra.mxu0 0.0
    %3932 = vmatprep.subr.mxu0 0.0
    %3933 = vmatpush1.msra.mxu0 0.0
    %3934 = vmatprep.subr.mxu0 0.0
    %3935 = vmatpush1.msra.mxu0 0.0
    %3936 = vmatprep.subr.mxu0 0.0
    %3937 = vmatpush1.msra.mxu0 0.0
    %3938 = vmatprep.subr.mxu0 0.0
    %3939 = vmatpush1.msra.mxu0 0.0
    %3940 = vmatprep.subr.mxu0 0.0
    %3941 = vmatpush1.msra.mxu0 0.0
    %3942 = vmatprep.subr.mxu0 0.0
    %3943 = vmatpush1.msra.mxu0 0.0
    %3944 = vmatprep.subr.mxu0 0.0
    %3945 = vmatpush1.msra.mxu0 0.0
    %3946 = vmatprep.subr.mxu0 0.0
    %3947 = vmatpush1.msra.mxu0 0.0
    %3948 = vmatprep.subr.mxu0 0.0
    %3949 = vmatpush1.msra.mxu0 0.0
    %3950 = vmatprep.subr.mxu0 0.0
    %3951 = vmatpush1.msra.mxu0 0.0
    %3952 = vmatprep.subr.mxu0 0.0
    %3953 = vmatpush1.msra.mxu0 0.0
    %3954 = vmatprep.subr.mxu0 0.0
    %3955 = vmatpush1.msra.mxu0 0.0
    %3956 = vmatprep.subr.mxu0 0.0
    %3957 = vmatpush1.msra.mxu0 0.0
    %3958 = vmatprep.subr.mxu0 0.0
    %3959 = vmatpush1.msra.mxu0 0.0
    %3960 = vmatprep.subr.mxu0 0.0
    %3961 = vmatpush1.msra.mxu0 0.0
    %3962 = vmatprep.subr.mxu0 0.0
    %3963 = vmatpush1.msra.mxu0 0.0
    %3964 = vmatprep.subr.mxu0 0.0
    %3965 = vmatpush1.msra.mxu0 0.0
    %3966 = vmatprep.subr.mxu0 0.0
    %3967 = vmatpush1.msra.mxu0 0.0
    %3968 = vmatprep.subr.mxu0 0.0
    %3969 = vmatpush1.msra.mxu0 0.0
    %3970 = vmatprep.mubr.f32.mxu0 0.0
    %3971 = vmatmul.mubr.f32.gmra.mrb[0].mxu0 %v3904
    %v3972 = vpop.f32.mrb[0].mxu0
    %v3973 = vadd.f32 %v3886, %v3972
    %v3974 = vpop.f32.mrb[0].mxu0
    %v3975 = vadd.f32 %v3890, %v3974
    %3976 = vdwg.mxu0
    %3977 = vmatprep.subr.mxu0 %v3852
    %3978 = vmatpush1.msra.mxu0 %v3851
    %3979 = vmatprep.subr.mxu0 %v3856
    %3980 = vmatpush1.msra.mxu0 %v3855
    %3981 = vmatprep.subr.mxu0 %v3860
    %3982 = vmatpush1.msra.mxu0 %v3859
    %3983 = vmatprep.subr.mxu0 %v3864
    %3984 = vmatpush1.msra.mxu0 %v3863
    %3985 = vmatprep.subr.mxu0 %v3868
    %3986 = vmatpush1.msra.mxu0 %v3867
    %3987 = vmatprep.subr.mxu0 %v3872
    %3988 = vmatpush1.msra.mxu0 %v3871
    %3989 = vmatprep.subr.mxu0 %v3876
    %3990 = vmatpush1.msra.mxu0 %v3875
    %3991 = vmatprep.subr.mxu0 %v3880
    %3992 = vmatpush1.msra.mxu0 %v3879
    %3993 = vmatprep.subr.mxu0 0.0
    %3994 = vmatpush1.msra.mxu0 0.0
    %3995 = vmatprep.subr.mxu0 0.0
    %3996 = vmatpush1.msra.mxu0 0.0
    %3997 = vmatprep.subr.mxu0 0.0
    %3998 = vmatpush1.msra.mxu0 0.0
    %3999 = vmatprep.subr.mxu0 0.0
    %4000 = vmatpush1.msra.mxu0 0.0
    %4001 = vmatprep.subr.mxu0 0.0
    %4002 = vmatpush1.msra.mxu0 0.0
    %4003 = vmatprep.subr.mxu0 0.0
    %4004 = vmatpush1.msra.mxu0 0.0
    %4005 = vmatprep.subr.mxu0 0.0
    %4006 = vmatpush1.msra.mxu0 0.0
    %4007 = vmatprep.subr.mxu0 0.0
    %4008 = vmatpush1.msra.mxu0 0.0
    %4009 = vmatprep.subr.mxu0 0.0
    %4010 = vmatpush1.msra.mxu0 0.0
    %4011 = vmatprep.subr.mxu0 0.0
    %4012 = vmatpush1.msra.mxu0 0.0
    %4013 = vmatprep.subr.mxu0 0.0
    %4014 = vmatpush1.msra.mxu0 0.0
    %4015 = vmatprep.subr.mxu0 0.0
    %4016 = vmatpush1.msra.mxu0 0.0
    %4017 = vmatprep.subr.mxu0 0.0
    %4018 = vmatpush1.msra.mxu0 0.0
    %4019 = vmatprep.subr.mxu0 0.0
    %4020 = vmatpush1.msra.mxu0 0.0
    %4021 = vmatprep.subr.mxu0 0.0
    %4022 = vmatpush1.msra.mxu0 0.0
    %4023 = vmatprep.subr.mxu0 0.0
    %4024 = vmatpush1.msra.mxu0 0.0
    %4025 = vmatprep.subr.mxu0 0.0
    %4026 = vmatpush1.msra.mxu0 0.0
    %4027 = vmatprep.subr.mxu0 0.0
    %4028 = vmatpush1.msra.mxu0 0.0
    %4029 = vmatprep.subr.mxu0 0.0
    %4030 = vmatpush1.msra.mxu0 0.0
    %4031 = vmatprep.subr.mxu0 0.0
    %4032 = vmatpush1.msra.mxu0 0.0
    %4033 = vmatprep.subr.mxu0 0.0
    %4034 = vmatpush1.msra.mxu0 0.0
    %4035 = vmatprep.subr.mxu0 0.0
    %4036 = vmatpush1.msra.mxu0 0.0
    %4037 = vmatprep.subr.mxu0 0.0
    %4038 = vmatpush1.msra.mxu0 0.0
    %4039 = vmatprep.subr.mxu0 0.0
    %4040 = vmatpush1.msra.mxu0 0.0
    %4041 = vmatprep.mubr.f32.mxu0 0.0
    %4042 = vmatmul.mubr.f32.gmra.mrb[0].mxu0 %v3904
    %v4043 = vpop.f32.mrb[0].mxu0
    %v4044 = vadd.f32 %v3894, %v4043
    %v4045 = vpop.f32.mrb[0].mxu0
    %v4046 = vadd.f32 %v3898, %v4045
    %4047 = vdwg.mxu0
    %v4048 = vmax.f32 %v3973, 0.0
    %v4049 = vmax.f32 %v3975, 0.0
    %v4050 = vmax.f32 %v4044, 0.0
    %v4051 = vmax.f32 %v4046, 0.0
    %v4052 = vld [vmem:[%s9] sm:$0xff]
    %v4053 = vld [vmem:[%s9 + $0x8] sm:$0xff]
    %v4054 = vld [vmem:[%s9 + $0x10] sm:$0xff]
    %v4055 = vld [vmem:[%s9 + $0x18] sm:$0xff]
    %v4056 = vld [vmem:[%s9 + $0x20] sm:$0xff]
    %v4057 = vld [vmem:[%s9 + $0x28] sm:$0xff]
    %v4058 = vld [vmem:[%s9 + $0x30] sm:$0xff]
    %v4059 = vld [vmem:[%s9 + $0x38] sm:$0xff]
    %v4060 = vld [vmem:[%s9 + $0x40] sm:$0xff]
    %v4061 = vld [vmem:[%s9 + $0x48] sm:$0xff]
    %v4062 = vld [vmem:[%s9 + $0x50] sm:$0xff]
    %v4063 = vld [vmem:[%s9 + $0x58] sm:$0xff]
    %v4064 = vld [vmem:[%s9 + $0x60] sm:$0xff]
    %v4065 = vld [vmem:[%s9 + $0x68] sm:$0xff]
    %v4066 = vld [vmem:[%s9 + $0x70] sm:$0xff]
    %v4067 = vld [vmem:[%s9 + $0x78] sm:$0xff]
    %v4068 = vld [vmem:[%s9 + $0x80] sm:$0xff]
    %v4069 = vld [vmem:[%s9 + $0x88] sm:$0xff]
    %v4070 = vld [vmem:[%s9 + $0x90] sm:$0xff]
    %v4071 = vld [vmem:[%s9 + $0x98] sm:$0xff]
    %v4072 = vld [vmem:[%s9 + $0xa0] sm:$0xff]
    %v4073 = vld [vmem:[%s9 + $0xa8] sm:$0xff]
    %v4074 = vld [vmem:[%s9 + $0xb0] sm:$0xff]
    %v4075 = vld [vmem:[%s9 + $0xb8] sm:$0xff]
    %v4076 = vld [vmem:[%s9 + $0xc0] sm:$0xff]
    %v4077 = vld [vmem:[%s9 + $0xc8] sm:$0xff]
    %v4078 = vld [vmem:[%s9 + $0xd0] sm:$0xff]
    %v4079 = vld [vmem:[%s9 + $0xd8] sm:$0xff]
    %v4080 = vld [vmem:[%s9 + $0xe0] sm:$0xff]
    %v4081 = vld [vmem:[%s9 + $0xe8] sm:$0xff]
    %v4082 = vld [vmem:[%s9 + $0xf0] sm:$0xff]
    %v4083 = vld [vmem:[%s9 + $0xf8] sm:$0xff]
    %v4084 = vld [vmem:[%s9 + $0x100] sm:$0xff]
    %v4085 = vld [vmem:[%s9 + $0x108] sm:$0xff]
    %v4086 = vld [vmem:[%s9 + $0x110] sm:$0xff]
    %v4087 = vld [vmem:[%s9 + $0x118] sm:$0xff]
    %v4088 = vld [vmem:[%s9 + $0x120] sm:$0xff]
    %v4089 = vld [vmem:[%s9 + $0x128] sm:$0xff]
    %v4090 = vld [vmem:[%s9 + $0x130] sm:$0xff]
    %v4091 = vld [vmem:[%s9 + $0x138] sm:$0xff]
    %v4092 = vld [vmem:[%s9 + $0x140] sm:$0xff]
    %v4093 = vld [vmem:[%s9 + $0x148] sm:$0xff]
    %v4094 = vld [vmem:[%s9 + $0x150] sm:$0xff]
    %v4095 = vld [vmem:[%s9 + $0x158] sm:$0xff]
    %v4096 = vld [vmem:[%s9 + $0x160] sm:$0xff]
    %v4097 = vld [vmem:[%s9 + $0x168] sm:$0xff]
    %v4098 = vld [vmem:[%s9 + $0x170] sm:$0xff]
    %v4099 = vld [vmem:[%s9 + $0x178] sm:$0xff]
    %v4100 = vld [vmem:[%s9 + $0x180] sm:$0xff]
    %v4101 = vld [vmem:[%s9 + $0x188] sm:$0xff]
    %v4102 = vld [vmem:[%s9 + $0x190] sm:$0xff]
    %v4103 = vld [vmem:[%s9 + $0x198] sm:$0xff]
    %v4104 = vld [vmem:[%s9 + $0x1a0] sm:$0xff]
    %v4105 = vld [vmem:[%s9 + $0x1a8] sm:$0xff]
    %v4106 = vld [vmem:[%s9 + $0x1b0] sm:$0xff]
    %v4107 = vld [vmem:[%s9 + $0x1b8] sm:$0xff]
    %v4108 = vld [vmem:[%s9 + $0x1c0] sm:$0xff]
    %v4109 = vld [vmem:[%s9 + $0x1c8] sm:$0xff]
    %v4110 = vld [vmem:[%s9 + $0x1d0] sm:$0xff]
    %v4111 = vld [vmem:[%s9 + $0x1d8] sm:$0xff]
    %v4112 = vld [vmem:[%s9 + $0x1e0] sm:$0xff]
    %v4113 = vld [vmem:[%s9 + $0x1e8] sm:$0xff]
    %v4114 = vld [vmem:[%s9 + $0x1f0] sm:$0xff]
    %v4115 = vld [vmem:[%s9 + $0x1f8] sm:$0xff]
    %v4116 = vld [vmem:[%s9 + $0x200] sm:$0xff]
    %v4117 = vld [vmem:[%s9 + $0x208] sm:$0xff]
    %v4118 = vld [vmem:[%s9 + $0x210] sm:$0xff]
    %v4119 = vld [vmem:[%s9 + $0x218] sm:$0xff]
    %v4120 = vld [vmem:[%s9 + $0x220] sm:$0xff]
    %v4121 = vld [vmem:[%s9 + $0x228] sm:$0xff]
    %v4122 = vld [vmem:[%s9 + $0x230] sm:$0xff]
    %v4123 = vld [vmem:[%s9 + $0x238] sm:$0xff]
    %v4124 = vld [vmem:[%s9 + $0x240] sm:$0xff]
    %v4125 = vld [vmem:[%s9 + $0x248] sm:$0xff]
    %v4126 = vld [vmem:[%s9 + $0x250] sm:$0xff]
    %v4127 = vld [vmem:[%s9 + $0x258] sm:$0xff]
    %v4128 = vld [vmem:[%s9 + $0x260] sm:$0xff]
    %v4129 = vld [vmem:[%s9 + $0x268] sm:$0xff]
    %v4130 = vld [vmem:[%s9 + $0x270] sm:$0xff]
    %v4131 = vld [vmem:[%s9 + $0x278] sm:$0xff]
    %v4132 = vld [vmem:[%s9 + $0x280] sm:$0xff]
    %v4133 = vld [vmem:[%s9 + $0x288] sm:$0xff]
    %v4134 = vld [vmem:[%s9 + $0x290] sm:$0xff]
    %v4135 = vld [vmem:[%s9 + $0x298] sm:$0xff]
    %v4136 = vld [vmem:[%s9 + $0x2a0] sm:$0xff]
    %v4137 = vld [vmem:[%s9 + $0x2a8] sm:$0xff]
    %v4138 = vld [vmem:[%s9 + $0x2b0] sm:$0xff]
    %v4139 = vld [vmem:[%s9 + $0x2b8] sm:$0xff]
    %v4140 = vld [vmem:[%s9 + $0x2c0] sm:$0xff]
    %v4141 = vld [vmem:[%s9 + $0x2c8] sm:$0xff]
    %v4142 = vld [vmem:[%s9 + $0x2d0] sm:$0xff]
    %v4143 = vld [vmem:[%s9 + $0x2d8] sm:$0xff]
    %v4144 = vld [vmem:[%s9 + $0x2e0] sm:$0xff]
    %v4145 = vld [vmem:[%s9 + $0x2e8] sm:$0xff]
    %v4146 = vld [vmem:[%s9 + $0x2f0] sm:$0xff]
    %v4147 = vld [vmem:[%s9 + $0x2f8] sm:$0xff]
    %v4148 = vld [vmem:[%s9 + $0x300] sm:$0xff]
    %v4149 = vld [vmem:[%s9 + $0x308] sm:$0xff]
    %v4150 = vld [vmem:[%s9 + $0x310] sm:$0xff]
    %v4151 = vld [vmem:[%s9 + $0x318] sm:$0xff]
    %v4152 = vld [vmem:[%s9 + $0x320] sm:$0xff]
    %v4153 = vld [vmem:[%s9 + $0x328] sm:$0xff]
    %v4154 = vld [vmem:[%s9 + $0x330] sm:$0xff]
    %v4155 = vld [vmem:[%s9 + $0x338] sm:$0xff]
    %v4156 = vld [vmem:[%s9 + $0x340] sm:$0xff]
    %v4157 = vld [vmem:[%s9 + $0x348] sm:$0xff]
    %v4158 = vld [vmem:[%s9 + $0x350] sm:$0xff]
    %v4159 = vld [vmem:[%s9 + $0x358] sm:$0xff]
    %v4160 = vld [vmem:[%s9 + $0x360] sm:$0xff]
    %v4161 = vld [vmem:[%s9 + $0x368] sm:$0xff]
    %v4162 = vld [vmem:[%s9 + $0x370] sm:$0xff]
    %v4163 = vld [vmem:[%s9 + $0x378] sm:$0xff]
    %v4164 = vld [vmem:[%s9 + $0x380] sm:$0xff]
    %v4165 = vld [vmem:[%s9 + $0x388] sm:$0xff]
    %v4166 = vld [vmem:[%s9 + $0x390] sm:$0xff]
    %v4167 = vld [vmem:[%s9 + $0x398] sm:$0xff]
    %v4168 = vld [vmem:[%s9 + $0x3a0] sm:$0xff]
    %v4169 = vld [vmem:[%s9 + $0x3a8] sm:$0xff]
    %v4170 = vld [vmem:[%s9 + $0x3b0] sm:$0xff]
    %v4171 = vld [vmem:[%s9 + $0x3b8] sm:$0xff]
    %v4172 = vld [vmem:[%s9 + $0x3c0] sm:$0xff]
    %v4173 = vld [vmem:[%s9 + $0x3c8] sm:$0xff]
    %v4174 = vld [vmem:[%s9 + $0x3d0] sm:$0xff]
    %v4175 = vld [vmem:[%s9 + $0x3d8] sm:$0xff]
    %v4176 = vld [vmem:[%s9 + $0x3e0] sm:$0xff]
    %v4177 = vld [vmem:[%s9 + $0x3e8] sm:$0xff]
    %v4178 = vld [vmem:[%s9 + $0x3f0] sm:$0xff]
    %v4179 = vld [vmem:[%s9 + $0x3f8] sm:$0xff]
    %v4180 = vld [vmem:[%s10] sm:$0x3]
    %v4182 = vlaneseq
    %v4183 = vshrl.u32 %v4182, 7
    %v4184 = vsub.s32 0, %v4183
    %v4185 = vrot.slane %v4180, %v4184
    %v4186 = vlaneseq
    %v4187 = vshrl.u32 %v4186, 7
    %v4188 = vsub.s32 1, %v4187
    %v4189 = vrot.slane %v4180, %v4188
    %4192 = vmatprep.subr.mxu0 %v4053
    %4193 = vmatpush1.msra.mxu0 %v4052
    %4194 = vmatprep.subr.mxu0 %v4055
    %4195 = vmatpush1.msra.mxu0 %v4054
    %4196 = vmatprep.subr.mxu0 %v4057
    %4197 = vmatpush1.msra.mxu0 %v4056
    %4198 = vmatprep.subr.mxu0 %v4059
    %4199 = vmatpush1.msra.mxu0 %v4058
    %4200 = vmatprep.subr.mxu0 %v4061
    %4201 = vmatpush1.msra.mxu0 %v4060
    %4202 = vmatprep.subr.mxu0 %v4063
    %4203 = vmatpush1.msra.mxu0 %v4062
    %4204 = vmatprep.subr.mxu0 %v4065
    %4205 = vmatpush1.msra.mxu0 %v4064
    %4206 = vmatprep.subr.mxu0 %v4067
    %4207 = vmatpush1.msra.mxu0 %v4066
    %4208 = vmatprep.subr.mxu0 %v4069
    %4209 = vmatpush1.msra.mxu0 %v4068
    %4210 = vmatprep.subr.mxu0 %v4071
    %4211 = vmatpush1.msra.mxu0 %v4070
    %4212 = vmatprep.subr.mxu0 %v4073
    %4213 = vmatpush1.msra.mxu0 %v4072
    %4214 = vmatprep.subr.mxu0 %v4075
    %4215 = vmatpush1.msra.mxu0 %v4074
    %4216 = vmatprep.subr.mxu0 %v4077
    %4217 = vmatpush1.msra.mxu0 %v4076
    %4218 = vmatprep.subr.mxu0 %v4079
    %4219 = vmatpush1.msra.mxu0 %v4078
    %4220 = vmatprep.subr.mxu0 %v4081
    %4221 = vmatpush1.msra.mxu0 %v4080
    %4222 = vmatprep.subr.mxu0 %v4083
    %4223 = vmatpush1.msra.mxu0 %v4082
    %4224 = vmatprep.subr.mxu0 %v4085
    %4225 = vmatpush1.msra.mxu0 %v4084
    %4226 = vmatprep.subr.mxu0 %v4087
    %4227 = vmatpush1.msra.mxu0 %v4086
    %4228 = vmatprep.subr.mxu0 %v4089
    %4229 = vmatpush1.msra.mxu0 %v4088
    %4230 = vmatprep.subr.mxu0 %v4091
    %4231 = vmatpush1.msra.mxu0 %v4090
    %4232 = vmatprep.subr.mxu0 %v4093
    %4233 = vmatpush1.msra.mxu0 %v4092
    %4234 = vmatprep.subr.mxu0 %v4095
    %4235 = vmatpush1.msra.mxu0 %v4094
    %4236 = vmatprep.subr.mxu0 %v4097
    %4237 = vmatpush1.msra.mxu0 %v4096
    %4238 = vmatprep.subr.mxu0 %v4099
    %4239 = vmatpush1.msra.mxu0 %v4098
    %4240 = vmatprep.subr.mxu0 %v4101
    %4241 = vmatpush1.msra.mxu0 %v4100
    %4242 = vmatprep.subr.mxu0 %v4103
    %4243 = vmatpush1.msra.mxu0 %v4102
    %4244 = vmatprep.subr.mxu0 %v4105
    %4245 = vmatpush1.msra.mxu0 %v4104
    %4246 = vmatprep.subr.mxu0 %v4107
    %4247 = vmatpush1.msra.mxu0 %v4106
    %4248 = vmatprep.subr.mxu0 %v4109
    %4249 = vmatpush1.msra.mxu0 %v4108
    %4250 = vmatprep.subr.mxu0 %v4111
    %4251 = vmatpush1.msra.mxu0 %v4110
    %4252 = vmatprep.subr.mxu0 %v4113
    %4253 = vmatpush1.msra.mxu0 %v4112
    %4254 = vmatprep.subr.mxu0 %v4115
    %4255 = vmatpush1.msra.mxu0 %v4114
    %4256 = vmatprep.mubr.f32.mxu0 %v4049
    %4257 = vmatmul.mubr.f32.gmra.mrb[0].mxu0 %v4048
    %v4258 = vpop.f32.mrb[0].mxu0
    %v4259 = vadd.f32 %v4185, %v4258
    %v4260 = vpop.f32.mrb[0].mxu0
    %v4261 = vadd.f32 %v4189, %v4260
    %4262 = vdwg.mxu0
    %4263 = vmatprep.subr.mxu0 %v4117
    %4264 = vmatpush1.msra.mxu0 %v4116
    %4265 = vmatprep.subr.mxu0 %v4119
    %4266 = vmatpush1.msra.mxu0 %v4118
    %4267 = vmatprep.subr.mxu0 %v4121
    %4268 = vmatpush1.msra.mxu0 %v4120
    %4269 = vmatprep.subr.mxu0 %v4123
    %4270 = vmatpush1.msra.mxu0 %v4122
    %4271 = vmatprep.subr.mxu0 %v4125
    %4272 = vmatpush1.msra.mxu0 %v4124
    %4273 = vmatprep.subr.mxu0 %v4127
    %4274 = vmatpush1.msra.mxu0 %v4126
    %4275 = vmatprep.subr.mxu0 %v4129
    %4276 = vmatpush1.msra.mxu0 %v4128
    %4277 = vmatprep.subr.mxu0 %v4131
    %4278 = vmatpush1.msra.mxu0 %v4130
    %4279 = vmatprep.subr.mxu0 %v4133
    %4280 = vmatpush1.msra.mxu0 %v4132
    %4281 = vmatprep.subr.mxu0 %v4135
    %4282 = vmatpush1.msra.mxu0 %v4134
    %4283 = vmatprep.subr.mxu0 %v4137
    %4284 = vmatpush1.msra.mxu0 %v4136
    %4285 = vmatprep.subr.mxu0 %v4139
    %4286 = vmatpush1.msra.mxu0 %v4138
    %4287 = vmatprep.subr.mxu0 %v4141
    %4288 = vmatpush1.msra.mxu0 %v4140
    %4289 = vmatprep.subr.mxu0 %v4143
    %4290 = vmatpush1.msra.mxu0 %v4142
    %4291 = vmatprep.subr.mxu0 %v4145
    %4292 = vmatpush1.msra.mxu0 %v4144
    %4293 = vmatprep.subr.mxu0 %v4147
    %4294 = vmatpush1.msra.mxu0 %v4146
    %4295 = vmatprep.subr.mxu0 %v4149
    %4296 = vmatpush1.msra.mxu0 %v4148
    %4297 = vmatprep.subr.mxu0 %v4151
    %4298 = vmatpush1.msra.mxu0 %v4150
    %4299 = vmatprep.subr.mxu0 %v4153
    %4300 = vmatpush1.msra.mxu0 %v4152
    %4301 = vmatprep.subr.mxu0 %v4155
    %4302 = vmatpush1.msra.mxu0 %v4154
    %4303 = vmatprep.subr.mxu0 %v4157
    %4304 = vmatpush1.msra.mxu0 %v4156
    %4305 = vmatprep.subr.mxu0 %v4159
    %4306 = vmatpush1.msra.mxu0 %v4158
    %4307 = vmatprep.subr.mxu0 %v4161
    %4308 = vmatpush1.msra.mxu0 %v4160
    %4309 = vmatprep.subr.mxu0 %v4163
    %4310 = vmatpush1.msra.mxu0 %v4162
    %4311 = vmatprep.subr.mxu0 %v4165
    %4312 = vmatpush1.msra.mxu0 %v4164
    %4313 = vmatprep.subr.mxu0 %v4167
    %4314 = vmatpush1.msra.mxu0 %v4166
    %4315 = vmatprep.subr.mxu0 %v4169
    %4316 = vmatpush1.msra.mxu0 %v4168
    %4317 = vmatprep.subr.mxu0 %v4171
    %4318 = vmatpush1.msra.mxu0 %v4170
    %4319 = vmatprep.subr.mxu0 %v4173
    %4320 = vmatpush1.msra.mxu0 %v4172
    %4321 = vmatprep.subr.mxu0 %v4175
    %4322 = vmatpush1.msra.mxu0 %v4174
    %4323 = vmatprep.subr.mxu0 %v4177
    %4324 = vmatpush1.msra.mxu0 %v4176
    %4325 = vmatprep.subr.mxu0 %v4179
    %4326 = vmatpush1.msra.mxu0 %v4178
    %4327 = vmatprep.mubr.f32.mxu0 %v4051
    %4328 = vmatmul.mubr.f32.gmra.mrb[0].mxu0 %v4050
    %v4329 = vpop.f32.mrb[0].mxu0
    %v4330 = vadd.f32 %v4259, %v4329
    %v4331 = vpop.f32.mrb[0].mxu0
    %v4332 = vadd.f32 %v4261, %v4331
    %4333 = vdwg.mxu0
    %v4334 = vmax.f32 %v4330, 0.0
    %v4335 = vmax.f32 %v4332, 0.0
    %v4336 = vld [vmem:[%s11] sm:$0xff]
    %v4337 = vld [vmem:[%s11 + $0x8] sm:$0xff]
    %v4338 = vld [vmem:[%s11 + $0x10] sm:$0xff]
    %v4339 = vld [vmem:[%s11 + $0x18] sm:$0xff]
    %v4340 = vld [vmem:[%s11 + $0x20] sm:$0xff]
    %v4341 = vld [vmem:[%s11 + $0x28] sm:$0xff]
    %v4342 = vld [vmem:[%s11 + $0x30] sm:$0xff]
    %v4343 = vld [vmem:[%s11 + $0x38] sm:$0xff]
    %v4344 = vld [vmem:[%s11 + $0x40] sm:$0xff]
    %v4345 = vld [vmem:[%s11 + $0x48] sm:$0xff]
    %v4346 = vld [vmem:[%s11 + $0x50] sm:$0xff]
    %v4347 = vld [vmem:[%s11 + $0x58] sm:$0xff]
    %v4348 = vld [vmem:[%s11 + $0x60] sm:$0xff]
    %v4349 = vld [vmem:[%s11 + $0x68] sm:$0xff]
    %v4350 = vld [vmem:[%s11 + $0x70] sm:$0xff]
    %v4351 = vld [vmem:[%s11 + $0x78] sm:$0xff]
    %v4352 = vld [vmem:[%s11 + $0x80] sm:$0xff]
    %v4353 = vld [vmem:[%s11 + $0x88] sm:$0xff]
    %v4354 = vld [vmem:[%s11 + $0x90] sm:$0xff]
    %v4355 = vld [vmem:[%s11 + $0x98] sm:$0xff]
    %v4356 = vld [vmem:[%s11 + $0xa0] sm:$0xff]
    %v4357 = vld [vmem:[%s11 + $0xa8] sm:$0xff]
    %v4358 = vld [vmem:[%s11 + $0xb0] sm:$0xff]
    %v4359 = vld [vmem:[%s11 + $0xb8] sm:$0xff]
    %v4360 = vld [vmem:[%s11 + $0xc0] sm:$0xff]
    %v4361 = vld [vmem:[%s11 + $0xc8] sm:$0xff]
    %v4362 = vld [vmem:[%s11 + $0xd0] sm:$0xff]
    %v4363 = vld [vmem:[%s11 + $0xd8] sm:$0xff]
    %v4364 = vld [vmem:[%s11 + $0xe0] sm:$0xff]
    %v4365 = vld [vmem:[%s11 + $0xe8] sm:$0xff]
    %v4366 = vld [vmem:[%s11 + $0xf0] sm:$0xff]
    %v4367 = vld [vmem:[%s11 + $0xf8] sm:$0xff]
    %v4368 = vld [vmem:[%s12] sm:$0x1]
    %v4370 = vlaneseq
    %v4371 = vshrl.u32 %v4370, 7
    %v4372 = vsub.s32 0, %v4371
    %v4373 = vrot.slane %v4368, %v4372
    %4375 = vmatprep.subr.mxu0 0.0
    %4376 = vmatpush1.msra.mxu0 %v4336
    %4377 = vmatprep.subr.mxu0 0.0
    %4378 = vmatpush1.msra.mxu0 %v4337
    %4379 = vmatprep.subr.mxu0 0.0
    %4380 = vmatpush1.msra.mxu0 %v4338
    %4381 = vmatprep.subr.mxu0 0.0
    %4382 = vmatpush1.msra.mxu0 %v4339
    %4383 = vmatprep.subr.mxu0 0.0
    %4384 = vmatpush1.msra.mxu0 %v4340
    %4385 = vmatprep.subr.mxu0 0.0
    %4386 = vmatpush1.msra.mxu0 %v4341
    %4387 = vmatprep.subr.mxu0 0.0
    %4388 = vmatpush1.msra.mxu0 %v4342
    %4389 = vmatprep.subr.mxu0 0.0
    %4390 = vmatpush1.msra.mxu0 %v4343
    %4391 = vmatprep.subr.mxu0 0.0
    %4392 = vmatpush1.msra.mxu0 %v4344
    %4393 = vmatprep.subr.mxu0 0.0
    %4394 = vmatpush1.msra.mxu0 %v4345
    %4395 = vmatprep.subr.mxu0 0.0
    %4396 = vmatpush1.msra.mxu0 %v4346
    %4397 = vmatprep.subr.mxu0 0.0
    %4398 = vmatpush1.msra.mxu0 %v4347
    %4399 = vmatprep.subr.mxu0 0.0
    %4400 = vmatpush1.msra.mxu0 %v4348
    %4401 = vmatprep.subr.mxu0 0.0
    %4402 = vmatpush1.msra.mxu0 %v4349
    %4403 = vmatprep.subr.mxu0 0.0
    %4404 = vmatpush1.msra.mxu0 %v4350
    %4405 = vmatprep.subr.mxu0 0.0
    %4406 = vmatpush1.msra.mxu0 %v4351
    %4407 = vmatprep.subr.mxu0 0.0
    %4408 = vmatpush1.msra.mxu0 %v4352
    %4409 = vmatprep.subr.mxu0 0.0
    %4410 = vmatpush1.msra.mxu0 %v4353
    %4411 = vmatprep.subr.mxu0 0.0
    %4412 = vmatpush1.msra.mxu0 %v4354
    %4413 = vmatprep.subr.mxu0 0.0
    %4414 = vmatpush1.msra.mxu0 %v4355
    %4415 = vmatprep.subr.mxu0 0.0
    %4416 = vmatpush1.msra.mxu0 %v4356
    %4417 = vmatprep.subr.mxu0 0.0
    %4418 = vmatpush1.msra.mxu0 %v4357
    %4419 = vmatprep.subr.mxu0 0.0
    %4420 = vmatpush1.msra.mxu0 %v4358
    %4421 = vmatprep.subr.mxu0 0.0
    %4422 = vmatpush1.msra.mxu0 %v4359
    %4423 = vmatprep.subr.mxu0 0.0
    %4424 = vmatpush1.msra.mxu0 %v4360
    %4425 = vmatprep.subr.mxu0 0.0
    %4426 = vmatpush1.msra.mxu0 %v4361
    %4427 = vmatprep.subr.mxu0 0.0
    %4428 = vmatpush1.msra.mxu0 %v4362
    %4429 = vmatprep.subr.mxu0 0.0
    %4430 = vmatpush1.msra.mxu0 %v4363
    %4431 = vmatprep.subr.mxu0 0.0
    %4432 = vmatpush1.msra.mxu0 %v4364
    %4433 = vmatprep.subr.mxu0 0.0
    %4434 = vmatpush1.msra.mxu0 %v4365
    %4435 = vmatprep.subr.mxu0 0.0
    %4436 = vmatpush1.msra.mxu0 %v4366
    %4437 = vmatprep.subr.mxu0 0.0
    %4438 = vmatpush1.msra.mxu0 %v4367
    %4439 = vmatprep.mubr.f32.mxu0 %v4335
    %4440 = vmatmul.mubr.f32.gmra.mrb[0].mxu0 %v4334
    %v4441 = vpop.f32.mrb[0].mxu0
    %v4442 = vadd.f32 %v4373, %v4441
    %v4443 = vpop.f32.mrb[0].mxu0
    %4444 = vdwg.mxu0
    %4445 = vst [vmem:[#allocation3] sm:$0x3] %v4442
    // Predicated region
    $region54: #{qconvnet_forward.1} parent=1 // pred_check
      _
    $region55: #{qconvnet_forward.1} parent=1 // pred_check_branch
      %4447 = sbr.rel (0) target = $region57
    $region56: #{qconvnet_forward.1} parent=1 // pred_region
      %s4449 = ssub.s32 32, 32
      %4450 = vsyncadd [#allocation4], %s4449
      %s4452 = sshll.u32 [#allocation3], 4
      %s4453 = int_to_ptr.vmem [resolvable:$true] %s4452
      %4455 = dma.vmem_to_hbm [thread:$0]  %s4453, 32, %s13, [#allocation4]
    $region57: #{qconvnet_forward.1} parent=1 // pred_fallthru
      _
    // Predicated region
    $region58: #{qconvnet_forward.1} parent=1 // pred_check
      _
    $region59: #{qconvnet_forward.1} parent=1 // pred_check_branch
      %4457 = sbr.rel (0) target = $region61
    $region60: #{qconvnet_forward.1} parent=1 // pred_region
      %4458 = dma.done [#allocation4], 32
    $region61: #{qconvnet_forward.1} parent=1 // pred_fallthru
      _
    %4459 = vsyncpa [#allocation4], 1

</llo_original>
